<compile_context>
chip_gen: v7x
topology: tpu7x:2x2x1
jax: 0.10.0
libtpu: 0.0.40
codegen_flags: <defaults>
</compile_context>

<pallas_src>
import functools

import jax
import jax.numpy as jnp
from jax.experimental import pallas as pl
from jax.experimental.pallas import tpu as pltpu

MATMUL_DTYPE = jnp.float32


# ----------------------------- Pallas kernel ------------------------------

def _double_conv_kernel(x_ref, w1_ref, w2_ref, m_ref,
                        g1_ref, b1_ref, g2_ref, b2_ref,
                        o_ref, xcol_ref, *, W, HW, L, count, eps):
    """Fused conv1 -> BN1 -> ReLU -> conv2 -> BN2 -> ReLU on lane-dense (C, N*DHW) tiles."""
    c_mask = m_ref.shape[0] // 27          # mask row-replication factor (multiple of 8)

    def build_xcol(a):
        # a: (C, L) f32 activations, C a multiple of 8.  One tap at a time:
        # roll on the XLU, mask multiply on the VALU, aligned store into the scratch.
        C = a.shape[0]
        k = 0
        for kd in (-1, 0, 1):
            for kh in (-1, 0, 1):
                for kw in (-1, 0, 1):
                    off = kd * HW + kh * W + kw
                    shifted = a if off == 0 else pltpu.roll(a, (-off) % L, axis=1)
                    mask = m_ref[k * c_mask:k * c_mask + C, :]        # tap-k mask, C rows
                    xcol_ref[k * C:(k + 1) * C, :] = (shifted * mask).astype(xcol_ref.dtype)
                    k += 1

    def conv(w_ref):
        # (Cout, K) @ (K, L) with f32 accumulation; RHS streamed from the VMEM scratch.
        K = w_ref.shape[1]
        return jnp.dot(w_ref[...].astype(xcol_ref.dtype), xcol_ref[0:K, :],
                       preferred_element_type=jnp.float32)

    def bn_relu(y, g_ref, b_ref):
        # PyTorch training-mode BatchNorm3d (biased variance, centered form) + ReLU.
        inv_n = 1.0 / count
        mean = jnp.sum(y, axis=1, keepdims=True) * inv_n
        c = y - mean
        var = jnp.sum(c * c, axis=1, keepdims=True) * inv_n
        scale = g_ref[...] * jax.lax.rsqrt(var + eps)                 # EUP rsqrt
        return jnp.maximum(c * scale + b_ref[...], 0.0)

    build_xcol(x_ref[...])
    a1 = bn_relu(conv(w1_ref), g1_ref, b1_ref)          # a1 never leaves VMEM
    build_xcol(a1)
    o_ref[...] = bn_relu(conv(w2_ref), g2_ref, b2_ref).astype(o_ref.dtype)


# ----------------------------- host-side glue ------------------------------

def _round_up(v, m):
    return (v + m - 1) // m * m


def _make_tap_masks(D, H, W, n_tile, rep):
    """(27*rep, n_tile*D*H*W) f32; rows k*rep..(k+1)*rep all hold tap k's validity mask."""
    d = jnp.arange(D).reshape(D, 1, 1)
    h = jnp.arange(H).reshape(1, H, 1)
    w = jnp.arange(W).reshape(1, 1, W)
    rows = []
    for kd in (-1, 0, 1):
        for kh in (-1, 0, 1):
            for kw in (-1, 0, 1):
                m = ((d + kd >= 0) & (d + kd < D) &
                     (h + kh >= 0) & (h + kh < H) &
                     (w + kw >= 0) & (w + kw < W))
                rows.append(m.reshape(1, -1))
    masks = jnp.concatenate(rows, axis=0).astype(jnp.float32)    # (27, DHW)
    masks = jnp.tile(masks, (1, n_tile))                         # (27, N*DHW), sample-tiled
    return jnp.repeat(masks, rep, axis=0)                        # (27*rep, N*DHW)


def _flatten_weight(w_oidhw, cin_pad):
    """(Cout, Cin, 3,3,3) -> (Cout, 27*cin_pad); column order (kd, kh, kw, ci) matches xcol rows."""
    Cout, Cin = w_oidhw.shape[:2]
    w = jnp.transpose(w_oidhw, (2, 3, 4, 1, 0))                  # (kd, kh, kw, Cin, Cout)
    if cin_pad > Cin:
        w = jnp.pad(w, ((0, 0), (0, 0), (0, 0), (0, cin_pad - Cin), (0, 0)))
    return jnp.transpose(w.reshape(27 * cin_pad, Cout), (1, 0))  # (Cout, 27*cin_pad)


@functools.partial(jax.jit, static_argnames=("eps",))
def double_conv3d(x_ncdhw, params, eps=1e-5):
    """PyTorch DoubleConv3D forward (training-mode BN). (N,Cin,D,H,W) -> (N,Cout,D,H,W)."""
    w1, g1, b1, w2, g2, b2 = params                     # conv weights in PyTorch OIDHW layout
    N, Cin, D, H, W = x_ncdhw.shape
    Cout = w1.shape[0]
    assert Cout % 8 == 0, "Cout must be a multiple of 8 for sublane-aligned xcol chunks"
    DHW = D * H * W
    L = N * DHW                                         # batch folded into the lane axis
    Cp = _round_up(Cin, 8)                              # conv1 input channels, zero-padded

    # Lane-dense layout: (channels on sublanes, batch*spatial on lanes).
    x = jnp.transpose(x_ncdhw, (1, 0, 2, 3, 4)).reshape(Cin, L)
    x = jnp.pad(x, ((0, Cp - Cin), (0, 0)))

    rep = max(Cp, Cout)
    masks = _make_tap_masks(D, H, W, N, rep)            # constant, fetched once
    wf1 = _flatten_weight(w1, Cp)                       # (Cout, 27*Cp)
    wf2 = _flatten_weight(w2, Cout)                     # (Cout, 27*Cout)
    kmax = max(wf1.shape[1], wf2.shape[1])

    col = lambda v: v.reshape(-1, 1).astype(jnp.float32)

    out = pl.pallas_call(
        functools.partial(_double_conv_kernel, W=W, HW=H * W, L=L,
                          count=float(L), eps=eps),
        out_shape=jax.ShapeDtypeStruct((Cout, L), jnp.float32),
        grid=(1,),
        in_specs=[
            pl.BlockSpec((Cp, L), lambda i: (0, 0)),            # x (padded channels)
            pl.BlockSpec(wf1.shape, lambda i: (0, 0)),          # conv1 weight, flattened
            pl.BlockSpec(wf2.shape, lambda i: (0, 0)),          # conv2 weight, flattened
            pl.BlockSpec(masks.shape, lambda i: (0, 0)),        # pre-broadcast tap masks
            pl.BlockSpec((Cout, 1), lambda i: (0, 0)),          # gamma1
            pl.BlockSpec((Cout, 1), lambda i: (0, 0)),          # beta1
            pl.BlockSpec((Cout, 1), lambda i: (0, 0)),          # gamma2
            pl.BlockSpec((Cout, 1), lambda i: (0, 0)),          # beta2
        ],
        out_specs=pl.BlockSpec((Cout, L), lambda i: (0, 0)),
        scratch_shapes=[pltpu.VMEM((kmax, L), MATMUL_DTYPE)],   # im2col column matrix
        compiler_params=pltpu.CompilerParams(
            dimension_semantics=("arbitrary",),
            vmem_limit_bytes=32 * 1024 * 1024,                  # ~3 MiB actually used
        ),
    )(x, wf1, wf2, masks, col(g1), col(b1), col(g2), col(b2))

    return jnp.transpose(out.reshape(Cout, N, D, H, W), (1, 0, 2, 3, 4))


# ----------------------------- pure-JAX reference ------------------------------

def ref_double_conv3d(x_ncdhw, params, eps=1e-5):
    w1, g1, b1, w2, g2, b2 = params

    def conv(x, w):
        return jax.lax.conv_general_dilated(
            x, w, window_strides=(1, 1, 1), padding="SAME",
            dimension_numbers=("NCDHW", "OIDHW", "NCDHW"))

    def bn_relu(y, g, b):
        m = jnp.mean(y, axis=(0, 2, 3, 4), keepdims=True)
        v = jnp.mean(jnp.square(y - m), axis=(0, 2, 3, 4), keepdims=True)
        yhat = (y - m) * jax.lax.rsqrt(v + eps)
        return jnp.maximum(yhat * g.reshape(1, -1, 1, 1, 1) + b.reshape(1, -1, 1, 1, 1), 0.0)

    y = bn_relu(conv(x_ncdhw, w1), g1, b1)
    return bn_relu(conv(y, w2), g2, b2)


# ----------------------------- main ------------------------------

if __name__ == "__main__":
    N, Cin, Cout, D, H, W = 2, 4, 8, 8, 8, 8     # N*DHW = 1024 lanes -> fully lane-dense

    key = jax.random.PRNGKey(0)
    kx, kw1, kw2 = jax.random.split(key, 3)

    x = jax.random.normal(kx, (N, Cin, D, H, W), dtype=jnp.float32)

    # Conv weights in PyTorch OIDHW layout; Kaiming-like deterministic init.
    w1 = jax.random.normal(kw1, (Cout, Cin, 3, 3, 3), jnp.float32) * (2.0 / (Cin * 27)) ** 0.5
    w2 = jax.random.normal(kw2, (Cout, Cout, 3, 3, 3), jnp.float32) * (2.0 / (Cout * 27)) ** 0.5
    # BatchNorm3d default init: weight=1, bias=0
    g1 = jnp.ones((Cout,), jnp.float32)
    b1 = jnp.zeros((Cout,), jnp.float32)
    g2 = jnp.ones((Cout,), jnp.float32)
    b2 = jnp.zeros((Cout,), jnp.float32)
    params = (w1, g1, b1, w2, g2, b2)

    out = jax.block_until_ready(double_conv3d(x, params))
    ref = jax.block_until_ready(ref_double_conv3d(x, params))

    assert out.shape == (N, Cout, D, H, W), out.shape
    if not jnp.allclose(out, ref, rtol=1e-4, atol=1e-4):
        max_err = float(jnp.max(jnp.abs(out - ref)))
        raise AssertionError(f"mismatch vs reference, max abs err = {max_err}")

    print("KERNEL_OK")
</pallas_src>

<mosaic_0001>
module attributes {stable_mosaic.version = 11 : i64} {
  func.func @_double_conv_kernel(%arg0: i32, %arg1: memref<8x1024xf32, #tpu.memory_space<vmem>>, %arg2: memref<8x216xf32, #tpu.memory_space<vmem>>, %arg3: memref<8x216xf32, #tpu.memory_space<vmem>>, %arg4: memref<216x1024xf32, #tpu.memory_space<vmem>>, %arg5: memref<8x1xf32, #tpu.memory_space<vmem>>, %arg6: memref<8x1xf32, #tpu.memory_space<vmem>>, %arg7: memref<8x1xf32, #tpu.memory_space<vmem>>, %arg8: memref<8x1xf32, #tpu.memory_space<vmem>>, %arg9: memref<8x1024xf32, #tpu.memory_space<vmem>>, %arg10: memref<216x1024xf32, #tpu.memory_space<vmem>>) attributes {dimension_semantics = [#tpu.dimension_semantics<arbitrary>], iteration_bounds = array<i64: 1>, scalar_prefetch = 0 : i64, scratch_operands = 1 : i64, tpu.core_type = #tpu.core_type<tc>, window_params = [{pipeline_mode = #tpu.pipeline_mode<synchronous>, transform_indices = @transform_0, window_bounds = array<i64: 8, 1024>}, {pipeline_mode = #tpu.pipeline_mode<synchronous>, transform_indices = @transform_1, window_bounds = array<i64: 8, 216>}, {pipeline_mode = #tpu.pipeline_mode<synchronous>, transform_indices = @transform_2, window_bounds = array<i64: 8, 216>}, {pipeline_mode = #tpu.pipeline_mode<synchronous>, transform_indices = @transform_3, window_bounds = array<i64: 216, 1024>}, {pipeline_mode = #tpu.pipeline_mode<synchronous>, transform_indices = @transform_4, window_bounds = array<i64: 8, 1>}, {pipeline_mode = #tpu.pipeline_mode<synchronous>, transform_indices = @transform_5, window_bounds = array<i64: 8, 1>}, {pipeline_mode = #tpu.pipeline_mode<synchronous>, transform_indices = @transform_6, window_bounds = array<i64: 8, 1>}, {pipeline_mode = #tpu.pipeline_mode<synchronous>, transform_indices = @transform_7, window_bounds = array<i64: 8, 1>}, {pipeline_mode = #tpu.pipeline_mode<synchronous>, transform_indices = @transform_8, window_bounds = array<i64: 8, 1024>}]} {
    %c0 = arith.constant 0 : index
    %c0_0 = arith.constant 0 : index
    %0 = vector.load %arg1[%c0, %c0_0] : memref<8x1024xf32, #tpu.memory_space<vmem>>, vector<8x1024xf32>
    %c73_i32 = arith.constant 73 : i32
    %1 = tpu.dynamic_rotate %0 by %c73_i32 dim 1 : vector<8x1024xf32>, i32 -> vector<8x1024xf32>
    %c0_1 = arith.constant 0 : index
    %c0_2 = arith.constant 0 : index
    %2 = vector.load %arg4[%c0_1, %c0_2] : memref<216x1024xf32, #tpu.memory_space<vmem>>, vector<8x1024xf32>
    %3 = arith.mulf %1, %2 : vector<8x1024xf32>
    %c0_3 = arith.constant 0 : index
    %c0_4 = arith.constant 0 : index
    %4 = vector.load %arg10[%c0_3, %c0_4] : memref<216x1024xf32, #tpu.memory_space<vmem>>, vector<8x1024xf32>
    tpu.vector_store %arg10[%c0_3, %c0_4], %3 {strides = array<i32>} : memref<216x1024xf32, #tpu.memory_space<vmem>>, vector<8x1024xf32>,
    %c72_i32 = arith.constant 72 : i32
    %5 = tpu.dynamic_rotate %0 by %c72_i32 dim 1 : vector<8x1024xf32>, i32 -> vector<8x1024xf32>
    %c8 = arith.constant 8 : index
    %c0_5 = arith.constant 0 : index
    %6 = vector.load %arg4[%c8, %c0_5] : memref<216x1024xf32, #tpu.memory_space<vmem>>, vector<8x1024xf32>
    %7 = arith.mulf %5, %6 : vector<8x1024xf32>
    %c8_6 = arith.constant 8 : index
    %c0_7 = arith.constant 0 : index
    %8 = vector.load %arg10[%c8_6, %c0_7] : memref<216x1024xf32, #tpu.memory_space<vmem>>, vector<8x1024xf32>
    tpu.vector_store %arg10[%c8_6, %c0_7], %7 {strides = array<i32>} : memref<216x1024xf32, #tpu.memory_space<vmem>>, vector<8x1024xf32>,
    %c71_i32 = arith.constant 71 : i32
    %9 = tpu.dynamic_rotate %0 by %c71_i32 dim 1 : vector<8x1024xf32>, i32 -> vector<8x1024xf32>
    %c16 = arith.constant 16 : index
    %c0_8 = arith.constant 0 : index
    %10 = vector.load %arg4[%c16, %c0_8] : memref<216x1024xf32, #tpu.memory_space<vmem>>, vector<8x1024xf32>
    %11 = arith.mulf %9, %10 : vector<8x1024xf32>
    %c16_9 = arith.constant 16 : index
    %c0_10 = arith.constant 0 : index
    %12 = vector.load %arg10[%c16_9, %c0_10] : memref<216x1024xf32, #tpu.memory_space<vmem>>, vector<8x1024xf32>
    tpu.vector_store %arg10[%c16_9, %c0_10], %11 {strides = array<i32>} : memref<216x1024xf32, #tpu.memory_space<vmem>>, vector<8x1024xf32>,
    %c65_i32 = arith.constant 65 : i32
    %13 = tpu.dynamic_rotate %0 by %c65_i32 dim 1 : vector<8x1024xf32>, i32 -> vector<8x1024xf32>
    %c24 = arith.constant 24 : index
    %c0_11 = arith.constant 0 : index
    %14 = vector.load %arg4[%c24, %c0_11] : memref<216x1024xf32, #tpu.memory_space<vmem>>, vector<8x1024xf32>
    %15 = arith.mulf %13, %14 : vector<8x1024xf32>
    %c24_12 = arith.constant 24 : index
    %c0_13 = arith.constant 0 : index
    %16 = vector.load %arg10[%c24_12, %c0_13] : memref<216x1024xf32, #tpu.memory_space<vmem>>, vector<8x1024xf32>
    tpu.vector_store %arg10[%c24_12, %c0_13], %15 {strides = array<i32>} : memref<216x1024xf32, #tpu.memory_space<vmem>>, vector<8x1024xf32>,
    %c64_i32 = arith.constant 64 : i32
    %17 = tpu.dynamic_rotate %0 by %c64_i32 dim 1 : vector<8x1024xf32>, i32 -> vector<8x1024xf32>
    %c32 = arith.constant 32 : index
    %c0_14 = arith.constant 0 : index
    %18 = vector.load %arg4[%c32, %c0_14] : memref<216x1024xf32, #tpu.memory_space<vmem>>, vector<8x1024xf32>
    %19 = arith.mulf %17, %18 : vector<8x1024xf32>
    %c32_15 = arith.constant 32 : index
    %c0_16 = arith.constant 0 : index
    %20 = vector.load %arg10[%c32_15, %c0_16] : memref<216x1024xf32, #tpu.memory_space<vmem>>, vector<8x1024xf32>
    tpu.vector_store %arg10[%c32_15, %c0_16], %19 {strides = array<i32>} : memref<216x1024xf32, #tpu.memory_space<vmem>>, vector<8x1024xf32>,
    %c63_i32 = arith.constant 63 : i32
    %21 = tpu.dynamic_rotate %0 by %c63_i32 dim 1 : vector<8x1024xf32>, i32 -> vector<8x1024xf32>
    %c40 = arith.constant 40 : index
    %c0_17 = arith.constant 0 : index
    %22 = vector.load %arg4[%c40, %c0_17] : memref<216x1024xf32, #tpu.memory_space<vmem>>, vector<8x1024xf32>
    %23 = arith.mulf %21, %22 : vector<8x1024xf32>
    %c40_18 = arith.constant 40 : index
    %c0_19 = arith.constant 0 : index
    %24 = vector.load %arg10[%c40_18, %c0_19] : memref<216x1024xf32, #tpu.memory_space<vmem>>, vector<8x1024xf32>
    tpu.vector_store %arg10[%c40_18, %c0_19], %23 {strides = array<i32>} : memref<216x1024xf32, #tpu.memory_space<vmem>>, vector<8x1024xf32>,
    %c57_i32 = arith.constant 57 : i32
    %25 = tpu.dynamic_rotate %0 by %c57_i32 dim 1 : vector<8x1024xf32>, i32 -> vector<8x1024xf32>
    %c48 = arith.constant 48 : index
    %c0_20 = arith.constant 0 : index
    %26 = vector.load %arg4[%c48, %c0_20] : memref<216x1024xf32, #tpu.memory_space<vmem>>, vector<8x1024xf32>
    %27 = arith.mulf %25, %26 : vector<8x1024xf32>
    %c48_21 = arith.constant 48 : index
    %c0_22 = arith.constant 0 : index
    %28 = vector.load %arg10[%c48_21, %c0_22] : memref<216x1024xf32, #tpu.memory_space<vmem>>, vector<8x1024xf32>
    tpu.vector_store %arg10[%c48_21, %c0_22], %27 {strides = array<i32>} : memref<216x1024xf32, #tpu.memory_space<vmem>>, vector<8x1024xf32>,
    %c56_i32 = arith.constant 56 : i32
    %29 = tpu.dynamic_rotate %0 by %c56_i32 dim 1 : vector<8x1024xf32>, i32 -> vector<8x1024xf32>
    %c56 = arith.constant 56 : index
    %c0_23 = arith.constant 0 : index
    %30 = vector.load %arg4[%c56, %c0_23] : memref<216x1024xf32, #tpu.memory_space<vmem>>, vector<8x1024xf32>
    %31 = arith.mulf %29, %30 : vector<8x1024xf32>
    %c56_24 = arith.constant 56 : index
    %c0_25 = arith.constant 0 : index
    %32 = vector.load %arg10[%c56_24, %c0_25] : memref<216x1024xf32, #tpu.memory_space<vmem>>, vector<8x1024xf32>
    tpu.vector_store %arg10[%c56_24, %c0_25], %31 {strides = array<i32>} : memref<216x1024xf32, #tpu.memory_space<vmem>>, vector<8x1024xf32>,
    %c55_i32 = arith.constant 55 : i32
    %33 = tpu.dynamic_rotate %0 by %c55_i32 dim 1 : vector<8x1024xf32>, i32 -> vector<8x1024xf32>
    %c64 = arith.constant 64 : index
    %c0_26 = arith.constant 0 : index
    %34 = vector.load %arg4[%c64, %c0_26] : memref<216x1024xf32, #tpu.memory_space<vmem>>, vector<8x1024xf32>
    %35 = arith.mulf %33, %34 : vector<8x1024xf32>
    %c64_27 = arith.constant 64 : index
    %c0_28 = arith.constant 0 : index
    %36 = vector.load %arg10[%c64_27, %c0_28] : memref<216x1024xf32, #tpu.memory_space<vmem>>, vector<8x1024xf32>
    tpu.vector_store %arg10[%c64_27, %c0_28], %35 {strides = array<i32>} : memref<216x1024xf32, #tpu.memory_space<vmem>>, vector<8x1024xf32>,
    %c9_i32 = arith.constant 9 : i32
    %37 = tpu.dynamic_rotate %0 by %c9_i32 dim 1 : vector<8x1024xf32>, i32 -> vector<8x1024xf32>
    %c72 = arith.constant 72 : index
    %c0_29 = arith.constant 0 : index
    %38 = vector.load %arg4[%c72, %c0_29] : memref<216x1024xf32, #tpu.memory_space<vmem>>, vector<8x1024xf32>
    %39 = arith.mulf %37, %38 : vector<8x1024xf32>
    %c72_30 = arith.constant 72 : index
    %c0_31 = arith.constant 0 : index
    %40 = vector.load %arg10[%c72_30, %c0_31] : memref<216x1024xf32, #tpu.memory_space<vmem>>, vector<8x1024xf32>
    tpu.vector_store %arg10[%c72_30, %c0_31], %39 {strides = array<i32>} : memref<216x1024xf32, #tpu.memory_space<vmem>>, vector<8x1024xf32>,
    %c8_i32 = arith.constant 8 : i32
    %41 = tpu.dynamic_rotate %0 by %c8_i32 dim 1 : vector<8x1024xf32>, i32 -> vector<8x1024xf32>
    %c80 = arith.constant 80 : index
    %c0_32 = arith.constant 0 : index
    %42 = vector.load %arg4[%c80, %c0_32] : memref<216x1024xf32, #tpu.memory_space<vmem>>, vector<8x1024xf32>
    %43 = arith.mulf %41, %42 : vector<8x1024xf32>
    %c80_33 = arith.constant 80 : index
    %c0_34 = arith.constant 0 : index
    %44 = vector.load %arg10[%c80_33, %c0_34] : memref<216x1024xf32, #tpu.memory_space<vmem>>, vector<8x1024xf32>
    tpu.vector_store %arg10[%c80_33, %c0_34], %43 {strides = array<i32>} : memref<216x1024xf32, #tpu.memory_space<vmem>>, vector<8x1024xf32>,
    %c7_i32 = arith.constant 7 : i32
    %45 = tpu.dynamic_rotate %0 by %c7_i32 dim 1 : vector<8x1024xf32>, i32 -> vector<8x1024xf32>
    %c88 = arith.constant 88 : index
    %c0_35 = arith.constant 0 : index
    %46 = vector.load %arg4[%c88, %c0_35] : memref<216x1024xf32, #tpu.memory_space<vmem>>, vector<8x1024xf32>
    %47 = arith.mulf %45, %46 : vector<8x1024xf32>
    %c88_36 = arith.constant 88 : index
    %c0_37 = arith.constant 0 : index
    %48 = vector.load %arg10[%c88_36, %c0_37] : memref<216x1024xf32, #tpu.memory_space<vmem>>, vector<8x1024xf32>
    tpu.vector_store %arg10[%c88_36, %c0_37], %47 {strides = array<i32>} : memref<216x1024xf32, #tpu.memory_space<vmem>>, vector<8x1024xf32>,
    %c1_i32 = arith.constant 1 : i32
    %49 = tpu.dynamic_rotate %0 by %c1_i32 dim 1 : vector<8x1024xf32>, i32 -> vector<8x1024xf32>
    %c96 = arith.constant 96 : index
    %c0_38 = arith.constant 0 : index
    %50 = vector.load %arg4[%c96, %c0_38] : memref<216x1024xf32, #tpu.memory_space<vmem>>, vector<8x1024xf32>
    %51 = arith.mulf %49, %50 : vector<8x1024xf32>
    %c96_39 = arith.constant 96 : index
    %c0_40 = arith.constant 0 : index
    %52 = vector.load %arg10[%c96_39, %c0_40] : memref<216x1024xf32, #tpu.memory_space<vmem>>, vector<8x1024xf32>
    tpu.vector_store %arg10[%c96_39, %c0_40], %51 {strides = array<i32>} : memref<216x1024xf32, #tpu.memory_space<vmem>>, vector<8x1024xf32>,
    %c104 = arith.constant 104 : index
    %c0_41 = arith.constant 0 : index
    %53 = vector.load %arg4[%c104, %c0_41] : memref<216x1024xf32, #tpu.memory_space<vmem>>, vector<8x1024xf32>
    %54 = arith.mulf %0, %53 : vector<8x1024xf32>
    %c104_42 = arith.constant 104 : index
    %c0_43 = arith.constant 0 : index
    %55 = vector.load %arg10[%c104_42, %c0_43] : memref<216x1024xf32, #tpu.memory_space<vmem>>, vector<8x1024xf32>
    tpu.vector_store %arg10[%c104_42, %c0_43], %54 {strides = array<i32>} : memref<216x1024xf32, #tpu.memory_space<vmem>>, vector<8x1024xf32>,
    %c1023_i32 = arith.constant 1023 : i32
    %56 = tpu.dynamic_rotate %0 by %c1023_i32 dim 1 : vector<8x1024xf32>, i32 -> vector<8x1024xf32>
    %c112 = arith.constant 112 : index
    %c0_44 = arith.constant 0 : index
    %57 = vector.load %arg4[%c112, %c0_44] : memref<216x1024xf32, #tpu.memory_space<vmem>>, vector<8x1024xf32>
    %58 = arith.mulf %56, %57 : vector<8x1024xf32>
    %c112_45 = arith.constant 112 : index
    %c0_46 = arith.constant 0 : index
    %59 = vector.load %arg10[%c112_45, %c0_46] : memref<216x1024xf32, #tpu.memory_space<vmem>>, vector<8x1024xf32>
    tpu.vector_store %arg10[%c112_45, %c0_46], %58 {strides = array<i32>} : memref<216x1024xf32, #tpu.memory_space<vmem>>, vector<8x1024xf32>,
    %c1017_i32 = arith.constant 1017 : i32
    %60 = tpu.dynamic_rotate %0 by %c1017_i32 dim 1 : vector<8x1024xf32>, i32 -> vector<8x1024xf32>
    %c120 = arith.constant 120 : index
    %c0_47 = arith.constant 0 : index
    %61 = vector.load %arg4[%c120, %c0_47] : memref<216x1024xf32, #tpu.memory_space<vmem>>, vector<8x1024xf32>
    %62 = arith.mulf %60, %61 : vector<8x1024xf32>
    %c120_48 = arith.constant 120 : index
    %c0_49 = arith.constant 0 : index
    %63 = vector.load %arg10[%c120_48, %c0_49] : memref<216x1024xf32, #tpu.memory_space<vmem>>, vector<8x1024xf32>
    tpu.vector_store %arg10[%c120_48, %c0_49], %62 {strides = array<i32>} : memref<216x1024xf32, #tpu.memory_space<vmem>>, vector<8x1024xf32>,
    %c1016_i32 = arith.constant 1016 : i32
    %64 = tpu.dynamic_rotate %0 by %c1016_i32 dim 1 : vector<8x1024xf32>, i32 -> vector<8x1024xf32>
    %c128 = arith.constant 128 : index
    %c0_50 = arith.constant 0 : index
    %65 = vector.load %arg4[%c128, %c0_50] : memref<216x1024xf32, #tpu.memory_space<vmem>>, vector<8x1024xf32>
    %66 = arith.mulf %64, %65 : vector<8x1024xf32>
    %c128_51 = arith.constant 128 : index
    %c0_52 = arith.constant 0 : index
    %67 = vector.load %arg10[%c128_51, %c0_52] : memref<216x1024xf32, #tpu.memory_space<vmem>>, vector<8x1024xf32>
    tpu.vector_store %arg10[%c128_51, %c0_52], %66 {strides = array<i32>} : memref<216x1024xf32, #tpu.memory_space<vmem>>, vector<8x1024xf32>,
    %c1015_i32 = arith.constant 1015 : i32
    %68 = tpu.dynamic_rotate %0 by %c1015_i32 dim 1 : vector<8x1024xf32>, i32 -> vector<8x1024xf32>
    %c136 = arith.constant 136 : index
    %c0_53 = arith.constant 0 : index
    %69 = vector.load %arg4[%c136, %c0_53] : memref<216x1024xf32, #tpu.memory_space<vmem>>, vector<8x1024xf32>
    %70 = arith.mulf %68, %69 : vector<8x1024xf32>
    %c136_54 = arith.constant 136 : index
    %c0_55 = arith.constant 0 : index
    %71 = vector.load %arg10[%c136_54, %c0_55] : memref<216x1024xf32, #tpu.memory_space<vmem>>, vector<8x1024xf32>
    tpu.vector_store %arg10[%c136_54, %c0_55], %70 {strides = array<i32>} : memref<216x1024xf32, #tpu.memory_space<vmem>>, vector<8x1024xf32>,
    %c969_i32 = arith.constant 969 : i32
    %72 = tpu.dynamic_rotate %0 by %c969_i32 dim 1 : vector<8x1024xf32>, i32 -> vector<8x1024xf32>
    %c144 = arith.constant 144 : index
    %c0_56 = arith.constant 0 : index
    %73 = vector.load %arg4[%c144, %c0_56] : memref<216x1024xf32, #tpu.memory_space<vmem>>, vector<8x1024xf32>
    %74 = arith.mulf %72, %73 : vector<8x1024xf32>
    %c144_57 = arith.constant 144 : index
    %c0_58 = arith.constant 0 : index
    %75 = vector.load %arg10[%c144_57, %c0_58] : memref<216x1024xf32, #tpu.memory_space<vmem>>, vector<8x1024xf32>
    tpu.vector_store %arg10[%c144_57, %c0_58], %74 {strides = array<i32>} : memref<216x1024xf32, #tpu.memory_space<vmem>>, vector<8x1024xf32>,
    %c968_i32 = arith.constant 968 : i32
    %76 = tpu.dynamic_rotate %0 by %c968_i32 dim 1 : vector<8x1024xf32>, i32 -> vector<8x1024xf32>
    %c152 = arith.constant 152 : index
    %c0_59 = arith.constant 0 : index
    %77 = vector.load %arg4[%c152, %c0_59] : memref<216x1024xf32, #tpu.memory_space<vmem>>, vector<8x1024xf32>
    %78 = arith.mulf %76, %77 : vector<8x1024xf32>
    %c152_60 = arith.constant 152 : index
    %c0_61 = arith.constant 0 : index
    %79 = vector.load %arg10[%c152_60, %c0_61] : memref<216x1024xf32, #tpu.memory_space<vmem>>, vector<8x1024xf32>
    tpu.vector_store %arg10[%c152_60, %c0_61], %78 {strides = array<i32>} : memref<216x1024xf32, #tpu.memory_space<vmem>>, vector<8x1024xf32>,
    %c967_i32 = arith.constant 967 : i32
    %80 = tpu.dynamic_rotate %0 by %c967_i32 dim 1 : vector<8x1024xf32>, i32 -> vector<8x1024xf32>
    %c160 = arith.constant 160 : index
    %c0_62 = arith.constant 0 : index
    %81 = vector.load %arg4[%c160, %c0_62] : memref<216x1024xf32, #tpu.memory_space<vmem>>, vector<8x1024xf32>
    %82 = arith.mulf %80, %81 : vector<8x1024xf32>
    %c160_63 = arith.constant 160 : index
    %c0_64 = arith.constant 0 : index
    %83 = vector.load %arg10[%c160_63, %c0_64] : memref<216x1024xf32, #tpu.memory_space<vmem>>, vector<8x1024xf32>
    tpu.vector_store %arg10[%c160_63, %c0_64], %82 {strides = array<i32>} : memref<216x1024xf32, #tpu.memory_space<vmem>>, vector<8x1024xf32>,
    %c961_i32 = arith.constant 961 : i32
    %84 = tpu.dynamic_rotate %0 by %c961_i32 dim 1 : vector<8x1024xf32>, i32 -> vector<8x1024xf32>
    %c168 = arith.constant 168 : index
    %c0_65 = arith.constant 0 : index
    %85 = vector.load %arg4[%c168, %c0_65] : memref<216x1024xf32, #tpu.memory_space<vmem>>, vector<8x1024xf32>
    %86 = arith.mulf %84, %85 : vector<8x1024xf32>
    %c168_66 = arith.constant 168 : index
    %c0_67 = arith.constant 0 : index
    %87 = vector.load %arg10[%c168_66, %c0_67] : memref<216x1024xf32, #tpu.memory_space<vmem>>, vector<8x1024xf32>
    tpu.vector_store %arg10[%c168_66, %c0_67], %86 {strides = array<i32>} : memref<216x1024xf32, #tpu.memory_space<vmem>>, vector<8x1024xf32>,
    %c960_i32 = arith.constant 960 : i32
    %88 = tpu.dynamic_rotate %0 by %c960_i32 dim 1 : vector<8x1024xf32>, i32 -> vector<8x1024xf32>
    %c176 = arith.constant 176 : index
    %c0_68 = arith.constant 0 : index
    %89 = vector.load %arg4[%c176, %c0_68] : memref<216x1024xf32, #tpu.memory_space<vmem>>, vector<8x1024xf32>
    %90 = arith.mulf %88, %89 : vector<8x1024xf32>
    %c176_69 = arith.constant 176 : index
    %c0_70 = arith.constant 0 : index
    %91 = vector.load %arg10[%c176_69, %c0_70] : memref<216x1024xf32, #tpu.memory_space<vmem>>, vector<8x1024xf32>
    tpu.vector_store %arg10[%c176_69, %c0_70], %90 {strides = array<i32>} : memref<216x1024xf32, #tpu.memory_space<vmem>>, vector<8x1024xf32>,
    %c959_i32 = arith.constant 959 : i32
    %92 = tpu.dynamic_rotate %0 by %c959_i32 dim 1 : vector<8x1024xf32>, i32 -> vector<8x1024xf32>
    %c184 = arith.constant 184 : index
    %c0_71 = arith.constant 0 : index
    %93 = vector.load %arg4[%c184, %c0_71] : memref<216x1024xf32, #tpu.memory_space<vmem>>, vector<8x1024xf32>
    %94 = arith.mulf %92, %93 : vector<8x1024xf32>
    %c184_72 = arith.constant 184 : index
    %c0_73 = arith.constant 0 : index
    %95 = vector.load %arg10[%c184_72, %c0_73] : memref<216x1024xf32, #tpu.memory_space<vmem>>, vector<8x1024xf32>
    tpu.vector_store %arg10[%c184_72, %c0_73], %94 {strides = array<i32>} : memref<216x1024xf32, #tpu.memory_space<vmem>>, vector<8x1024xf32>,
    %c953_i32 = arith.constant 953 : i32
    %96 = tpu.dynamic_rotate %0 by %c953_i32 dim 1 : vector<8x1024xf32>, i32 -> vector<8x1024xf32>
    %c192 = arith.constant 192 : index
    %c0_74 = arith.constant 0 : index
    %97 = vector.load %arg4[%c192, %c0_74] : memref<216x1024xf32, #tpu.memory_space<vmem>>, vector<8x1024xf32>
    %98 = arith.mulf %96, %97 : vector<8x1024xf32>
    %c192_75 = arith.constant 192 : index
    %c0_76 = arith.constant 0 : index
    %99 = vector.load %arg10[%c192_75, %c0_76] : memref<216x1024xf32, #tpu.memory_space<vmem>>, vector<8x1024xf32>
    tpu.vector_store %arg10[%c192_75, %c0_76], %98 {strides = array<i32>} : memref<216x1024xf32, #tpu.memory_space<vmem>>, vector<8x1024xf32>,
    %c952_i32 = arith.constant 952 : i32
    %100 = tpu.dynamic_rotate %0 by %c952_i32 dim 1 : vector<8x1024xf32>, i32 -> vector<8x1024xf32>
    %c200 = arith.constant 200 : index
    %c0_77 = arith.constant 0 : index
    %101 = vector.load %arg4[%c200, %c0_77] : memref<216x1024xf32, #tpu.memory_space<vmem>>, vector<8x1024xf32>
    %102 = arith.mulf %100, %101 : vector<8x1024xf32>
    %c200_78 = arith.constant 200 : index
    %c0_79 = arith.constant 0 : index
    %103 = vector.load %arg10[%c200_78, %c0_79] : memref<216x1024xf32, #tpu.memory_space<vmem>>, vector<8x1024xf32>
    tpu.vector_store %arg10[%c200_78, %c0_79], %102 {strides = array<i32>} : memref<216x1024xf32, #tpu.memory_space<vmem>>, vector<8x1024xf32>,
    %c951_i32 = arith.constant 951 : i32
    %104 = tpu.dynamic_rotate %0 by %c951_i32 dim 1 : vector<8x1024xf32>, i32 -> vector<8x1024xf32>
    %c208 = arith.constant 208 : index
    %c0_80 = arith.constant 0 : index
    %105 = vector.load %arg4[%c208, %c0_80] : memref<216x1024xf32, #tpu.memory_space<vmem>>, vector<8x1024xf32>
    %106 = arith.mulf %104, %105 : vector<8x1024xf32>
    %c208_81 = arith.constant 208 : index
    %c0_82 = arith.constant 0 : index
    %107 = vector.load %arg10[%c208_81, %c0_82] : memref<216x1024xf32, #tpu.memory_space<vmem>>, vector<8x1024xf32>
    tpu.vector_store %arg10[%c208_81, %c0_82], %106 {strides = array<i32>} : memref<216x1024xf32, #tpu.memory_space<vmem>>, vector<8x1024xf32>,
    %c0_83 = arith.constant 0 : index
    %c0_84 = arith.constant 0 : index
    %108 = vector.load %arg2[%c0_83, %c0_84] : memref<8x216xf32, #tpu.memory_space<vmem>>, vector<8x216xf32>
    %c0_85 = arith.constant 0 : index
    %c0_86 = arith.constant 0 : index
    %109 = vector.load %arg10[%c0_85, %c0_86] : memref<216x1024xf32, #tpu.memory_space<vmem>>, vector<216x1024xf32>
    %cst = arith.constant dense<0.000000e+00> : vector<8x1024xf32>
    %110 = tpu.matmul %108, %109, %cst {dimension_numbers = #tpu.dot_dimension_numbers<[1], [0], [0], [1], [0, 0, 1, 1], [], []>} : vector<8x216xf32>, vector<216x1024xf32>, vector<8x1024xf32> -> vector<8x1024xf32>
    %cst_87 = arith.constant dense<0.000000e+00> : vector<8xf32>
    %111 = vector.multi_reduction <add>, %110, %cst_87 [1] : vector<8x1024xf32> to vector<8xf32>
    %112 = vector.shape_cast %111 : vector<8xf32> to vector<8x1xf32>
    %cst_88 = arith.constant 9.765625E-4 : f32
    %113 = vector.broadcast %cst_88 : f32 to vector<8x1xf32>
    %114 = arith.mulf %112, %113 : vector<8x1xf32>
    %115 = vector.broadcast %114 : vector<8x1xf32> to vector<8x1024xf32>
    %116 = arith.subf %110, %115 : vector<8x1024xf32>
    %117 = arith.mulf %116, %116 : vector<8x1024xf32>
    %cst_89 = arith.constant dense<0.000000e+00> : vector<8xf32>
    %118 = vector.multi_reduction <add>, %117, %cst_89 [1] : vector<8x1024xf32> to vector<8xf32>
    %119 = vector.shape_cast %118 : vector<8xf32> to vector<8x1xf32>
    %cst_90 = arith.constant 9.765625E-4 : f32
    %120 = vector.broadcast %cst_90 : f32 to vector<8x1xf32>
    %121 = arith.mulf %119, %120 : vector<8x1xf32>
    %c0_91 = arith.constant 0 : index
    %c0_92 = arith.constant 0 : index
    %122 = vector.load %arg5[%c0_91, %c0_92] : memref<8x1xf32, #tpu.memory_space<vmem>>, vector<8x1xf32>
    %cst_93 = arith.constant 9.99999974E-6 : f32
    %123 = vector.broadcast %cst_93 : f32 to vector<8x1xf32>
    %124 = arith.addf %121, %123 : vector<8x1xf32>
    %125 = math.rsqrt %124 : vector<8x1xf32>
    %126 = arith.mulf %122, %125 : vector<8x1xf32>
    %127 = vector.broadcast %126 : vector<8x1xf32> to vector<8x1024xf32>
    %128 = arith.mulf %116, %127 : vector<8x1024xf32>
    %c0_94 = arith.constant 0 : index
    %c0_95 = arith.constant 0 : index
    %129 = vector.load %arg6[%c0_94, %c0_95] : memref<8x1xf32, #tpu.memory_space<vmem>>, vector<8x1xf32>
    %130 = vector.broadcast %129 : vector<8x1xf32> to vector<8x1024xf32>
    %131 = arith.addf %128, %130 : vector<8x1024xf32>
    %cst_96 = arith.constant 0.000000e+00 : f32
    %132 = vector.broadcast %cst_96 : f32 to vector<8x1024xf32>
    %133 = arith.maximumf %131, %132 : vector<8x1024xf32>
    %c73_i32_97 = arith.constant 73 : i32
    %134 = tpu.dynamic_rotate %133 by %c73_i32_97 dim 1 : vector<8x1024xf32>, i32 -> vector<8x1024xf32>
    %c0_98 = arith.constant 0 : index
    %c0_99 = arith.constant 0 : index
    %135 = vector.load %arg4[%c0_98, %c0_99] : memref<216x1024xf32, #tpu.memory_space<vmem>>, vector<8x1024xf32>
    %136 = arith.mulf %134, %135 : vector<8x1024xf32>
    %c0_100 = arith.constant 0 : index
    %c0_101 = arith.constant 0 : index
    %137 = vector.load %arg10[%c0_100, %c0_101] : memref<216x1024xf32, #tpu.memory_space<vmem>>, vector<8x1024xf32>
    tpu.vector_store %arg10[%c0_100, %c0_101], %136 {strides = array<i32>} : memref<216x1024xf32, #tpu.memory_space<vmem>>, vector<8x1024xf32>,
    %c72_i32_102 = arith.constant 72 : i32
    %138 = tpu.dynamic_rotate %133 by %c72_i32_102 dim 1 : vector<8x1024xf32>, i32 -> vector<8x1024xf32>
    %c8_103 = arith.constant 8 : index
    %c0_104 = arith.constant 0 : index
    %139 = vector.load %arg4[%c8_103, %c0_104] : memref<216x1024xf32, #tpu.memory_space<vmem>>, vector<8x1024xf32>
    %140 = arith.mulf %138, %139 : vector<8x1024xf32>
    %c8_105 = arith.constant 8 : index
    %c0_106 = arith.constant 0 : index
    %141 = vector.load %arg10[%c8_105, %c0_106] : memref<216x1024xf32, #tpu.memory_space<vmem>>, vector<8x1024xf32>
    tpu.vector_store %arg10[%c8_105, %c0_106], %140 {strides = array<i32>} : memref<216x1024xf32, #tpu.memory_space<vmem>>, vector<8x1024xf32>,
    %c71_i32_107 = arith.constant 71 : i32
    %142 = tpu.dynamic_rotate %133 by %c71_i32_107 dim 1 : vector<8x1024xf32>, i32 -> vector<8x1024xf32>
    %c16_108 = arith.constant 16 : index
    %c0_109 = arith.constant 0 : index
    %143 = vector.load %arg4[%c16_108, %c0_109] : memref<216x1024xf32, #tpu.memory_space<vmem>>, vector<8x1024xf32>
    %144 = arith.mulf %142, %143 : vector<8x1024xf32>
    %c16_110 = arith.constant 16 : index
    %c0_111 = arith.constant 0 : index
    %145 = vector.load %arg10[%c16_110, %c0_111] : memref<216x1024xf32, #tpu.memory_space<vmem>>, vector<8x1024xf32>
    tpu.vector_store %arg10[%c16_110, %c0_111], %144 {strides = array<i32>} : memref<216x1024xf32, #tpu.memory_space<vmem>>, vector<8x1024xf32>,
    %c65_i32_112 = arith.constant 65 : i32
    %146 = tpu.dynamic_rotate %133 by %c65_i32_112 dim 1 : vector<8x1024xf32>, i32 -> vector<8x1024xf32>
    %c24_113 = arith.constant 24 : index
    %c0_114 = arith.constant 0 : index
    %147 = vector.load %arg4[%c24_113, %c0_114] : memref<216x1024xf32, #tpu.memory_space<vmem>>, vector<8x1024xf32>
    %148 = arith.mulf %146, %147 : vector<8x1024xf32>
    %c24_115 = arith.constant 24 : index
    %c0_116 = arith.constant 0 : index
    %149 = vector.load %arg10[%c24_115, %c0_116] : memref<216x1024xf32, #tpu.memory_space<vmem>>, vector<8x1024xf32>
    tpu.vector_store %arg10[%c24_115, %c0_116], %148 {strides = array<i32>} : memref<216x1024xf32, #tpu.memory_space<vmem>>, vector<8x1024xf32>,
    %c64_i32_117 = arith.constant 64 : i32
    %150 = tpu.dynamic_rotate %133 by %c64_i32_117 dim 1 : vector<8x1024xf32>, i32 -> vector<8x1024xf32>
    %c32_118 = arith.constant 32 : index
    %c0_119 = arith.constant 0 : index
    %151 = vector.load %arg4[%c32_118, %c0_119] : memref<216x1024xf32, #tpu.memory_space<vmem>>, vector<8x1024xf32>
    %152 = arith.mulf %150, %151 : vector<8x1024xf32>
    %c32_120 = arith.constant 32 : index
    %c0_121 = arith.constant 0 : index
    %153 = vector.load %arg10[%c32_120, %c0_121] : memref<216x1024xf32, #tpu.memory_space<vmem>>, vector<8x1024xf32>
    tpu.vector_store %arg10[%c32_120, %c0_121], %152 {strides = array<i32>} : memref<216x1024xf32, #tpu.memory_space<vmem>>, vector<8x1024xf32>,
    %c63_i32_122 = arith.constant 63 : i32
    %154 = tpu.dynamic_rotate %133 by %c63_i32_122 dim 1 : vector<8x1024xf32>, i32 -> vector<8x1024xf32>
    %c40_123 = arith.constant 40 : index
    %c0_124 = arith.constant 0 : index
    %155 = vector.load %arg4[%c40_123, %c0_124] : memref<216x1024xf32, #tpu.memory_space<vmem>>, vector<8x1024xf32>
    %156 = arith.mulf %154, %155 : vector<8x1024xf32>
    %c40_125 = arith.constant 40 : index
    %c0_126 = arith.constant 0 : index
    %157 = vector.load %arg10[%c40_125, %c0_126] : memref<216x1024xf32, #tpu.memory_space<vmem>>, vector<8x1024xf32>
    tpu.vector_store %arg10[%c40_125, %c0_126], %156 {strides = array<i32>} : memref<216x1024xf32, #tpu.memory_space<vmem>>, vector<8x1024xf32>,
    %c57_i32_127 = arith.constant 57 : i32
    %158 = tpu.dynamic_rotate %133 by %c57_i32_127 dim 1 : vector<8x1024xf32>, i32 -> vector<8x1024xf32>
    %c48_128 = arith.constant 48 : index
    %c0_129 = arith.constant 0 : index
    %159 = vector.load %arg4[%c48_128, %c0_129] : memref<216x1024xf32, #tpu.memory_space<vmem>>, vector<8x1024xf32>
    %160 = arith.mulf %158, %159 : vector<8x1024xf32>
    %c48_130 = arith.constant 48 : index
    %c0_131 = arith.constant 0 : index
    %161 = vector.load %arg10[%c48_130, %c0_131] : memref<216x1024xf32, #tpu.memory_space<vmem>>, vector<8x1024xf32>
    tpu.vector_store %arg10[%c48_130, %c0_131], %160 {strides = array<i32>} : memref<216x1024xf32, #tpu.memory_space<vmem>>, vector<8x1024xf32>,
    %c56_i32_132 = arith.constant 56 : i32
    %162 = tpu.dynamic_rotate %133 by %c56_i32_132 dim 1 : vector<8x1024xf32>, i32 -> vector<8x1024xf32>
    %c56_133 = arith.constant 56 : index
    %c0_134 = arith.constant 0 : index
    %163 = vector.load %arg4[%c56_133, %c0_134] : memref<216x1024xf32, #tpu.memory_space<vmem>>, vector<8x1024xf32>
    %164 = arith.mulf %162, %163 : vector<8x1024xf32>
    %c56_135 = arith.constant 56 : index
    %c0_136 = arith.constant 0 : index
    %165 = vector.load %arg10[%c56_135, %c0_136] : memref<216x1024xf32, #tpu.memory_space<vmem>>, vector<8x1024xf32>
    tpu.vector_store %arg10[%c56_135, %c0_136], %164 {strides = array<i32>} : memref<216x1024xf32, #tpu.memory_space<vmem>>, vector<8x1024xf32>,
    %c55_i32_137 = arith.constant 55 : i32
    %166 = tpu.dynamic_rotate %133 by %c55_i32_137 dim 1 : vector<8x1024xf32>, i32 -> vector<8x1024xf32>
    %c64_138 = arith.constant 64 : index
    %c0_139 = arith.constant 0 : index
    %167 = vector.load %arg4[%c64_138, %c0_139] : memref<216x1024xf32, #tpu.memory_space<vmem>>, vector<8x1024xf32>
    %168 = arith.mulf %166, %167 : vector<8x1024xf32>
    %c64_140 = arith.constant 64 : index
    %c0_141 = arith.constant 0 : index
    %169 = vector.load %arg10[%c64_140, %c0_141] : memref<216x1024xf32, #tpu.memory_space<vmem>>, vector<8x1024xf32>
    tpu.vector_store %arg10[%c64_140, %c0_141], %168 {strides = array<i32>} : memref<216x1024xf32, #tpu.memory_space<vmem>>, vector<8x1024xf32>,
    %c9_i32_142 = arith.constant 9 : i32
    %170 = tpu.dynamic_rotate %133 by %c9_i32_142 dim 1 : vector<8x1024xf32>, i32 -> vector<8x1024xf32>
    %c72_143 = arith.constant 72 : index
    %c0_144 = arith.constant 0 : index
    %171 = vector.load %arg4[%c72_143, %c0_144] : memref<216x1024xf32, #tpu.memory_space<vmem>>, vector<8x1024xf32>
    %172 = arith.mulf %170, %171 : vector<8x1024xf32>
    %c72_145 = arith.constant 72 : index
    %c0_146 = arith.constant 0 : index
    %173 = vector.load %arg10[%c72_145, %c0_146] : memref<216x1024xf32, #tpu.memory_space<vmem>>, vector<8x1024xf32>
    tpu.vector_store %arg10[%c72_145, %c0_146], %172 {strides = array<i32>} : memref<216x1024xf32, #tpu.memory_space<vmem>>, vector<8x1024xf32>,
    %c8_i32_147 = arith.constant 8 : i32
    %174 = tpu.dynamic_rotate %133 by %c8_i32_147 dim 1 : vector<8x1024xf32>, i32 -> vector<8x1024xf32>
    %c80_148 = arith.constant 80 : index
    %c0_149 = arith.constant 0 : index
    %175 = vector.load %arg4[%c80_148, %c0_149] : memref<216x1024xf32, #tpu.memory_space<vmem>>, vector<8x1024xf32>
    %176 = arith.mulf %174, %175 : vector<8x1024xf32>
    %c80_150 = arith.constant 80 : index
    %c0_151 = arith.constant 0 : index
    %177 = vector.load %arg10[%c80_150, %c0_151] : memref<216x1024xf32, #tpu.memory_space<vmem>>, vector<8x1024xf32>
    tpu.vector_store %arg10[%c80_150, %c0_151], %176 {strides = array<i32>} : memref<216x1024xf32, #tpu.memory_space<vmem>>, vector<8x1024xf32>,
    %c7_i32_152 = arith.constant 7 : i32
    %178 = tpu.dynamic_rotate %133 by %c7_i32_152 dim 1 : vector<8x1024xf32>, i32 -> vector<8x1024xf32>
    %c88_153 = arith.constant 88 : index
    %c0_154 = arith.constant 0 : index
    %179 = vector.load %arg4[%c88_153, %c0_154] : memref<216x1024xf32, #tpu.memory_space<vmem>>, vector<8x1024xf32>
    %180 = arith.mulf %178, %179 : vector<8x1024xf32>
    %c88_155 = arith.constant 88 : index
    %c0_156 = arith.constant 0 : index
    %181 = vector.load %arg10[%c88_155, %c0_156] : memref<216x1024xf32, #tpu.memory_space<vmem>>, vector<8x1024xf32>
    tpu.vector_store %arg10[%c88_155, %c0_156], %180 {strides = array<i32>} : memref<216x1024xf32, #tpu.memory_space<vmem>>, vector<8x1024xf32>,
    %c1_i32_157 = arith.constant 1 : i32
    %182 = tpu.dynamic_rotate %133 by %c1_i32_157 dim 1 : vector<8x1024xf32>, i32 -> vector<8x1024xf32>
    %c96_158 = arith.constant 96 : index
    %c0_159 = arith.constant 0 : index
    %183 = vector.load %arg4[%c96_158, %c0_159] : memref<216x1024xf32, #tpu.memory_space<vmem>>, vector<8x1024xf32>
    %184 = arith.mulf %182, %183 : vector<8x1024xf32>
    %c96_160 = arith.constant 96 : index
    %c0_161 = arith.constant 0 : index
    %185 = vector.load %arg10[%c96_160, %c0_161] : memref<216x1024xf32, #tpu.memory_space<vmem>>, vector<8x1024xf32>
    tpu.vector_store %arg10[%c96_160, %c0_161], %184 {strides = array<i32>} : memref<216x1024xf32, #tpu.memory_space<vmem>>, vector<8x1024xf32>,
    %c104_162 = arith.constant 104 : index
    %c0_163 = arith.constant 0 : index
    %186 = vector.load %arg4[%c104_162, %c0_163] : memref<216x1024xf32, #tpu.memory_space<vmem>>, vector<8x1024xf32>
    %187 = arith.mulf %133, %186 : vector<8x1024xf32>
    %c104_164 = arith.constant 104 : index
    %c0_165 = arith.constant 0 : index
    %188 = vector.load %arg10[%c104_164, %c0_165] : memref<216x1024xf32, #tpu.memory_space<vmem>>, vector<8x1024xf32>
    tpu.vector_store %arg10[%c104_164, %c0_165], %187 {strides = array<i32>} : memref<216x1024xf32, #tpu.memory_space<vmem>>, vector<8x1024xf32>,
    %c1023_i32_166 = arith.constant 1023 : i32
    %189 = tpu.dynamic_rotate %133 by %c1023_i32_166 dim 1 : vector<8x1024xf32>, i32 -> vector<8x1024xf32>
    %c112_167 = arith.constant 112 : index
    %c0_168 = arith.constant 0 : index
    %190 = vector.load %arg4[%c112_167, %c0_168] : memref<216x1024xf32, #tpu.memory_space<vmem>>, vector<8x1024xf32>
    %191 = arith.mulf %189, %190 : vector<8x1024xf32>
    %c112_169 = arith.constant 112 : index
    %c0_170 = arith.constant 0 : index
    %192 = vector.load %arg10[%c112_169, %c0_170] : memref<216x1024xf32, #tpu.memory_space<vmem>>, vector<8x1024xf32>
    tpu.vector_store %arg10[%c112_169, %c0_170], %191 {strides = array<i32>} : memref<216x1024xf32, #tpu.memory_space<vmem>>, vector<8x1024xf32>,
    %c1017_i32_171 = arith.constant 1017 : i32
    %193 = tpu.dynamic_rotate %133 by %c1017_i32_171 dim 1 : vector<8x1024xf32>, i32 -> vector<8x1024xf32>
    %c120_172 = arith.constant 120 : index
    %c0_173 = arith.constant 0 : index
    %194 = vector.load %arg4[%c120_172, %c0_173] : memref<216x1024xf32, #tpu.memory_space<vmem>>, vector<8x1024xf32>
    %195 = arith.mulf %193, %194 : vector<8x1024xf32>
    %c120_174 = arith.constant 120 : index
    %c0_175 = arith.constant 0 : index
    %196 = vector.load %arg10[%c120_174, %c0_175] : memref<216x1024xf32, #tpu.memory_space<vmem>>, vector<8x1024xf32>
    tpu.vector_store %arg10[%c120_174, %c0_175], %195 {strides = array<i32>} : memref<216x1024xf32, #tpu.memory_space<vmem>>, vector<8x1024xf32>,
    %c1016_i32_176 = arith.constant 1016 : i32
    %197 = tpu.dynamic_rotate %133 by %c1016_i32_176 dim 1 : vector<8x1024xf32>, i32 -> vector<8x1024xf32>
    %c128_177 = arith.constant 128 : index
    %c0_178 = arith.constant 0 : index
    %198 = vector.load %arg4[%c128_177, %c0_178] : memref<216x1024xf32, #tpu.memory_space<vmem>>, vector<8x1024xf32>
    %199 = arith.mulf %197, %198 : vector<8x1024xf32>
    %c128_179 = arith.constant 128 : index
    %c0_180 = arith.constant 0 : index
    %200 = vector.load %arg10[%c128_179, %c0_180] : memref<216x1024xf32, #tpu.memory_space<vmem>>, vector<8x1024xf32>
    tpu.vector_store %arg10[%c128_179, %c0_180], %199 {strides = array<i32>} : memref<216x1024xf32, #tpu.memory_space<vmem>>, vector<8x1024xf32>,
    %c1015_i32_181 = arith.constant 1015 : i32
    %201 = tpu.dynamic_rotate %133 by %c1015_i32_181 dim 1 : vector<8x1024xf32>, i32 -> vector<8x1024xf32>
    %c136_182 = arith.constant 136 : index
    %c0_183 = arith.constant 0 : index
    %202 = vector.load %arg4[%c136_182, %c0_183] : memref<216x1024xf32, #tpu.memory_space<vmem>>, vector<8x1024xf32>
    %203 = arith.mulf %201, %202 : vector<8x1024xf32>
    %c136_184 = arith.constant 136 : index
    %c0_185 = arith.constant 0 : index
    %204 = vector.load %arg10[%c136_184, %c0_185] : memref<216x1024xf32, #tpu.memory_space<vmem>>, vector<8x1024xf32>
    tpu.vector_store %arg10[%c136_184, %c0_185], %203 {strides = array<i32>} : memref<216x1024xf32, #tpu.memory_space<vmem>>, vector<8x1024xf32>,
    %c969_i32_186 = arith.constant 969 : i32
    %205 = tpu.dynamic_rotate %133 by %c969_i32_186 dim 1 : vector<8x1024xf32>, i32 -> vector<8x1024xf32>
    %c144_187 = arith.constant 144 : index
    %c0_188 = arith.constant 0 : index
    %206 = vector.load %arg4[%c144_187, %c0_188] : memref<216x1024xf32, #tpu.memory_space<vmem>>, vector<8x1024xf32>
    %207 = arith.mulf %205, %206 : vector<8x1024xf32>
    %c144_189 = arith.constant 144 : index
    %c0_190 = arith.constant 0 : index
    %208 = vector.load %arg10[%c144_189, %c0_190] : memref<216x1024xf32, #tpu.memory_space<vmem>>, vector<8x1024xf32>
    tpu.vector_store %arg10[%c144_189, %c0_190], %207 {strides = array<i32>} : memref<216x1024xf32, #tpu.memory_space<vmem>>, vector<8x1024xf32>,
    %c968_i32_191 = arith.constant 968 : i32
    %209 = tpu.dynamic_rotate %133 by %c968_i32_191 dim 1 : vector<8x1024xf32>, i32 -> vector<8x1024xf32>
    %c152_192 = arith.constant 152 : index
    %c0_193 = arith.constant 0 : index
    %210 = vector.load %arg4[%c152_192, %c0_193] : memref<216x1024xf32, #tpu.memory_space<vmem>>, vector<8x1024xf32>
    %211 = arith.mulf %209, %210 : vector<8x1024xf32>
    %c152_194 = arith.constant 152 : index
    %c0_195 = arith.constant 0 : index
    %212 = vector.load %arg10[%c152_194, %c0_195] : memref<216x1024xf32, #tpu.memory_space<vmem>>, vector<8x1024xf32>
    tpu.vector_store %arg10[%c152_194, %c0_195], %211 {strides = array<i32>} : memref<216x1024xf32, #tpu.memory_space<vmem>>, vector<8x1024xf32>,
    %c967_i32_196 = arith.constant 967 : i32
    %213 = tpu.dynamic_rotate %133 by %c967_i32_196 dim 1 : vector<8x1024xf32>, i32 -> vector<8x1024xf32>
    %c160_197 = arith.constant 160 : index
    %c0_198 = arith.constant 0 : index
    %214 = vector.load %arg4[%c160_197, %c0_198] : memref<216x1024xf32, #tpu.memory_space<vmem>>, vector<8x1024xf32>
    %215 = arith.mulf %213, %214 : vector<8x1024xf32>
    %c160_199 = arith.constant 160 : index
    %c0_200 = arith.constant 0 : index
    %216 = vector.load %arg10[%c160_199, %c0_200] : memref<216x1024xf32, #tpu.memory_space<vmem>>, vector<8x1024xf32>
    tpu.vector_store %arg10[%c160_199, %c0_200], %215 {strides = array<i32>} : memref<216x1024xf32, #tpu.memory_space<vmem>>, vector<8x1024xf32>,
    %c961_i32_201 = arith.constant 961 : i32
    %217 = tpu.dynamic_rotate %133 by %c961_i32_201 dim 1 : vector<8x1024xf32>, i32 -> vector<8x1024xf32>
    %c168_202 = arith.constant 168 : index
    %c0_203 = arith.constant 0 : index
    %218 = vector.load %arg4[%c168_202, %c0_203] : memref<216x1024xf32, #tpu.memory_space<vmem>>, vector<8x1024xf32>
    %219 = arith.mulf %217, %218 : vector<8x1024xf32>
    %c168_204 = arith.constant 168 : index
    %c0_205 = arith.constant 0 : index
    %220 = vector.load %arg10[%c168_204, %c0_205] : memref<216x1024xf32, #tpu.memory_space<vmem>>, vector<8x1024xf32>
    tpu.vector_store %arg10[%c168_204, %c0_205], %219 {strides = array<i32>} : memref<216x1024xf32, #tpu.memory_space<vmem>>, vector<8x1024xf32>,
    %c960_i32_206 = arith.constant 960 : i32
    %221 = tpu.dynamic_rotate %133 by %c960_i32_206 dim 1 : vector<8x1024xf32>, i32 -> vector<8x1024xf32>
    %c176_207 = arith.constant 176 : index
    %c0_208 = arith.constant 0 : index
    %222 = vector.load %arg4[%c176_207, %c0_208] : memref<216x1024xf32, #tpu.memory_space<vmem>>, vector<8x1024xf32>
    %223 = arith.mulf %221, %222 : vector<8x1024xf32>
    %c176_209 = arith.constant 176 : index
    %c0_210 = arith.constant 0 : index
    %224 = vector.load %arg10[%c176_209, %c0_210] : memref<216x1024xf32, #tpu.memory_space<vmem>>, vector<8x1024xf32>
    tpu.vector_store %arg10[%c176_209, %c0_210], %223 {strides = array<i32>} : memref<216x1024xf32, #tpu.memory_space<vmem>>, vector<8x1024xf32>,
    %c959_i32_211 = arith.constant 959 : i32
    %225 = tpu.dynamic_rotate %133 by %c959_i32_211 dim 1 : vector<8x1024xf32>, i32 -> vector<8x1024xf32>
    %c184_212 = arith.constant 184 : index
    %c0_213 = arith.constant 0 : index
    %226 = vector.load %arg4[%c184_212, %c0_213] : memref<216x1024xf32, #tpu.memory_space<vmem>>, vector<8x1024xf32>
    %227 = arith.mulf %225, %226 : vector<8x1024xf32>
    %c184_214 = arith.constant 184 : index
    %c0_215 = arith.constant 0 : index
    %228 = vector.load %arg10[%c184_214, %c0_215] : memref<216x1024xf32, #tpu.memory_space<vmem>>, vector<8x1024xf32>
    tpu.vector_store %arg10[%c184_214, %c0_215], %227 {strides = array<i32>} : memref<216x1024xf32, #tpu.memory_space<vmem>>, vector<8x1024xf32>,
    %c953_i32_216 = arith.constant 953 : i32
    %229 = tpu.dynamic_rotate %133 by %c953_i32_216 dim 1 : vector<8x1024xf32>, i32 -> vector<8x1024xf32>
    %c192_217 = arith.constant 192 : index
    %c0_218 = arith.constant 0 : index
    %230 = vector.load %arg4[%c192_217, %c0_218] : memref<216x1024xf32, #tpu.memory_space<vmem>>, vector<8x1024xf32>
    %231 = arith.mulf %229, %230 : vector<8x1024xf32>
    %c192_219 = arith.constant 192 : index
    %c0_220 = arith.constant 0 : index
    %232 = vector.load %arg10[%c192_219, %c0_220] : memref<216x1024xf32, #tpu.memory_space<vmem>>, vector<8x1024xf32>
    tpu.vector_store %arg10[%c192_219, %c0_220], %231 {strides = array<i32>} : memref<216x1024xf32, #tpu.memory_space<vmem>>, vector<8x1024xf32>,
    %c952_i32_221 = arith.constant 952 : i32
    %233 = tpu.dynamic_rotate %133 by %c952_i32_221 dim 1 : vector<8x1024xf32>, i32 -> vector<8x1024xf32>
    %c200_222 = arith.constant 200 : index
    %c0_223 = arith.constant 0 : index
    %234 = vector.load %arg4[%c200_222, %c0_223] : memref<216x1024xf32, #tpu.memory_space<vmem>>, vector<8x1024xf32>
    %235 = arith.mulf %233, %234 : vector<8x1024xf32>
    %c200_224 = arith.constant 200 : index
    %c0_225 = arith.constant 0 : index
    %236 = vector.load %arg10[%c200_224, %c0_225] : memref<216x1024xf32, #tpu.memory_space<vmem>>, vector<8x1024xf32>
    tpu.vector_store %arg10[%c200_224, %c0_225], %235 {strides = array<i32>} : memref<216x1024xf32, #tpu.memory_space<vmem>>, vector<8x1024xf32>,
    %c951_i32_226 = arith.constant 951 : i32
    %237 = tpu.dynamic_rotate %133 by %c951_i32_226 dim 1 : vector<8x1024xf32>, i32 -> vector<8x1024xf32>
    %c208_227 = arith.constant 208 : index
    %c0_228 = arith.constant 0 : index
    %238 = vector.load %arg4[%c208_227, %c0_228] : memref<216x1024xf32, #tpu.memory_space<vmem>>, vector<8x1024xf32>
    %239 = arith.mulf %237, %238 : vector<8x1024xf32>
    %c208_229 = arith.constant 208 : index
    %c0_230 = arith.constant 0 : index
    %240 = vector.load %arg10[%c208_229, %c0_230] : memref<216x1024xf32, #tpu.memory_space<vmem>>, vector<8x1024xf32>
    tpu.vector_store %arg10[%c208_229, %c0_230], %239 {strides = array<i32>} : memref<216x1024xf32, #tpu.memory_space<vmem>>, vector<8x1024xf32>,
    %c0_231 = arith.constant 0 : index
    %c0_232 = arith.constant 0 : index
    %241 = vector.load %arg3[%c0_231, %c0_232] : memref<8x216xf32, #tpu.memory_space<vmem>>, vector<8x216xf32>
    %c0_233 = arith.constant 0 : index
    %c0_234 = arith.constant 0 : index
    %242 = vector.load %arg10[%c0_233, %c0_234] : memref<216x1024xf32, #tpu.memory_space<vmem>>, vector<216x1024xf32>
    %cst_235 = arith.constant dense<0.000000e+00> : vector<8x1024xf32>
    %243 = tpu.matmul %241, %242, %cst_235 {dimension_numbers = #tpu.dot_dimension_numbers<[1], [0], [0], [1], [0, 0, 1, 1], [], []>} : vector<8x216xf32>, vector<216x1024xf32>, vector<8x1024xf32> -> vector<8x1024xf32>
    %cst_236 = arith.constant dense<0.000000e+00> : vector<8xf32>
    %244 = vector.multi_reduction <add>, %243, %cst_236 [1] : vector<8x1024xf32> to vector<8xf32>
    %245 = vector.shape_cast %244 : vector<8xf32> to vector<8x1xf32>
    %cst_237 = arith.constant 9.765625E-4 : f32
    %246 = vector.broadcast %cst_237 : f32 to vector<8x1xf32>
    %247 = arith.mulf %245, %246 : vector<8x1xf32>
    %248 = vector.broadcast %247 : vector<8x1xf32> to vector<8x1024xf32>
    %249 = arith.subf %243, %248 : vector<8x1024xf32>
    %250 = arith.mulf %249, %249 : vector<8x1024xf32>
    %cst_238 = arith.constant dense<0.000000e+00> : vector<8xf32>
    %251 = vector.multi_reduction <add>, %250, %cst_238 [1] : vector<8x1024xf32> to vector<8xf32>
    %252 = vector.shape_cast %251 : vector<8xf32> to vector<8x1xf32>
    %cst_239 = arith.constant 9.765625E-4 : f32
    %253 = vector.broadcast %cst_239 : f32 to vector<8x1xf32>
    %254 = arith.mulf %252, %253 : vector<8x1xf32>
    %c0_240 = arith.constant 0 : index
    %c0_241 = arith.constant 0 : index
    %255 = vector.load %arg7[%c0_240, %c0_241] : memref<8x1xf32, #tpu.memory_space<vmem>>, vector<8x1xf32>
    %cst_242 = arith.constant 9.99999974E-6 : f32
    %256 = vector.broadcast %cst_242 : f32 to vector<8x1xf32>
    %257 = arith.addf %254, %256 : vector<8x1xf32>
    %258 = math.rsqrt %257 : vector<8x1xf32>
    %259 = arith.mulf %255, %258 : vector<8x1xf32>
    %260 = vector.broadcast %259 : vector<8x1xf32> to vector<8x1024xf32>
    %261 = arith.mulf %249, %260 : vector<8x1024xf32>
    %c0_243 = arith.constant 0 : index
    %c0_244 = arith.constant 0 : index
    %262 = vector.load %arg8[%c0_243, %c0_244] : memref<8x1xf32, #tpu.memory_space<vmem>>, vector<8x1xf32>
    %263 = vector.broadcast %262 : vector<8x1xf32> to vector<8x1024xf32>
    %264 = arith.addf %261, %263 : vector<8x1024xf32>
    %cst_245 = arith.constant 0.000000e+00 : f32
    %265 = vector.broadcast %cst_245 : f32 to vector<8x1024xf32>
    %266 = arith.maximumf %264, %265 : vector<8x1024xf32>
    %c0_246 = arith.constant 0 : index
    %c0_247 = arith.constant 0 : index
    %267 = vector.load %arg9[%c0_246, %c0_247] : memref<8x1024xf32, #tpu.memory_space<vmem>>, vector<8x1024xf32>
    tpu.vector_store %arg9[%c0_246, %c0_247], %266 {strides = array<i32>} : memref<8x1024xf32, #tpu.memory_space<vmem>>, vector<8x1024xf32>,
    return
  }
  func.func @transform_0(%arg0: i32) -> (i32, i32) {
    %c0_i32 = arith.constant 0 : i32
    %c0_i32_0 = arith.constant 0 : i32
    %c0_i32_1 = arith.constant 0 : i32
    return %c0_i32, %c0_i32_0 : i32, i32
  }
  func.func @transform_1(%arg0: i32) -> (i32, i32) {
    %c0_i32 = arith.constant 0 : i32
    %c0_i32_0 = arith.constant 0 : i32
    %c0_i32_1 = arith.constant 0 : i32
    return %c0_i32, %c0_i32_0 : i32, i32
  }
  func.func @transform_2(%arg0: i32) -> (i32, i32) {
    %c0_i32 = arith.constant 0 : i32
    %c0_i32_0 = arith.constant 0 : i32
    %c0_i32_1 = arith.constant 0 : i32
    return %c0_i32, %c0_i32_0 : i32, i32
  }
  func.func @transform_3(%arg0: i32) -> (i32, i32) {
    %c0_i32 = arith.constant 0 : i32
    %c0_i32_0 = arith.constant 0 : i32
    %c0_i32_1 = arith.constant 0 : i32
    return %c0_i32, %c0_i32_0 : i32, i32
  }
  func.func @transform_4(%arg0: i32) -> (i32, i32) {
    %c0_i32 = arith.constant 0 : i32
    %c0_i32_0 = arith.constant 0 : i32
    %c0_i32_1 = arith.constant 0 : i32
    return %c0_i32, %c0_i32_0 : i32, i32
  }
  func.func @transform_5(%arg0: i32) -> (i32, i32) {
    %c0_i32 = arith.constant 0 : i32
    %c0_i32_0 = arith.constant 0 : i32
    %c0_i32_1 = arith.constant 0 : i32
    return %c0_i32, %c0_i32_0 : i32, i32
  }
  func.func @transform_6(%arg0: i32) -> (i32, i32) {
    %c0_i32 = arith.constant 0 : i32
    %c0_i32_0 = arith.constant 0 : i32
    %c0_i32_1 = arith.constant 0 : i32
    return %c0_i32, %c0_i32_0 : i32, i32
  }
  func.func @transform_7(%arg0: i32) -> (i32, i32) {
    %c0_i32 = arith.constant 0 : i32
    %c0_i32_0 = arith.constant 0 : i32
    %c0_i32_1 = arith.constant 0 : i32
    return %c0_i32, %c0_i32_0 : i32, i32
  }
  func.func @transform_8(%arg0: i32) -> (i32, i32) {
    %c0_i32 = arith.constant 0 : i32
    %c0_i32_0 = arith.constant 0 : i32
    %c0_i32_1 = arith.constant 0 : i32
    return %c0_i32, %c0_i32_0 : i32, i32
  }
}

</mosaic_0001>

<llo_original>
// kernel: double_conv3d.1
$region0: #{double_conv3d.1}
  #allocation0 [shape = 'u32[]', space=smem, size = 0x4, offset = 0x4, fixed_abs, tag = 'smem constant byte address 0x4 - core index']
  #allocation1 [shape = 'u32[144,128]{1,0:T(1,128)}', space=vmem, size = 0x12000, scoped, tag = 'internal scratch']
  #allocation2 [shape = 'f32[216,1024]{1,0:T(8,128)}', space=vmem, size = 0xd8000, scoped, tag = 'scratch operand']
  %s0 = inlined_call_operand.vmem [shape: f32[8,1024], index: 0, kind: input, shape index: {}]
  %s1 = inlined_call_operand.vmem [shape: f32[8,216], index: 1, kind: input, shape index: {}]
  %s2 = inlined_call_operand.vmem [shape: f32[8,216], index: 2, kind: input, shape index: {}]
  %s3 = inlined_call_operand.vmem [shape: f32[216,1024], index: 3, kind: input, shape index: {}]
  %s4 = inlined_call_operand.vmem [shape: f32[8,1], index: 4, kind: input, shape index: {}]
  %s5 = inlined_call_operand.vmem [shape: f32[8,1], index: 5, kind: input, shape index: {}]
  %s6 = inlined_call_operand.vmem [shape: f32[8,1], index: 6, kind: input, shape index: {}]
  %s7 = inlined_call_operand.vmem [shape: f32[8,1], index: 7, kind: input, shape index: {}]
  %s8 = inlined_call_operand.vmem [shape: f32[8,1024], index: 8, kind: output, shape index: {}]
  %s9 = sld [smem:[#allocation0]]
  $region42: #{double_conv3d.1} parent=0
    _
  %s11 = ssub.s32 1, %s9
  %s12 = scalar_select 0, %s11, %s9
  // Predicated region
  $region2: #{double_conv3d.1} parent=0 // pred_check
    _
  $region3: #{double_conv3d.1} parent=0 // pred_check_branch
    %14 = sbr.rel (0) target = $region5
  $region4: #{double_conv3d.1} parent=0 // pred_region
    _
  $region5: #{double_conv3d.1} parent=0 // pred_fallthru
    _
  // Predicated region
  $region6: #{double_conv3d.1} parent=0 // pred_check
    _
  $region7: #{double_conv3d.1} parent=0 // pred_check_branch
    %16 = sbr.rel (0) target = $region9
  $region8: #{double_conv3d.1} parent=0 // pred_region
    _
  $region9: #{double_conv3d.1} parent=0 // pred_fallthru
    _
  // Predicated region
  $region10: #{double_conv3d.1} parent=0 // pred_check
    _
  $region11: #{double_conv3d.1} parent=0 // pred_check_branch
    %18 = sbr.rel (0) target = $region13
  $region12: #{double_conv3d.1} parent=0 // pred_region
    _
  $region13: #{double_conv3d.1} parent=0 // pred_fallthru
    _
  // Predicated region
  $region14: #{double_conv3d.1} parent=0 // pred_check
    _
  $region15: #{double_conv3d.1} parent=0 // pred_check_branch
    %20 = sbr.rel (0) target = $region17
  $region16: #{double_conv3d.1} parent=0 // pred_region
    _
  $region17: #{double_conv3d.1} parent=0 // pred_fallthru
    _
  // Predicated region
  $region18: #{double_conv3d.1} parent=0 // pred_check
    _
  $region19: #{double_conv3d.1} parent=0 // pred_check_branch
    %22 = sbr.rel (0) target = $region21
  $region20: #{double_conv3d.1} parent=0 // pred_region
    _
  $region21: #{double_conv3d.1} parent=0 // pred_fallthru
    _
  // Predicated region
  $region22: #{double_conv3d.1} parent=0 // pred_check
    _
  $region23: #{double_conv3d.1} parent=0 // pred_check_branch
    %24 = sbr.rel (0) target = $region25
  $region24: #{double_conv3d.1} parent=0 // pred_region
    _
  $region25: #{double_conv3d.1} parent=0 // pred_fallthru
    _
  // Predicated region
  $region26: #{double_conv3d.1} parent=0 // pred_check
    _
  $region27: #{double_conv3d.1} parent=0 // pred_check_branch
    %26 = sbr.rel (0) target = $region29
  $region28: #{double_conv3d.1} parent=0 // pred_region
    _
  $region29: #{double_conv3d.1} parent=0 // pred_fallthru
    _
  // Predicated region
  $region30: #{double_conv3d.1} parent=0 // pred_check
    _
  $region31: #{double_conv3d.1} parent=0 // pred_check_branch
    %28 = sbr.rel (0) target = $region33
  $region32: #{double_conv3d.1} parent=0 // pred_region
    _
  $region33: #{double_conv3d.1} parent=0 // pred_fallthru
    _
  %v29 = vld [vmem:[%s0] sm:$0xff]
  %v30 = vld [vmem:[%s0 + $0x8] sm:$0xff]
  %v31 = vld [vmem:[%s0 + $0x10] sm:$0xff]
  %v32 = vld [vmem:[%s0 + $0x18] sm:$0xff]
  %v33 = vld [vmem:[%s0 + $0x20] sm:$0xff]
  %v34 = vld [vmem:[%s0 + $0x28] sm:$0xff]
  %v35 = vld [vmem:[%s0 + $0x30] sm:$0xff]
  %v36 = vld [vmem:[%s0 + $0x38] sm:$0xff]
  %37 = vrot.lane.b32.xlu0 %v29, 73
  %v38 = vpop.permute.xlu0 %37
  %39 = vrot.lane.b32.xlu0 %v30, 73
  %v40 = vpop.permute.xlu0 %39
  %41 = vrot.lane.b32.xlu0 %v31, 73
  %v42 = vpop.permute.xlu0 %41
  %43 = vrot.lane.b32.xlu0 %v32, 73
  %v44 = vpop.permute.xlu0 %43
  %45 = vrot.lane.b32.xlu0 %v33, 73
  %v46 = vpop.permute.xlu0 %45
  %47 = vrot.lane.b32.xlu0 %v34, 73
  %v48 = vpop.permute.xlu0 %47
  %49 = vrot.lane.b32.xlu0 %v35, 73
  %v50 = vpop.permute.xlu0 %49
  %51 = vrot.lane.b32.xlu0 %v36, 73
  %v52 = vpop.permute.xlu0 %51
  %v53 = vlaneseq
  %v54 = vand.u32 %v53, 127
  %vm55 = vcmp.lt.s32.totalorder %v54, 73
  %v56 = vsel %vm55, %v50, %v52
  %v57 = vsel %vm55, %v48, %v50
  %v58 = vsel %vm55, %v46, %v48
  %v59 = vsel %vm55, %v44, %v46
  %v60 = vsel %vm55, %v42, %v44
  %v61 = vsel %vm55, %v40, %v42
  %v62 = vsel %vm55, %v38, %v40
  %v63 = vsel %vm55, %v52, %v38
  %v64 = vld [vmem:[%s3] sm:$0xff]
  %v65 = vld [vmem:[%s3 + $0x8] sm:$0xff]
  %v66 = vld [vmem:[%s3 + $0x10] sm:$0xff]
  %v67 = vld [vmem:[%s3 + $0x18] sm:$0xff]
  %v68 = vld [vmem:[%s3 + $0x20] sm:$0xff]
  %v69 = vld [vmem:[%s3 + $0x28] sm:$0xff]
  %v70 = vld [vmem:[%s3 + $0x30] sm:$0xff]
  %v71 = vld [vmem:[%s3 + $0x38] sm:$0xff]
  %v72 = vmul.f32 %v63, %v64
  %v73 = vmul.f32 %v62, %v65
  %v74 = vmul.f32 %v61, %v66
  %v75 = vmul.f32 %v60, %v67
  %v76 = vmul.f32 %v59, %v68
  %v77 = vmul.f32 %v58, %v69
  %v78 = vmul.f32 %v57, %v70
  %v79 = vmul.f32 %v56, %v71
  %80 = vst [vmem:[#allocation2] sm:$0xff] %v72
  %81 = vst [vmem:[#allocation2 + $0x8] sm:$0xff] %v73
  %82 = vst [vmem:[#allocation2 + $0x10] sm:$0xff] %v74
  %83 = vst [vmem:[#allocation2 + $0x18] sm:$0xff] %v75
  %84 = vst [vmem:[#allocation2 + $0x20] sm:$0xff] %v76
  %85 = vst [vmem:[#allocation2 + $0x28] sm:$0xff] %v77
  %86 = vst [vmem:[#allocation2 + $0x30] sm:$0xff] %v78
  %87 = vst [vmem:[#allocation2 + $0x38] sm:$0xff] %v79
  %88 = vrot.lane.b32.xlu0 %v29, 72
  %v89 = vpop.permute.xlu0 %88
  %90 = vrot.lane.b32.xlu0 %v30, 72
  %v91 = vpop.permute.xlu0 %90
  %92 = vrot.lane.b32.xlu0 %v31, 72
  %v93 = vpop.permute.xlu0 %92
  %94 = vrot.lane.b32.xlu0 %v32, 72
  %v95 = vpop.permute.xlu0 %94
  %96 = vrot.lane.b32.xlu0 %v33, 72
  %v97 = vpop.permute.xlu0 %96
  %98 = vrot.lane.b32.xlu0 %v34, 72
  %v99 = vpop.permute.xlu0 %98
  %100 = vrot.lane.b32.xlu0 %v35, 72
  %v101 = vpop.permute.xlu0 %100
  %102 = vrot.lane.b32.xlu0 %v36, 72
  %v103 = vpop.permute.xlu0 %102
  %vm104 = vcmp.lt.s32.totalorder %v54, 72
  %v105 = vsel %vm104, %v101, %v103
  %v106 = vsel %vm104, %v99, %v101
  %v107 = vsel %vm104, %v97, %v99
  %v108 = vsel %vm104, %v95, %v97
  %v109 = vsel %vm104, %v93, %v95
  %v110 = vsel %vm104, %v91, %v93
  %v111 = vsel %vm104, %v89, %v91
  %v112 = vsel %vm104, %v103, %v89
  %v113 = vld [vmem:[%s3 + $0x40] sm:$0xff]
  %v114 = vld [vmem:[%s3 + $0x48] sm:$0xff]
  %v115 = vld [vmem:[%s3 + $0x50] sm:$0xff]
  %v116 = vld [vmem:[%s3 + $0x58] sm:$0xff]
  %v117 = vld [vmem:[%s3 + $0x60] sm:$0xff]
  %v118 = vld [vmem:[%s3 + $0x68] sm:$0xff]
  %v119 = vld [vmem:[%s3 + $0x70] sm:$0xff]
  %v120 = vld [vmem:[%s3 + $0x78] sm:$0xff]
  %v121 = vmul.f32 %v112, %v113
  %v122 = vmul.f32 %v111, %v114
  %v123 = vmul.f32 %v110, %v115
  %v124 = vmul.f32 %v109, %v116
  %v125 = vmul.f32 %v108, %v117
  %v126 = vmul.f32 %v107, %v118
  %v127 = vmul.f32 %v106, %v119
  %v128 = vmul.f32 %v105, %v120
  %129 = vst [vmem:[#allocation2 + $0x40] sm:$0xff] %v121
  %130 = vst [vmem:[#allocation2 + $0x48] sm:$0xff] %v122
  %131 = vst [vmem:[#allocation2 + $0x50] sm:$0xff] %v123
  %132 = vst [vmem:[#allocation2 + $0x58] sm:$0xff] %v124
  %133 = vst [vmem:[#allocation2 + $0x60] sm:$0xff] %v125
  %134 = vst [vmem:[#allocation2 + $0x68] sm:$0xff] %v126
  %135 = vst [vmem:[#allocation2 + $0x70] sm:$0xff] %v127
  %136 = vst [vmem:[#allocation2 + $0x78] sm:$0xff] %v128
  %137 = vrot.lane.b32.xlu0 %v29, 71
  %v138 = vpop.permute.xlu0 %137
  %139 = vrot.lane.b32.xlu0 %v30, 71
  %v140 = vpop.permute.xlu0 %139
  %141 = vrot.lane.b32.xlu0 %v31, 71
  %v142 = vpop.permute.xlu0 %141
  %143 = vrot.lane.b32.xlu0 %v32, 71
  %v144 = vpop.permute.xlu0 %143
  %145 = vrot.lane.b32.xlu0 %v33, 71
  %v146 = vpop.permute.xlu0 %145
  %147 = vrot.lane.b32.xlu0 %v34, 71
  %v148 = vpop.permute.xlu0 %147
  %149 = vrot.lane.b32.xlu0 %v35, 71
  %v150 = vpop.permute.xlu0 %149
  %151 = vrot.lane.b32.xlu0 %v36, 71
  %v152 = vpop.permute.xlu0 %151
  %vm153 = vcmp.lt.s32.totalorder %v54, 71
  %v154 = vsel %vm153, %v150, %v152
  %v155 = vsel %vm153, %v148, %v150
  %v156 = vsel %vm153, %v146, %v148
  %v157 = vsel %vm153, %v144, %v146
  %v158 = vsel %vm153, %v142, %v144
  %v159 = vsel %vm153, %v140, %v142
  %v160 = vsel %vm153, %v138, %v140
  %v161 = vsel %vm153, %v152, %v138
  %v162 = vld [vmem:[%s3 + $0x80] sm:$0xff]
  %v163 = vld [vmem:[%s3 + $0x88] sm:$0xff]
  %v164 = vld [vmem:[%s3 + $0x90] sm:$0xff]
  %v165 = vld [vmem:[%s3 + $0x98] sm:$0xff]
  %v166 = vld [vmem:[%s3 + $0xa0] sm:$0xff]
  %v167 = vld [vmem:[%s3 + $0xa8] sm:$0xff]
  %v168 = vld [vmem:[%s3 + $0xb0] sm:$0xff]
  %v169 = vld [vmem:[%s3 + $0xb8] sm:$0xff]
  %v170 = vmul.f32 %v161, %v162
  %v171 = vmul.f32 %v160, %v163
  %v172 = vmul.f32 %v159, %v164
  %v173 = vmul.f32 %v158, %v165
  %v174 = vmul.f32 %v157, %v166
  %v175 = vmul.f32 %v156, %v167
  %v176 = vmul.f32 %v155, %v168
  %v177 = vmul.f32 %v154, %v169
  %178 = vst [vmem:[#allocation2 + $0x80] sm:$0xff] %v170
  %179 = vst [vmem:[#allocation2 + $0x88] sm:$0xff] %v171
  %180 = vst [vmem:[#allocation2 + $0x90] sm:$0xff] %v172
  %181 = vst [vmem:[#allocation2 + $0x98] sm:$0xff] %v173
  %182 = vst [vmem:[#allocation2 + $0xa0] sm:$0xff] %v174
  %183 = vst [vmem:[#allocation2 + $0xa8] sm:$0xff] %v175
  %184 = vst [vmem:[#allocation2 + $0xb0] sm:$0xff] %v176
  %185 = vst [vmem:[#allocation2 + $0xb8] sm:$0xff] %v177
  %186 = vrot.lane.b32.xlu0 %v29, 65
  %v187 = vpop.permute.xlu0 %186
  %188 = vrot.lane.b32.xlu0 %v30, 65
  %v189 = vpop.permute.xlu0 %188
  %190 = vrot.lane.b32.xlu0 %v31, 65
  %v191 = vpop.permute.xlu0 %190
  %192 = vrot.lane.b32.xlu0 %v32, 65
  %v193 = vpop.permute.xlu0 %192
  %194 = vrot.lane.b32.xlu0 %v33, 65
  %v195 = vpop.permute.xlu0 %194
  %196 = vrot.lane.b32.xlu0 %v34, 65
  %v197 = vpop.permute.xlu0 %196
  %198 = vrot.lane.b32.xlu0 %v35, 65
  %v199 = vpop.permute.xlu0 %198
  %200 = vrot.lane.b32.xlu0 %v36, 65
  %v201 = vpop.permute.xlu0 %200
  %vm202 = vcmp.lt.s32.totalorder %v54, 65
  %v203 = vsel %vm202, %v199, %v201
  %v204 = vsel %vm202, %v197, %v199
  %v205 = vsel %vm202, %v195, %v197
  %v206 = vsel %vm202, %v193, %v195
  %v207 = vsel %vm202, %v191, %v193
  %v208 = vsel %vm202, %v189, %v191
  %v209 = vsel %vm202, %v187, %v189
  %v210 = vsel %vm202, %v201, %v187
  %v211 = vld [vmem:[%s3 + $0xc0] sm:$0xff]
  %v212 = vld [vmem:[%s3 + $0xc8] sm:$0xff]
  %v213 = vld [vmem:[%s3 + $0xd0] sm:$0xff]
  %v214 = vld [vmem:[%s3 + $0xd8] sm:$0xff]
  %v215 = vld [vmem:[%s3 + $0xe0] sm:$0xff]
  %v216 = vld [vmem:[%s3 + $0xe8] sm:$0xff]
  %v217 = vld [vmem:[%s3 + $0xf0] sm:$0xff]
  %v218 = vld [vmem:[%s3 + $0xf8] sm:$0xff]
  %v219 = vmul.f32 %v210, %v211
  %v220 = vmul.f32 %v209, %v212
  %v221 = vmul.f32 %v208, %v213
  %v222 = vmul.f32 %v207, %v214
  %v223 = vmul.f32 %v206, %v215
  %v224 = vmul.f32 %v205, %v216
  %v225 = vmul.f32 %v204, %v217
  %v226 = vmul.f32 %v203, %v218
  %227 = vst [vmem:[#allocation2 + $0xc0] sm:$0xff] %v219
  %228 = vst [vmem:[#allocation2 + $0xc8] sm:$0xff] %v220
  %229 = vst [vmem:[#allocation2 + $0xd0] sm:$0xff] %v221
  %230 = vst [vmem:[#allocation2 + $0xd8] sm:$0xff] %v222
  %231 = vst [vmem:[#allocation2 + $0xe0] sm:$0xff] %v223
  %232 = vst [vmem:[#allocation2 + $0xe8] sm:$0xff] %v224
  %233 = vst [vmem:[#allocation2 + $0xf0] sm:$0xff] %v225
  %234 = vst [vmem:[#allocation2 + $0xf8] sm:$0xff] %v226
  %235 = vrot.lane.b32.xlu0 %v29, 64
  %v236 = vpop.permute.xlu0 %235
  %237 = vrot.lane.b32.xlu0 %v30, 64
  %v238 = vpop.permute.xlu0 %237
  %239 = vrot.lane.b32.xlu0 %v31, 64
  %v240 = vpop.permute.xlu0 %239
  %241 = vrot.lane.b32.xlu0 %v32, 64
  %v242 = vpop.permute.xlu0 %241
  %243 = vrot.lane.b32.xlu0 %v33, 64
  %v244 = vpop.permute.xlu0 %243
  %245 = vrot.lane.b32.xlu0 %v34, 64
  %v246 = vpop.permute.xlu0 %245
  %247 = vrot.lane.b32.xlu0 %v35, 64
  %v248 = vpop.permute.xlu0 %247
  %249 = vrot.lane.b32.xlu0 %v36, 64
  %v250 = vpop.permute.xlu0 %249
  %vm251 = vcmp.lt.s32.totalorder %v54, 64
  %v252 = vsel %vm251, %v248, %v250
  %v253 = vsel %vm251, %v246, %v248
  %v254 = vsel %vm251, %v244, %v246
  %v255 = vsel %vm251, %v242, %v244
  %v256 = vsel %vm251, %v240, %v242
  %v257 = vsel %vm251, %v238, %v240
  %v258 = vsel %vm251, %v236, %v238
  %v259 = vsel %vm251, %v250, %v236
  %v260 = vld [vmem:[%s3 + $0x100] sm:$0xff]
  %v261 = vld [vmem:[%s3 + $0x108] sm:$0xff]
  %v262 = vld [vmem:[%s3 + $0x110] sm:$0xff]
  %v263 = vld [vmem:[%s3 + $0x118] sm:$0xff]
  %v264 = vld [vmem:[%s3 + $0x120] sm:$0xff]
  %v265 = vld [vmem:[%s3 + $0x128] sm:$0xff]
  %v266 = vld [vmem:[%s3 + $0x130] sm:$0xff]
  %v267 = vld [vmem:[%s3 + $0x138] sm:$0xff]
  %v268 = vmul.f32 %v259, %v260
  %v269 = vmul.f32 %v258, %v261
  %v270 = vmul.f32 %v257, %v262
  %v271 = vmul.f32 %v256, %v263
  %v272 = vmul.f32 %v255, %v264
  %v273 = vmul.f32 %v254, %v265
  %v274 = vmul.f32 %v253, %v266
  %v275 = vmul.f32 %v252, %v267
  %276 = vst [vmem:[#allocation2 + $0x100] sm:$0xff] %v268
  %277 = vst [vmem:[#allocation2 + $0x108] sm:$0xff] %v269
  %278 = vst [vmem:[#allocation2 + $0x110] sm:$0xff] %v270
  %279 = vst [vmem:[#allocation2 + $0x118] sm:$0xff] %v271
  %280 = vst [vmem:[#allocation2 + $0x120] sm:$0xff] %v272
  %281 = vst [vmem:[#allocation2 + $0x128] sm:$0xff] %v273
  %282 = vst [vmem:[#allocation2 + $0x130] sm:$0xff] %v274
  %283 = vst [vmem:[#allocation2 + $0x138] sm:$0xff] %v275
  %284 = vrot.lane.b32.xlu0 %v29, 63
  %v285 = vpop.permute.xlu0 %284
  %286 = vrot.lane.b32.xlu0 %v30, 63
  %v287 = vpop.permute.xlu0 %286
  %288 = vrot.lane.b32.xlu0 %v31, 63
  %v289 = vpop.permute.xlu0 %288
  %290 = vrot.lane.b32.xlu0 %v32, 63
  %v291 = vpop.permute.xlu0 %290
  %292 = vrot.lane.b32.xlu0 %v33, 63
  %v293 = vpop.permute.xlu0 %292
  %294 = vrot.lane.b32.xlu0 %v34, 63
  %v295 = vpop.permute.xlu0 %294
  %296 = vrot.lane.b32.xlu0 %v35, 63
  %v297 = vpop.permute.xlu0 %296
  %298 = vrot.lane.b32.xlu0 %v36, 63
  %v299 = vpop.permute.xlu0 %298
  %vm300 = vcmp.lt.s32.totalorder %v54, 63
  %v301 = vsel %vm300, %v297, %v299
  %v302 = vsel %vm300, %v295, %v297
  %v303 = vsel %vm300, %v293, %v295
  %v304 = vsel %vm300, %v291, %v293
  %v305 = vsel %vm300, %v289, %v291
  %v306 = vsel %vm300, %v287, %v289
  %v307 = vsel %vm300, %v285, %v287
  %v308 = vsel %vm300, %v299, %v285
  %v309 = vld [vmem:[%s3 + $0x140] sm:$0xff]
  %v310 = vld [vmem:[%s3 + $0x148] sm:$0xff]
  %v311 = vld [vmem:[%s3 + $0x150] sm:$0xff]
  %v312 = vld [vmem:[%s3 + $0x158] sm:$0xff]
  %v313 = vld [vmem:[%s3 + $0x160] sm:$0xff]
  %v314 = vld [vmem:[%s3 + $0x168] sm:$0xff]
  %v315 = vld [vmem:[%s3 + $0x170] sm:$0xff]
  %v316 = vld [vmem:[%s3 + $0x178] sm:$0xff]
  %v317 = vmul.f32 %v308, %v309
  %v318 = vmul.f32 %v307, %v310
  %v319 = vmul.f32 %v306, %v311
  %v320 = vmul.f32 %v305, %v312
  %v321 = vmul.f32 %v304, %v313
  %v322 = vmul.f32 %v303, %v314
  %v323 = vmul.f32 %v302, %v315
  %v324 = vmul.f32 %v301, %v316
  %325 = vst [vmem:[#allocation2 + $0x140] sm:$0xff] %v317
  %326 = vst [vmem:[#allocation2 + $0x148] sm:$0xff] %v318
  %327 = vst [vmem:[#allocation2 + $0x150] sm:$0xff] %v319
  %328 = vst [vmem:[#allocation2 + $0x158] sm:$0xff] %v320
  %329 = vst [vmem:[#allocation2 + $0x160] sm:$0xff] %v321
  %330 = vst [vmem:[#allocation2 + $0x168] sm:$0xff] %v322
  %331 = vst [vmem:[#allocation2 + $0x170] sm:$0xff] %v323
  %332 = vst [vmem:[#allocation2 + $0x178] sm:$0xff] %v324
  %333 = vrot.lane.b32.xlu0 %v29, 57
  %v334 = vpop.permute.xlu0 %333
  %335 = vrot.lane.b32.xlu0 %v30, 57
  %v336 = vpop.permute.xlu0 %335
  %337 = vrot.lane.b32.xlu0 %v31, 57
  %v338 = vpop.permute.xlu0 %337
  %339 = vrot.lane.b32.xlu0 %v32, 57
  %v340 = vpop.permute.xlu0 %339
  %341 = vrot.lane.b32.xlu0 %v33, 57
  %v342 = vpop.permute.xlu0 %341
  %343 = vrot.lane.b32.xlu0 %v34, 57
  %v344 = vpop.permute.xlu0 %343
  %345 = vrot.lane.b32.xlu0 %v35, 57
  %v346 = vpop.permute.xlu0 %345
  %347 = vrot.lane.b32.xlu0 %v36, 57
  %v348 = vpop.permute.xlu0 %347
  %vm349 = vcmp.lt.s32.totalorder %v54, 57
  %v350 = vsel %vm349, %v346, %v348
  %v351 = vsel %vm349, %v344, %v346
  %v352 = vsel %vm349, %v342, %v344
  %v353 = vsel %vm349, %v340, %v342
  %v354 = vsel %vm349, %v338, %v340
  %v355 = vsel %vm349, %v336, %v338
  %v356 = vsel %vm349, %v334, %v336
  %v357 = vsel %vm349, %v348, %v334
  %v358 = vld [vmem:[%s3 + $0x180] sm:$0xff]
  %v359 = vld [vmem:[%s3 + $0x188] sm:$0xff]
  %v360 = vld [vmem:[%s3 + $0x190] sm:$0xff]
  %v361 = vld [vmem:[%s3 + $0x198] sm:$0xff]
  %v362 = vld [vmem:[%s3 + $0x1a0] sm:$0xff]
  %v363 = vld [vmem:[%s3 + $0x1a8] sm:$0xff]
  %v364 = vld [vmem:[%s3 + $0x1b0] sm:$0xff]
  %v365 = vld [vmem:[%s3 + $0x1b8] sm:$0xff]
  %v366 = vmul.f32 %v357, %v358
  %v367 = vmul.f32 %v356, %v359
  %v368 = vmul.f32 %v355, %v360
  %v369 = vmul.f32 %v354, %v361
  %v370 = vmul.f32 %v353, %v362
  %v371 = vmul.f32 %v352, %v363
  %v372 = vmul.f32 %v351, %v364
  %v373 = vmul.f32 %v350, %v365
  %374 = vst [vmem:[#allocation2 + $0x180] sm:$0xff] %v366
  %375 = vst [vmem:[#allocation2 + $0x188] sm:$0xff] %v367
  %376 = vst [vmem:[#allocation2 + $0x190] sm:$0xff] %v368
  %377 = vst [vmem:[#allocation2 + $0x198] sm:$0xff] %v369
  %378 = vst [vmem:[#allocation2 + $0x1a0] sm:$0xff] %v370
  %379 = vst [vmem:[#allocation2 + $0x1a8] sm:$0xff] %v371
  %380 = vst [vmem:[#allocation2 + $0x1b0] sm:$0xff] %v372
  %381 = vst [vmem:[#allocation2 + $0x1b8] sm:$0xff] %v373
  %382 = vrot.lane.b32.xlu0 %v29, 56
  %v383 = vpop.permute.xlu0 %382
  %384 = vrot.lane.b32.xlu0 %v30, 56
  %v385 = vpop.permute.xlu0 %384
  %386 = vrot.lane.b32.xlu0 %v31, 56
  %v387 = vpop.permute.xlu0 %386
  %388 = vrot.lane.b32.xlu0 %v32, 56
  %v389 = vpop.permute.xlu0 %388
  %390 = vrot.lane.b32.xlu0 %v33, 56
  %v391 = vpop.permute.xlu0 %390
  %392 = vrot.lane.b32.xlu0 %v34, 56
  %v393 = vpop.permute.xlu0 %392
  %394 = vrot.lane.b32.xlu0 %v35, 56
  %v395 = vpop.permute.xlu0 %394
  %396 = vrot.lane.b32.xlu0 %v36, 56
  %v397 = vpop.permute.xlu0 %396
  %vm398 = vcmp.lt.s32.totalorder %v54, 56
  %v399 = vsel %vm398, %v395, %v397
  %v400 = vsel %vm398, %v393, %v395
  %v401 = vsel %vm398, %v391, %v393
  %v402 = vsel %vm398, %v389, %v391
  %v403 = vsel %vm398, %v387, %v389
  %v404 = vsel %vm398, %v385, %v387
  %v405 = vsel %vm398, %v383, %v385
  %v406 = vsel %vm398, %v397, %v383
  %v407 = vld [vmem:[%s3 + $0x1c0] sm:$0xff]
  %v408 = vld [vmem:[%s3 + $0x1c8] sm:$0xff]
  %v409 = vld [vmem:[%s3 + $0x1d0] sm:$0xff]
  %v410 = vld [vmem:[%s3 + $0x1d8] sm:$0xff]
  %v411 = vld [vmem:[%s3 + $0x1e0] sm:$0xff]
  %v412 = vld [vmem:[%s3 + $0x1e8] sm:$0xff]
  %v413 = vld [vmem:[%s3 + $0x1f0] sm:$0xff]
  %v414 = vld [vmem:[%s3 + $0x1f8] sm:$0xff]
  %v415 = vmul.f32 %v406, %v407
  %v416 = vmul.f32 %v405, %v408
  %v417 = vmul.f32 %v404, %v409
  %v418 = vmul.f32 %v403, %v410
  %v419 = vmul.f32 %v402, %v411
  %v420 = vmul.f32 %v401, %v412
  %v421 = vmul.f32 %v400, %v413
  %v422 = vmul.f32 %v399, %v414
  %423 = vst [vmem:[#allocation2 + $0x1c0] sm:$0xff] %v415
  %424 = vst [vmem:[#allocation2 + $0x1c8] sm:$0xff] %v416
  %425 = vst [vmem:[#allocation2 + $0x1d0] sm:$0xff] %v417
  %426 = vst [vmem:[#allocation2 + $0x1d8] sm:$0xff] %v418
  %427 = vst [vmem:[#allocation2 + $0x1e0] sm:$0xff] %v419
  %428 = vst [vmem:[#allocation2 + $0x1e8] sm:$0xff] %v420
  %429 = vst [vmem:[#allocation2 + $0x1f0] sm:$0xff] %v421
  %430 = vst [vmem:[#allocation2 + $0x1f8] sm:$0xff] %v422
  %431 = vrot.lane.b32.xlu0 %v29, 55
  %v432 = vpop.permute.xlu0 %431
  %433 = vrot.lane.b32.xlu0 %v30, 55
  %v434 = vpop.permute.xlu0 %433
  %435 = vrot.lane.b32.xlu0 %v31, 55
  %v436 = vpop.permute.xlu0 %435
  %437 = vrot.lane.b32.xlu0 %v32, 55
  %v438 = vpop.permute.xlu0 %437
  %439 = vrot.lane.b32.xlu0 %v33, 55
  %v440 = vpop.permute.xlu0 %439
  %441 = vrot.lane.b32.xlu0 %v34, 55
  %v442 = vpop.permute.xlu0 %441
  %443 = vrot.lane.b32.xlu0 %v35, 55
  %v444 = vpop.permute.xlu0 %443
  %445 = vrot.lane.b32.xlu0 %v36, 55
  %v446 = vpop.permute.xlu0 %445
  %vm447 = vcmp.lt.s32.totalorder %v54, 55
  %v448 = vsel %vm447, %v444, %v446
  %v449 = vsel %vm447, %v442, %v444
  %v450 = vsel %vm447, %v440, %v442
  %v451 = vsel %vm447, %v438, %v440
  %v452 = vsel %vm447, %v436, %v438
  %v453 = vsel %vm447, %v434, %v436
  %v454 = vsel %vm447, %v432, %v434
  %v455 = vsel %vm447, %v446, %v432
  %v456 = vld [vmem:[%s3 + $0x200] sm:$0xff]
  %v457 = vld [vmem:[%s3 + $0x208] sm:$0xff]
  %v458 = vld [vmem:[%s3 + $0x210] sm:$0xff]
  %v459 = vld [vmem:[%s3 + $0x218] sm:$0xff]
  %v460 = vld [vmem:[%s3 + $0x220] sm:$0xff]
  %v461 = vld [vmem:[%s3 + $0x228] sm:$0xff]
  %v462 = vld [vmem:[%s3 + $0x230] sm:$0xff]
  %v463 = vld [vmem:[%s3 + $0x238] sm:$0xff]
  %v464 = vmul.f32 %v455, %v456
  %v465 = vmul.f32 %v454, %v457
  %v466 = vmul.f32 %v453, %v458
  %v467 = vmul.f32 %v452, %v459
  %v468 = vmul.f32 %v451, %v460
  %v469 = vmul.f32 %v450, %v461
  %v470 = vmul.f32 %v449, %v462
  %v471 = vmul.f32 %v448, %v463
  %472 = vst [vmem:[#allocation2 + $0x200] sm:$0xff] %v464
  %473 = vst [vmem:[#allocation2 + $0x208] sm:$0xff] %v465
  %474 = vst [vmem:[#allocation2 + $0x210] sm:$0xff] %v466
  %475 = vst [vmem:[#allocation2 + $0x218] sm:$0xff] %v467
  %476 = vst [vmem:[#allocation2 + $0x220] sm:$0xff] %v468
  %477 = vst [vmem:[#allocation2 + $0x228] sm:$0xff] %v469
  %478 = vst [vmem:[#allocation2 + $0x230] sm:$0xff] %v470
  %479 = vst [vmem:[#allocation2 + $0x238] sm:$0xff] %v471
  %480 = vrot.lane.b32.xlu0 %v29, 9
  %v481 = vpop.permute.xlu0 %480
  %482 = vrot.lane.b32.xlu0 %v30, 9
  %v483 = vpop.permute.xlu0 %482
  %484 = vrot.lane.b32.xlu0 %v31, 9
  %v485 = vpop.permute.xlu0 %484
  %486 = vrot.lane.b32.xlu0 %v32, 9
  %v487 = vpop.permute.xlu0 %486
  %488 = vrot.lane.b32.xlu0 %v33, 9
  %v489 = vpop.permute.xlu0 %488
  %490 = vrot.lane.b32.xlu0 %v34, 9
  %v491 = vpop.permute.xlu0 %490
  %492 = vrot.lane.b32.xlu0 %v35, 9
  %v493 = vpop.permute.xlu0 %492
  %494 = vrot.lane.b32.xlu0 %v36, 9
  %v495 = vpop.permute.xlu0 %494
  %vm496 = vcmp.lt.s32.totalorder %v54, 9
  %v497 = vsel %vm496, %v493, %v495
  %v498 = vsel %vm496, %v491, %v493
  %v499 = vsel %vm496, %v489, %v491
  %v500 = vsel %vm496, %v487, %v489
  %v501 = vsel %vm496, %v485, %v487
  %v502 = vsel %vm496, %v483, %v485
  %v503 = vsel %vm496, %v481, %v483
  %v504 = vsel %vm496, %v495, %v481
  %v505 = vld [vmem:[%s3 + $0x240] sm:$0xff]
  %v506 = vld [vmem:[%s3 + $0x248] sm:$0xff]
  %v507 = vld [vmem:[%s3 + $0x250] sm:$0xff]
  %v508 = vld [vmem:[%s3 + $0x258] sm:$0xff]
  %v509 = vld [vmem:[%s3 + $0x260] sm:$0xff]
  %v510 = vld [vmem:[%s3 + $0x268] sm:$0xff]
  %v511 = vld [vmem:[%s3 + $0x270] sm:$0xff]
  %v512 = vld [vmem:[%s3 + $0x278] sm:$0xff]
  %v513 = vmul.f32 %v504, %v505
  %v514 = vmul.f32 %v503, %v506
  %v515 = vmul.f32 %v502, %v507
  %v516 = vmul.f32 %v501, %v508
  %v517 = vmul.f32 %v500, %v509
  %v518 = vmul.f32 %v499, %v510
  %v519 = vmul.f32 %v498, %v511
  %v520 = vmul.f32 %v497, %v512
  %521 = vst [vmem:[#allocation2 + $0x240] sm:$0xff] %v513
  %522 = vst [vmem:[#allocation2 + $0x248] sm:$0xff] %v514
  %523 = vst [vmem:[#allocation2 + $0x250] sm:$0xff] %v515
  %524 = vst [vmem:[#allocation2 + $0x258] sm:$0xff] %v516
  %525 = vst [vmem:[#allocation2 + $0x260] sm:$0xff] %v517
  %526 = vst [vmem:[#allocation2 + $0x268] sm:$0xff] %v518
  %527 = vst [vmem:[#allocation2 + $0x270] sm:$0xff] %v519
  %528 = vst [vmem:[#allocation2 + $0x278] sm:$0xff] %v520
  %529 = vrot.lane.b32.xlu0 %v29, 8
  %v530 = vpop.permute.xlu0 %529
  %531 = vrot.lane.b32.xlu0 %v30, 8
  %v532 = vpop.permute.xlu0 %531
  %533 = vrot.lane.b32.xlu0 %v31, 8
  %v534 = vpop.permute.xlu0 %533
  %535 = vrot.lane.b32.xlu0 %v32, 8
  %v536 = vpop.permute.xlu0 %535
  %537 = vrot.lane.b32.xlu0 %v33, 8
  %v538 = vpop.permute.xlu0 %537
  %539 = vrot.lane.b32.xlu0 %v34, 8
  %v540 = vpop.permute.xlu0 %539
  %541 = vrot.lane.b32.xlu0 %v35, 8
  %v542 = vpop.permute.xlu0 %541
  %543 = vrot.lane.b32.xlu0 %v36, 8
  %v544 = vpop.permute.xlu0 %543
  %vm545 = vcmp.lt.s32.totalorder %v54, 8
  %v546 = vsel %vm545, %v542, %v544
  %v547 = vsel %vm545, %v540, %v542
  %v548 = vsel %vm545, %v538, %v540
  %v549 = vsel %vm545, %v536, %v538
  %v550 = vsel %vm545, %v534, %v536
  %v551 = vsel %vm545, %v532, %v534
  %v552 = vsel %vm545, %v530, %v532
  %v553 = vsel %vm545, %v544, %v530
  %v554 = vld [vmem:[%s3 + $0x280] sm:$0xff]
  %v555 = vld [vmem:[%s3 + $0x288] sm:$0xff]
  %v556 = vld [vmem:[%s3 + $0x290] sm:$0xff]
  %v557 = vld [vmem:[%s3 + $0x298] sm:$0xff]
  %v558 = vld [vmem:[%s3 + $0x2a0] sm:$0xff]
  %v559 = vld [vmem:[%s3 + $0x2a8] sm:$0xff]
  %v560 = vld [vmem:[%s3 + $0x2b0] sm:$0xff]
  %v561 = vld [vmem:[%s3 + $0x2b8] sm:$0xff]
  %v562 = vmul.f32 %v553, %v554
  %v563 = vmul.f32 %v552, %v555
  %v564 = vmul.f32 %v551, %v556
  %v565 = vmul.f32 %v550, %v557
  %v566 = vmul.f32 %v549, %v558
  %v567 = vmul.f32 %v548, %v559
  %v568 = vmul.f32 %v547, %v560
  %v569 = vmul.f32 %v546, %v561
  %570 = vst [vmem:[#allocation2 + $0x280] sm:$0xff] %v562
  %571 = vst [vmem:[#allocation2 + $0x288] sm:$0xff] %v563
  %572 = vst [vmem:[#allocation2 + $0x290] sm:$0xff] %v564
  %573 = vst [vmem:[#allocation2 + $0x298] sm:$0xff] %v565
  %574 = vst [vmem:[#allocation2 + $0x2a0] sm:$0xff] %v566
  %575 = vst [vmem:[#allocation2 + $0x2a8] sm:$0xff] %v567
  %576 = vst [vmem:[#allocation2 + $0x2b0] sm:$0xff] %v568
  %577 = vst [vmem:[#allocation2 + $0x2b8] sm:$0xff] %v569
  %578 = vrot.lane.b32.xlu0 %v29, 7
  %v579 = vpop.permute.xlu0 %578
  %580 = vrot.lane.b32.xlu0 %v30, 7
  %v581 = vpop.permute.xlu0 %580
  %582 = vrot.lane.b32.xlu0 %v31, 7
  %v583 = vpop.permute.xlu0 %582
  %584 = vrot.lane.b32.xlu0 %v32, 7
  %v585 = vpop.permute.xlu0 %584
  %586 = vrot.lane.b32.xlu0 %v33, 7
  %v587 = vpop.permute.xlu0 %586
  %588 = vrot.lane.b32.xlu0 %v34, 7
  %v589 = vpop.permute.xlu0 %588
  %590 = vrot.lane.b32.xlu0 %v35, 7
  %v591 = vpop.permute.xlu0 %590
  %592 = vrot.lane.b32.xlu0 %v36, 7
  %v593 = vpop.permute.xlu0 %592
  %vm594 = vcmp.lt.s32.totalorder %v54, 7
  %v595 = vsel %vm594, %v591, %v593
  %v596 = vsel %vm594, %v589, %v591
  %v597 = vsel %vm594, %v587, %v589
  %v598 = vsel %vm594, %v585, %v587
  %v599 = vsel %vm594, %v583, %v585
  %v600 = vsel %vm594, %v581, %v583
  %v601 = vsel %vm594, %v579, %v581
  %v602 = vsel %vm594, %v593, %v579
  %v603 = vld [vmem:[%s3 + $0x2c0] sm:$0xff]
  %v604 = vld [vmem:[%s3 + $0x2c8] sm:$0xff]
  %v605 = vld [vmem:[%s3 + $0x2d0] sm:$0xff]
  %v606 = vld [vmem:[%s3 + $0x2d8] sm:$0xff]
  %v607 = vld [vmem:[%s3 + $0x2e0] sm:$0xff]
  %v608 = vld [vmem:[%s3 + $0x2e8] sm:$0xff]
  %v609 = vld [vmem:[%s3 + $0x2f0] sm:$0xff]
  %v610 = vld [vmem:[%s3 + $0x2f8] sm:$0xff]
  %v611 = vmul.f32 %v602, %v603
  %v612 = vmul.f32 %v601, %v604
  %v613 = vmul.f32 %v600, %v605
  %v614 = vmul.f32 %v599, %v606
  %v615 = vmul.f32 %v598, %v607
  %v616 = vmul.f32 %v597, %v608
  %v617 = vmul.f32 %v596, %v609
  %v618 = vmul.f32 %v595, %v610
  %619 = vst [vmem:[#allocation2 + $0x2c0] sm:$0xff] %v611
  %620 = vst [vmem:[#allocation2 + $0x2c8] sm:$0xff] %v612
  %621 = vst [vmem:[#allocation2 + $0x2d0] sm:$0xff] %v613
  %622 = vst [vmem:[#allocation2 + $0x2d8] sm:$0xff] %v614
  %623 = vst [vmem:[#allocation2 + $0x2e0] sm:$0xff] %v615
  %624 = vst [vmem:[#allocation2 + $0x2e8] sm:$0xff] %v616
  %625 = vst [vmem:[#allocation2 + $0x2f0] sm:$0xff] %v617
  %626 = vst [vmem:[#allocation2 + $0x2f8] sm:$0xff] %v618
  %627 = vrot.lane.b32.xlu0 %v29, 1
  %v628 = vpop.permute.xlu0 %627
  %629 = vrot.lane.b32.xlu0 %v30, 1
  %v630 = vpop.permute.xlu0 %629
  %631 = vrot.lane.b32.xlu0 %v31, 1
  %v632 = vpop.permute.xlu0 %631
  %633 = vrot.lane.b32.xlu0 %v32, 1
  %v634 = vpop.permute.xlu0 %633
  %635 = vrot.lane.b32.xlu0 %v33, 1
  %v636 = vpop.permute.xlu0 %635
  %637 = vrot.lane.b32.xlu0 %v34, 1
  %v638 = vpop.permute.xlu0 %637
  %639 = vrot.lane.b32.xlu0 %v35, 1
  %v640 = vpop.permute.xlu0 %639
  %641 = vrot.lane.b32.xlu0 %v36, 1
  %v642 = vpop.permute.xlu0 %641
  %vm643 = vcmp.lt.s32.totalorder %v54, 1
  %v644 = vsel %vm643, %v640, %v642
  %v645 = vsel %vm643, %v638, %v640
  %v646 = vsel %vm643, %v636, %v638
  %v647 = vsel %vm643, %v634, %v636
  %v648 = vsel %vm643, %v632, %v634
  %v649 = vsel %vm643, %v630, %v632
  %v650 = vsel %vm643, %v628, %v630
  %v651 = vsel %vm643, %v642, %v628
  %v652 = vld [vmem:[%s3 + $0x300] sm:$0xff]
  %v653 = vld [vmem:[%s3 + $0x308] sm:$0xff]
  %v654 = vld [vmem:[%s3 + $0x310] sm:$0xff]
  %v655 = vld [vmem:[%s3 + $0x318] sm:$0xff]
  %v656 = vld [vmem:[%s3 + $0x320] sm:$0xff]
  %v657 = vld [vmem:[%s3 + $0x328] sm:$0xff]
  %v658 = vld [vmem:[%s3 + $0x330] sm:$0xff]
  %v659 = vld [vmem:[%s3 + $0x338] sm:$0xff]
  %v660 = vmul.f32 %v651, %v652
  %v661 = vmul.f32 %v650, %v653
  %v662 = vmul.f32 %v649, %v654
  %v663 = vmul.f32 %v648, %v655
  %v664 = vmul.f32 %v647, %v656
  %v665 = vmul.f32 %v646, %v657
  %v666 = vmul.f32 %v645, %v658
  %v667 = vmul.f32 %v644, %v659
  %668 = vst [vmem:[#allocation2 + $0x300] sm:$0xff] %v660
  %669 = vst [vmem:[#allocation2 + $0x308] sm:$0xff] %v661
  %670 = vst [vmem:[#allocation2 + $0x310] sm:$0xff] %v662
  %671 = vst [vmem:[#allocation2 + $0x318] sm:$0xff] %v663
  %672 = vst [vmem:[#allocation2 + $0x320] sm:$0xff] %v664
  %673 = vst [vmem:[#allocation2 + $0x328] sm:$0xff] %v665
  %674 = vst [vmem:[#allocation2 + $0x330] sm:$0xff] %v666
  %675 = vst [vmem:[#allocation2 + $0x338] sm:$0xff] %v667
  %v676 = vld [vmem:[%s3 + $0x340] sm:$0xff]
  %v677 = vld [vmem:[%s3 + $0x348] sm:$0xff]
  %v678 = vld [vmem:[%s3 + $0x350] sm:$0xff]
  %v679 = vld [vmem:[%s3 + $0x358] sm:$0xff]
  %v680 = vld [vmem:[%s3 + $0x360] sm:$0xff]
  %v681 = vld [vmem:[%s3 + $0x368] sm:$0xff]
  %v682 = vld [vmem:[%s3 + $0x370] sm:$0xff]
  %v683 = vld [vmem:[%s3 + $0x378] sm:$0xff]
  %v684 = vmul.f32 %v29, %v676
  %v685 = vmul.f32 %v30, %v677
  %v686 = vmul.f32 %v31, %v678
  %v687 = vmul.f32 %v32, %v679
  %v688 = vmul.f32 %v33, %v680
  %v689 = vmul.f32 %v34, %v681
  %v690 = vmul.f32 %v35, %v682
  %v691 = vmul.f32 %v36, %v683
  %692 = vst [vmem:[#allocation2 + $0x340] sm:$0xff] %v684
  %693 = vst [vmem:[#allocation2 + $0x348] sm:$0xff] %v685
  %694 = vst [vmem:[#allocation2 + $0x350] sm:$0xff] %v686
  %695 = vst [vmem:[#allocation2 + $0x358] sm:$0xff] %v687
  %696 = vst [vmem:[#allocation2 + $0x360] sm:$0xff] %v688
  %697 = vst [vmem:[#allocation2 + $0x368] sm:$0xff] %v689
  %698 = vst [vmem:[#allocation2 + $0x370] sm:$0xff] %v690
  %699 = vst [vmem:[#allocation2 + $0x378] sm:$0xff] %v691
  %700 = vrot.lane.b32.xlu0 %v29, 127
  %v701 = vpop.permute.xlu0 %700
  %702 = vrot.lane.b32.xlu0 %v30, 127
  %v703 = vpop.permute.xlu0 %702
  %704 = vrot.lane.b32.xlu0 %v31, 127
  %v705 = vpop.permute.xlu0 %704
  %706 = vrot.lane.b32.xlu0 %v32, 127
  %v707 = vpop.permute.xlu0 %706
  %708 = vrot.lane.b32.xlu0 %v33, 127
  %v709 = vpop.permute.xlu0 %708
  %710 = vrot.lane.b32.xlu0 %v34, 127
  %v711 = vpop.permute.xlu0 %710
  %712 = vrot.lane.b32.xlu0 %v35, 127
  %v713 = vpop.permute.xlu0 %712
  %714 = vrot.lane.b32.xlu0 %v36, 127
  %v715 = vpop.permute.xlu0 %714
  %vm716 = vcmp.lt.s32.totalorder %v54, 127
  %v717 = vsel %vm716, %v713, %v715
  %v718 = vsel %vm716, %v711, %v713
  %v719 = vsel %vm716, %v709, %v711
  %v720 = vsel %vm716, %v707, %v709
  %v721 = vsel %vm716, %v705, %v707
  %v722 = vsel %vm716, %v703, %v705
  %v723 = vsel %vm716, %v701, %v703
  %v724 = vsel %vm716, %v715, %v701
  %v725 = vld [vmem:[%s3 + $0x380] sm:$0xff]
  %v726 = vld [vmem:[%s3 + $0x388] sm:$0xff]
  %v727 = vld [vmem:[%s3 + $0x390] sm:$0xff]
  %v728 = vld [vmem:[%s3 + $0x398] sm:$0xff]
  %v729 = vld [vmem:[%s3 + $0x3a0] sm:$0xff]
  %v730 = vld [vmem:[%s3 + $0x3a8] sm:$0xff]
  %v731 = vld [vmem:[%s3 + $0x3b0] sm:$0xff]
  %v732 = vld [vmem:[%s3 + $0x3b8] sm:$0xff]
  %v733 = vmul.f32 %v723, %v725
  %v734 = vmul.f32 %v722, %v726
  %v735 = vmul.f32 %v721, %v727
  %v736 = vmul.f32 %v720, %v728
  %v737 = vmul.f32 %v719, %v729
  %v738 = vmul.f32 %v718, %v730
  %v739 = vmul.f32 %v717, %v731
  %v740 = vmul.f32 %v724, %v732
  %741 = vst [vmem:[#allocation2 + $0x380] sm:$0xff] %v733
  %742 = vst [vmem:[#allocation2 + $0x388] sm:$0xff] %v734
  %743 = vst [vmem:[#allocation2 + $0x390] sm:$0xff] %v735
  %744 = vst [vmem:[#allocation2 + $0x398] sm:$0xff] %v736
  %745 = vst [vmem:[#allocation2 + $0x3a0] sm:$0xff] %v737
  %746 = vst [vmem:[#allocation2 + $0x3a8] sm:$0xff] %v738
  %747 = vst [vmem:[#allocation2 + $0x3b0] sm:$0xff] %v739
  %748 = vst [vmem:[#allocation2 + $0x3b8] sm:$0xff] %v740
  %749 = vrot.lane.b32.xlu0 %v29, 121
  %v750 = vpop.permute.xlu0 %749
  %751 = vrot.lane.b32.xlu0 %v30, 121
  %v752 = vpop.permute.xlu0 %751
  %753 = vrot.lane.b32.xlu0 %v31, 121
  %v754 = vpop.permute.xlu0 %753
  %755 = vrot.lane.b32.xlu0 %v32, 121
  %v756 = vpop.permute.xlu0 %755
  %757 = vrot.lane.b32.xlu0 %v33, 121
  %v758 = vpop.permute.xlu0 %757
  %759 = vrot.lane.b32.xlu0 %v34, 121
  %v760 = vpop.permute.xlu0 %759
  %761 = vrot.lane.b32.xlu0 %v35, 121
  %v762 = vpop.permute.xlu0 %761
  %763 = vrot.lane.b32.xlu0 %v36, 121
  %v764 = vpop.permute.xlu0 %763
  %vm765 = vcmp.lt.s32.totalorder %v54, 121
  %v766 = vsel %vm765, %v762, %v764
  %v767 = vsel %vm765, %v760, %v762
  %v768 = vsel %vm765, %v758, %v760
  %v769 = vsel %vm765, %v756, %v758
  %v770 = vsel %vm765, %v754, %v756
  %v771 = vsel %vm765, %v752, %v754
  %v772 = vsel %vm765, %v750, %v752
  %v773 = vsel %vm765, %v764, %v750
  %v774 = vld [vmem:[%s3 + $0x3c0] sm:$0xff]
  %v775 = vld [vmem:[%s3 + $0x3c8] sm:$0xff]
  %v776 = vld [vmem:[%s3 + $0x3d0] sm:$0xff]
  %v777 = vld [vmem:[%s3 + $0x3d8] sm:$0xff]
  %v778 = vld [vmem:[%s3 + $0x3e0] sm:$0xff]
  %v779 = vld [vmem:[%s3 + $0x3e8] sm:$0xff]
  %v780 = vld [vmem:[%s3 + $0x3f0] sm:$0xff]
  %v781 = vld [vmem:[%s3 + $0x3f8] sm:$0xff]
  %v782 = vmul.f32 %v772, %v774
  %v783 = vmul.f32 %v771, %v775
  %v784 = vmul.f32 %v770, %v776
  %v785 = vmul.f32 %v769, %v777
  %v786 = vmul.f32 %v768, %v778
  %v787 = vmul.f32 %v767, %v779
  %v788 = vmul.f32 %v766, %v780
  %v789 = vmul.f32 %v773, %v781
  %790 = vst [vmem:[#allocation2 + $0x3c0] sm:$0xff] %v782
  %791 = vst [vmem:[#allocation2 + $0x3c8] sm:$0xff] %v783
  %792 = vst [vmem:[#allocation2 + $0x3d0] sm:$0xff] %v784
  %793 = vst [vmem:[#allocation2 + $0x3d8] sm:$0xff] %v785
  %794 = vst [vmem:[#allocation2 + $0x3e0] sm:$0xff] %v786
  %795 = vst [vmem:[#allocation2 + $0x3e8] sm:$0xff] %v787
  %796 = vst [vmem:[#allocation2 + $0x3f0] sm:$0xff] %v788
  %797 = vst [vmem:[#allocation2 + $0x3f8] sm:$0xff] %v789
  %798 = vrot.lane.b32.xlu0 %v29, 120
  %v799 = vpop.permute.xlu0 %798
  %800 = vrot.lane.b32.xlu0 %v30, 120
  %v801 = vpop.permute.xlu0 %800
  %802 = vrot.lane.b32.xlu0 %v31, 120
  %v803 = vpop.permute.xlu0 %802
  %804 = vrot.lane.b32.xlu0 %v32, 120
  %v805 = vpop.permute.xlu0 %804
  %806 = vrot.lane.b32.xlu0 %v33, 120
  %v807 = vpop.permute.xlu0 %806
  %808 = vrot.lane.b32.xlu0 %v34, 120
  %v809 = vpop.permute.xlu0 %808
  %810 = vrot.lane.b32.xlu0 %v35, 120
  %v811 = vpop.permute.xlu0 %810
  %812 = vrot.lane.b32.xlu0 %v36, 120
  %v813 = vpop.permute.xlu0 %812
  %vm814 = vcmp.lt.s32.totalorder %v54, 120
  %v815 = vsel %vm814, %v811, %v813
  %v816 = vsel %vm814, %v809, %v811
  %v817 = vsel %vm814, %v807, %v809
  %v818 = vsel %vm814, %v805, %v807
  %v819 = vsel %vm814, %v803, %v805
  %v820 = vsel %vm814, %v801, %v803
  %v821 = vsel %vm814, %v799, %v801
  %v822 = vsel %vm814, %v813, %v799
  %v823 = vld [vmem:[%s3 + $0x400] sm:$0xff]
  %v824 = vld [vmem:[%s3 + $0x408] sm:$0xff]
  %v825 = vld [vmem:[%s3 + $0x410] sm:$0xff]
  %v826 = vld [vmem:[%s3 + $0x418] sm:$0xff]
  %v827 = vld [vmem:[%s3 + $0x420] sm:$0xff]
  %v828 = vld [vmem:[%s3 + $0x428] sm:$0xff]
  %v829 = vld [vmem:[%s3 + $0x430] sm:$0xff]
  %v830 = vld [vmem:[%s3 + $0x438] sm:$0xff]
  %v831 = vmul.f32 %v821, %v823
  %v832 = vmul.f32 %v820, %v824
  %v833 = vmul.f32 %v819, %v825
  %v834 = vmul.f32 %v818, %v826
  %v835 = vmul.f32 %v817, %v827
  %v836 = vmul.f32 %v816, %v828
  %v837 = vmul.f32 %v815, %v829
  %v838 = vmul.f32 %v822, %v830
  %839 = vst [vmem:[#allocation2 + $0x400] sm:$0xff] %v831
  %840 = vst [vmem:[#allocation2 + $0x408] sm:$0xff] %v832
  %841 = vst [vmem:[#allocation2 + $0x410] sm:$0xff] %v833
  %842 = vst [vmem:[#allocation2 + $0x418] sm:$0xff] %v834
  %843 = vst [vmem:[#allocation2 + $0x420] sm:$0xff] %v835
  %844 = vst [vmem:[#allocation2 + $0x428] sm:$0xff] %v836
  %845 = vst [vmem:[#allocation2 + $0x430] sm:$0xff] %v837
  %846 = vst [vmem:[#allocation2 + $0x438] sm:$0xff] %v838
  %847 = vrot.lane.b32.xlu0 %v29, 119
  %v848 = vpop.permute.xlu0 %847
  %849 = vrot.lane.b32.xlu0 %v30, 119
  %v850 = vpop.permute.xlu0 %849
  %851 = vrot.lane.b32.xlu0 %v31, 119
  %v852 = vpop.permute.xlu0 %851
  %853 = vrot.lane.b32.xlu0 %v32, 119
  %v854 = vpop.permute.xlu0 %853
  %855 = vrot.lane.b32.xlu0 %v33, 119
  %v856 = vpop.permute.xlu0 %855
  %857 = vrot.lane.b32.xlu0 %v34, 119
  %v858 = vpop.permute.xlu0 %857
  %859 = vrot.lane.b32.xlu0 %v35, 119
  %v860 = vpop.permute.xlu0 %859
  %861 = vrot.lane.b32.xlu0 %v36, 119
  %v862 = vpop.permute.xlu0 %861
  %vm863 = vcmp.lt.s32.totalorder %v54, 119
  %v864 = vsel %vm863, %v860, %v862
  %v865 = vsel %vm863, %v858, %v860
  %v866 = vsel %vm863, %v856, %v858
  %v867 = vsel %vm863, %v854, %v856
  %v868 = vsel %vm863, %v852, %v854
  %v869 = vsel %vm863, %v850, %v852
  %v870 = vsel %vm863, %v848, %v850
  %v871 = vsel %vm863, %v862, %v848
  %v872 = vld [vmem:[%s3 + $0x440] sm:$0xff]
  %v873 = vld [vmem:[%s3 + $0x448] sm:$0xff]
  %v874 = vld [vmem:[%s3 + $0x450] sm:$0xff]
  %v875 = vld [vmem:[%s3 + $0x458] sm:$0xff]
  %v876 = vld [vmem:[%s3 + $0x460] sm:$0xff]
  %v877 = vld [vmem:[%s3 + $0x468] sm:$0xff]
  %v878 = vld [vmem:[%s3 + $0x470] sm:$0xff]
  %v879 = vld [vmem:[%s3 + $0x478] sm:$0xff]
  %v880 = vmul.f32 %v870, %v872
  %v881 = vmul.f32 %v869, %v873
  %v882 = vmul.f32 %v868, %v874
  %v883 = vmul.f32 %v867, %v875
  %v884 = vmul.f32 %v866, %v876
  %v885 = vmul.f32 %v865, %v877
  %v886 = vmul.f32 %v864, %v878
  %v887 = vmul.f32 %v871, %v879
  %888 = vst [vmem:[#allocation2 + $0x440] sm:$0xff] %v880
  %889 = vst [vmem:[#allocation2 + $0x448] sm:$0xff] %v881
  %890 = vst [vmem:[#allocation2 + $0x450] sm:$0xff] %v882
  %891 = vst [vmem:[#allocation2 + $0x458] sm:$0xff] %v883
  %892 = vst [vmem:[#allocation2 + $0x460] sm:$0xff] %v884
  %893 = vst [vmem:[#allocation2 + $0x468] sm:$0xff] %v885
  %894 = vst [vmem:[#allocation2 + $0x470] sm:$0xff] %v886
  %895 = vst [vmem:[#allocation2 + $0x478] sm:$0xff] %v887
  %v896 = vld [vmem:[%s3 + $0x480] sm:$0xff]
  %v897 = vld [vmem:[%s3 + $0x488] sm:$0xff]
  %v898 = vld [vmem:[%s3 + $0x490] sm:$0xff]
  %v899 = vld [vmem:[%s3 + $0x498] sm:$0xff]
  %v900 = vld [vmem:[%s3 + $0x4a0] sm:$0xff]
  %v901 = vld [vmem:[%s3 + $0x4a8] sm:$0xff]
  %v902 = vld [vmem:[%s3 + $0x4b0] sm:$0xff]
  %v903 = vld [vmem:[%s3 + $0x4b8] sm:$0xff]
  %v904 = vmul.f32 %v62, %v896
  %v905 = vmul.f32 %v61, %v897
  %v906 = vmul.f32 %v60, %v898
  %v907 = vmul.f32 %v59, %v899
  %v908 = vmul.f32 %v58, %v900
  %v909 = vmul.f32 %v57, %v901
  %v910 = vmul.f32 %v56, %v902
  %v911 = vmul.f32 %v63, %v903
  %912 = vst [vmem:[#allocation2 + $0x480] sm:$0xff] %v904
  %913 = vst [vmem:[#allocation2 + $0x488] sm:$0xff] %v905
  %914 = vst [vmem:[#allocation2 + $0x490] sm:$0xff] %v906
  %915 = vst [vmem:[#allocation2 + $0x498] sm:$0xff] %v907
  %916 = vst [vmem:[#allocation2 + $0x4a0] sm:$0xff] %v908
  %917 = vst [vmem:[#allocation2 + $0x4a8] sm:$0xff] %v909
  %918 = vst [vmem:[#allocation2 + $0x4b0] sm:$0xff] %v910
  %919 = vst [vmem:[#allocation2 + $0x4b8] sm:$0xff] %v911
  %v920 = vld [vmem:[%s3 + $0x4c0] sm:$0xff]
  %v921 = vld [vmem:[%s3 + $0x4c8] sm:$0xff]
  %v922 = vld [vmem:[%s3 + $0x4d0] sm:$0xff]
  %v923 = vld [vmem:[%s3 + $0x4d8] sm:$0xff]
  %v924 = vld [vmem:[%s3 + $0x4e0] sm:$0xff]
  %v925 = vld [vmem:[%s3 + $0x4e8] sm:$0xff]
  %v926 = vld [vmem:[%s3 + $0x4f0] sm:$0xff]
  %v927 = vld [vmem:[%s3 + $0x4f8] sm:$0xff]
  %v928 = vmul.f32 %v111, %v920
  %v929 = vmul.f32 %v110, %v921
  %v930 = vmul.f32 %v109, %v922
  %v931 = vmul.f32 %v108, %v923
  %v932 = vmul.f32 %v107, %v924
  %v933 = vmul.f32 %v106, %v925
  %v934 = vmul.f32 %v105, %v926
  %v935 = vmul.f32 %v112, %v927
  %936 = vst [vmem:[#allocation2 + $0x4c0] sm:$0xff] %v928
  %937 = vst [vmem:[#allocation2 + $0x4c8] sm:$0xff] %v929
  %938 = vst [vmem:[#allocation2 + $0x4d0] sm:$0xff] %v930
  %939 = vst [vmem:[#allocation2 + $0x4d8] sm:$0xff] %v931
  %940 = vst [vmem:[#allocation2 + $0x4e0] sm:$0xff] %v932
  %941 = vst [vmem:[#allocation2 + $0x4e8] sm:$0xff] %v933
  %942 = vst [vmem:[#allocation2 + $0x4f0] sm:$0xff] %v934
  %943 = vst [vmem:[#allocation2 + $0x4f8] sm:$0xff] %v935
  %v944 = vld [vmem:[%s3 + $0x500] sm:$0xff]
  %v945 = vld [vmem:[%s3 + $0x508] sm:$0xff]
  %v946 = vld [vmem:[%s3 + $0x510] sm:$0xff]
  %v947 = vld [vmem:[%s3 + $0x518] sm:$0xff]
  %v948 = vld [vmem:[%s3 + $0x520] sm:$0xff]
  %v949 = vld [vmem:[%s3 + $0x528] sm:$0xff]
  %v950 = vld [vmem:[%s3 + $0x530] sm:$0xff]
  %v951 = vld [vmem:[%s3 + $0x538] sm:$0xff]
  %v952 = vmul.f32 %v160, %v944
  %v953 = vmul.f32 %v159, %v945
  %v954 = vmul.f32 %v158, %v946
  %v955 = vmul.f32 %v157, %v947
  %v956 = vmul.f32 %v156, %v948
  %v957 = vmul.f32 %v155, %v949
  %v958 = vmul.f32 %v154, %v950
  %v959 = vmul.f32 %v161, %v951
  %960 = vst [vmem:[#allocation2 + $0x500] sm:$0xff] %v952
  %961 = vst [vmem:[#allocation2 + $0x508] sm:$0xff] %v953
  %962 = vst [vmem:[#allocation2 + $0x510] sm:$0xff] %v954
  %963 = vst [vmem:[#allocation2 + $0x518] sm:$0xff] %v955
  %964 = vst [vmem:[#allocation2 + $0x520] sm:$0xff] %v956
  %965 = vst [vmem:[#allocation2 + $0x528] sm:$0xff] %v957
  %966 = vst [vmem:[#allocation2 + $0x530] sm:$0xff] %v958
  %967 = vst [vmem:[#allocation2 + $0x538] sm:$0xff] %v959
  %v968 = vld [vmem:[%s3 + $0x540] sm:$0xff]
  %v969 = vld [vmem:[%s3 + $0x548] sm:$0xff]
  %v970 = vld [vmem:[%s3 + $0x550] sm:$0xff]
  %v971 = vld [vmem:[%s3 + $0x558] sm:$0xff]
  %v972 = vld [vmem:[%s3 + $0x560] sm:$0xff]
  %v973 = vld [vmem:[%s3 + $0x568] sm:$0xff]
  %v974 = vld [vmem:[%s3 + $0x570] sm:$0xff]
  %v975 = vld [vmem:[%s3 + $0x578] sm:$0xff]
  %v976 = vmul.f32 %v209, %v968
  %v977 = vmul.f32 %v208, %v969
  %v978 = vmul.f32 %v207, %v970
  %v979 = vmul.f32 %v206, %v971
  %v980 = vmul.f32 %v205, %v972
  %v981 = vmul.f32 %v204, %v973
  %v982 = vmul.f32 %v203, %v974
  %v983 = vmul.f32 %v210, %v975
  %984 = vst [vmem:[#allocation2 + $0x540] sm:$0xff] %v976
  %985 = vst [vmem:[#allocation2 + $0x548] sm:$0xff] %v977
  %986 = vst [vmem:[#allocation2 + $0x550] sm:$0xff] %v978
  %987 = vst [vmem:[#allocation2 + $0x558] sm:$0xff] %v979
  %988 = vst [vmem:[#allocation2 + $0x560] sm:$0xff] %v980
  %989 = vst [vmem:[#allocation2 + $0x568] sm:$0xff] %v981
  %990 = vst [vmem:[#allocation2 + $0x570] sm:$0xff] %v982
  %991 = vst [vmem:[#allocation2 + $0x578] sm:$0xff] %v983
  %v992 = vld [vmem:[%s3 + $0x580] sm:$0xff]
  %v993 = vld [vmem:[%s3 + $0x588] sm:$0xff]
  %v994 = vld [vmem:[%s3 + $0x590] sm:$0xff]
  %v995 = vld [vmem:[%s3 + $0x598] sm:$0xff]
  %v996 = vld [vmem:[%s3 + $0x5a0] sm:$0xff]
  %v997 = vld [vmem:[%s3 + $0x5a8] sm:$0xff]
  %v998 = vld [vmem:[%s3 + $0x5b0] sm:$0xff]
  %v999 = vld [vmem:[%s3 + $0x5b8] sm:$0xff]
  %v1000 = vmul.f32 %v258, %v992
  %v1001 = vmul.f32 %v257, %v993
  %v1002 = vmul.f32 %v256, %v994
  %v1003 = vmul.f32 %v255, %v995
  %v1004 = vmul.f32 %v254, %v996
  %v1005 = vmul.f32 %v253, %v997
  %v1006 = vmul.f32 %v252, %v998
  %v1007 = vmul.f32 %v259, %v999
  %1008 = vst [vmem:[#allocation2 + $0x580] sm:$0xff] %v1000
  %1009 = vst [vmem:[#allocation2 + $0x588] sm:$0xff] %v1001
  %1010 = vst [vmem:[#allocation2 + $0x590] sm:$0xff] %v1002
  %1011 = vst [vmem:[#allocation2 + $0x598] sm:$0xff] %v1003
  %1012 = vst [vmem:[#allocation2 + $0x5a0] sm:$0xff] %v1004
  %1013 = vst [vmem:[#allocation2 + $0x5a8] sm:$0xff] %v1005
  %1014 = vst [vmem:[#allocation2 + $0x5b0] sm:$0xff] %v1006
  %1015 = vst [vmem:[#allocation2 + $0x5b8] sm:$0xff] %v1007
  %v1016 = vld [vmem:[%s3 + $0x5c0] sm:$0xff]
  %v1017 = vld [vmem:[%s3 + $0x5c8] sm:$0xff]
  %v1018 = vld [vmem:[%s3 + $0x5d0] sm:$0xff]
  %v1019 = vld [vmem:[%s3 + $0x5d8] sm:$0xff]
  %v1020 = vld [vmem:[%s3 + $0x5e0] sm:$0xff]
  %v1021 = vld [vmem:[%s3 + $0x5e8] sm:$0xff]
  %v1022 = vld [vmem:[%s3 + $0x5f0] sm:$0xff]
  %v1023 = vld [vmem:[%s3 + $0x5f8] sm:$0xff]
  %v1024 = vmul.f32 %v307, %v1016
  %v1025 = vmul.f32 %v306, %v1017
  %v1026 = vmul.f32 %v305, %v1018
  %v1027 = vmul.f32 %v304, %v1019
  %v1028 = vmul.f32 %v303, %v1020
  %v1029 = vmul.f32 %v302, %v1021
  %v1030 = vmul.f32 %v301, %v1022
  %v1031 = vmul.f32 %v308, %v1023
  %1032 = vst [vmem:[#allocation2 + $0x5c0] sm:$0xff] %v1024
  %1033 = vst [vmem:[#allocation2 + $0x5c8] sm:$0xff] %v1025
  %1034 = vst [vmem:[#allocation2 + $0x5d0] sm:$0xff] %v1026
  %1035 = vst [vmem:[#allocation2 + $0x5d8] sm:$0xff] %v1027
  %1036 = vst [vmem:[#allocation2 + $0x5e0] sm:$0xff] %v1028
  %1037 = vst [vmem:[#allocation2 + $0x5e8] sm:$0xff] %v1029
  %1038 = vst [vmem:[#allocation2 + $0x5f0] sm:$0xff] %v1030
  %1039 = vst [vmem:[#allocation2 + $0x5f8] sm:$0xff] %v1031
  %v1040 = vld [vmem:[%s3 + $0x600] sm:$0xff]
  %v1041 = vld [vmem:[%s3 + $0x608] sm:$0xff]
  %v1042 = vld [vmem:[%s3 + $0x610] sm:$0xff]
  %v1043 = vld [vmem:[%s3 + $0x618] sm:$0xff]
  %v1044 = vld [vmem:[%s3 + $0x620] sm:$0xff]
  %v1045 = vld [vmem:[%s3 + $0x628] sm:$0xff]
  %v1046 = vld [vmem:[%s3 + $0x630] sm:$0xff]
  %v1047 = vld [vmem:[%s3 + $0x638] sm:$0xff]
  %v1048 = vmul.f32 %v356, %v1040
  %v1049 = vmul.f32 %v355, %v1041
  %v1050 = vmul.f32 %v354, %v1042
  %v1051 = vmul.f32 %v353, %v1043
  %v1052 = vmul.f32 %v352, %v1044
  %v1053 = vmul.f32 %v351, %v1045
  %v1054 = vmul.f32 %v350, %v1046
  %v1055 = vmul.f32 %v357, %v1047
  %1056 = vst [vmem:[#allocation2 + $0x600] sm:$0xff] %v1048
  %1057 = vst [vmem:[#allocation2 + $0x608] sm:$0xff] %v1049
  %1058 = vst [vmem:[#allocation2 + $0x610] sm:$0xff] %v1050
  %1059 = vst [vmem:[#allocation2 + $0x618] sm:$0xff] %v1051
  %1060 = vst [vmem:[#allocation2 + $0x620] sm:$0xff] %v1052
  %1061 = vst [vmem:[#allocation2 + $0x628] sm:$0xff] %v1053
  %1062 = vst [vmem:[#allocation2 + $0x630] sm:$0xff] %v1054
  %1063 = vst [vmem:[#allocation2 + $0x638] sm:$0xff] %v1055
  %v1064 = vld [vmem:[%s3 + $0x640] sm:$0xff]
  %v1065 = vld [vmem:[%s3 + $0x648] sm:$0xff]
  %v1066 = vld [vmem:[%s3 + $0x650] sm:$0xff]
  %v1067 = vld [vmem:[%s3 + $0x658] sm:$0xff]
  %v1068 = vld [vmem:[%s3 + $0x660] sm:$0xff]
  %v1069 = vld [vmem:[%s3 + $0x668] sm:$0xff]
  %v1070 = vld [vmem:[%s3 + $0x670] sm:$0xff]
  %v1071 = vld [vmem:[%s3 + $0x678] sm:$0xff]
  %v1072 = vmul.f32 %v405, %v1064
  %v1073 = vmul.f32 %v404, %v1065
  %v1074 = vmul.f32 %v403, %v1066
  %v1075 = vmul.f32 %v402, %v1067
  %v1076 = vmul.f32 %v401, %v1068
  %v1077 = vmul.f32 %v400, %v1069
  %v1078 = vmul.f32 %v399, %v1070
  %v1079 = vmul.f32 %v406, %v1071
  %1080 = vst [vmem:[#allocation2 + $0x640] sm:$0xff] %v1072
  %1081 = vst [vmem:[#allocation2 + $0x648] sm:$0xff] %v1073
  %1082 = vst [vmem:[#allocation2 + $0x650] sm:$0xff] %v1074
  %1083 = vst [vmem:[#allocation2 + $0x658] sm:$0xff] %v1075
  %1084 = vst [vmem:[#allocation2 + $0x660] sm:$0xff] %v1076
  %1085 = vst [vmem:[#allocation2 + $0x668] sm:$0xff] %v1077
  %1086 = vst [vmem:[#allocation2 + $0x670] sm:$0xff] %v1078
  %1087 = vst [vmem:[#allocation2 + $0x678] sm:$0xff] %v1079
  %v1088 = vld [vmem:[%s3 + $0x680] sm:$0xff]
  %v1089 = vld [vmem:[%s3 + $0x688] sm:$0xff]
  %v1090 = vld [vmem:[%s3 + $0x690] sm:$0xff]
  %v1091 = vld [vmem:[%s3 + $0x698] sm:$0xff]
  %v1092 = vld [vmem:[%s3 + $0x6a0] sm:$0xff]
  %v1093 = vld [vmem:[%s3 + $0x6a8] sm:$0xff]
  %v1094 = vld [vmem:[%s3 + $0x6b0] sm:$0xff]
  %v1095 = vld [vmem:[%s3 + $0x6b8] sm:$0xff]
  %v1096 = vmul.f32 %v454, %v1088
  %v1097 = vmul.f32 %v453, %v1089
  %v1098 = vmul.f32 %v452, %v1090
  %v1099 = vmul.f32 %v451, %v1091
  %v1100 = vmul.f32 %v450, %v1092
  %v1101 = vmul.f32 %v449, %v1093
  %v1102 = vmul.f32 %v448, %v1094
  %v1103 = vmul.f32 %v455, %v1095
  %1104 = vst [vmem:[#allocation2 + $0x680] sm:$0xff] %v1096
  %1105 = vst [vmem:[#allocation2 + $0x688] sm:$0xff] %v1097
  %1106 = vst [vmem:[#allocation2 + $0x690] sm:$0xff] %v1098
  %1107 = vst [vmem:[#allocation2 + $0x698] sm:$0xff] %v1099
  %1108 = vst [vmem:[#allocation2 + $0x6a0] sm:$0xff] %v1100
  %1109 = vst [vmem:[#allocation2 + $0x6a8] sm:$0xff] %v1101
  %1110 = vst [vmem:[#allocation2 + $0x6b0] sm:$0xff] %v1102
  %1111 = vst [vmem:[#allocation2 + $0x6b8] sm:$0xff] %v1103
  %v1112 = vld [vmem:[%s1] sm:$0xff]
  %v1113 = vld [vmem:[%s1 + $0x8] sm:$0xff]
  %v1114 = vld [vmem:[#allocation2] sm:$0xff]
  %v1115 = vld [vmem:[#allocation2 + $0x8] sm:$0xff]
  %v1116 = vld [vmem:[#allocation2 + $0x10] sm:$0xff]
  %v1117 = vld [vmem:[#allocation2 + $0x18] sm:$0xff]
  %v1118 = vld [vmem:[#allocation2 + $0x20] sm:$0xff]
  %v1119 = vld [vmem:[#allocation2 + $0x28] sm:$0xff]
  %v1120 = vld [vmem:[#allocation2 + $0x30] sm:$0xff]
  %v1121 = vld [vmem:[#allocation2 + $0x38] sm:$0xff]
  %v1122 = vld [vmem:[#allocation2 + $0x40] sm:$0xff]
  %v1123 = vld [vmem:[#allocation2 + $0x48] sm:$0xff]
  %v1124 = vld [vmem:[#allocation2 + $0x50] sm:$0xff]
  %v1125 = vld [vmem:[#allocation2 + $0x58] sm:$0xff]
  %v1126 = vld [vmem:[#allocation2 + $0x60] sm:$0xff]
  %v1127 = vld [vmem:[#allocation2 + $0x68] sm:$0xff]
  %v1128 = vld [vmem:[#allocation2 + $0x70] sm:$0xff]
  %v1129 = vld [vmem:[#allocation2 + $0x78] sm:$0xff]
  %v1130 = vld [vmem:[#allocation2 + $0x80] sm:$0xff]
  %v1131 = vld [vmem:[#allocation2 + $0x88] sm:$0xff]
  %v1132 = vld [vmem:[#allocation2 + $0x90] sm:$0xff]
  %v1133 = vld [vmem:[#allocation2 + $0x98] sm:$0xff]
  %v1134 = vld [vmem:[#allocation2 + $0xa0] sm:$0xff]
  %v1135 = vld [vmem:[#allocation2 + $0xa8] sm:$0xff]
  %v1136 = vld [vmem:[#allocation2 + $0xb0] sm:$0xff]
  %v1137 = vld [vmem:[#allocation2 + $0xb8] sm:$0xff]
  %v1138 = vld [vmem:[#allocation2 + $0xc0] sm:$0xff]
  %v1139 = vld [vmem:[#allocation2 + $0xc8] sm:$0xff]
  %v1140 = vld [vmem:[#allocation2 + $0xd0] sm:$0xff]
  %v1141 = vld [vmem:[#allocation2 + $0xd8] sm:$0xff]
  %v1142 = vld [vmem:[#allocation2 + $0xe0] sm:$0xff]
  %v1143 = vld [vmem:[#allocation2 + $0xe8] sm:$0xff]
  %v1144 = vld [vmem:[#allocation2 + $0xf0] sm:$0xff]
  %v1145 = vld [vmem:[#allocation2 + $0xf8] sm:$0xff]
  %v1146 = vld [vmem:[#allocation2 + $0x100] sm:$0xff]
  %v1147 = vld [vmem:[#allocation2 + $0x108] sm:$0xff]
  %v1148 = vld [vmem:[#allocation2 + $0x110] sm:$0xff]
  %v1149 = vld [vmem:[#allocation2 + $0x118] sm:$0xff]
  %v1150 = vld [vmem:[#allocation2 + $0x120] sm:$0xff]
  %v1151 = vld [vmem:[#allocation2 + $0x128] sm:$0xff]
  %v1152 = vld [vmem:[#allocation2 + $0x130] sm:$0xff]
  %v1153 = vld [vmem:[#allocation2 + $0x138] sm:$0xff]
  %v1154 = vld [vmem:[#allocation2 + $0x140] sm:$0xff]
  %v1155 = vld [vmem:[#allocation2 + $0x148] sm:$0xff]
  %v1156 = vld [vmem:[#allocation2 + $0x150] sm:$0xff]
  %v1157 = vld [vmem:[#allocation2 + $0x158] sm:$0xff]
  %v1158 = vld [vmem:[#allocation2 + $0x160] sm:$0xff]
  %v1159 = vld [vmem:[#allocation2 + $0x168] sm:$0xff]
  %v1160 = vld [vmem:[#allocation2 + $0x170] sm:$0xff]
  %v1161 = vld [vmem:[#allocation2 + $0x178] sm:$0xff]
  %v1162 = vld [vmem:[#allocation2 + $0x180] sm:$0xff]
  %v1163 = vld [vmem:[#allocation2 + $0x188] sm:$0xff]
  %v1164 = vld [vmem:[#allocation2 + $0x190] sm:$0xff]
  %v1165 = vld [vmem:[#allocation2 + $0x198] sm:$0xff]
  %v1166 = vld [vmem:[#allocation2 + $0x1a0] sm:$0xff]
  %v1167 = vld [vmem:[#allocation2 + $0x1a8] sm:$0xff]
  %v1168 = vld [vmem:[#allocation2 + $0x1b0] sm:$0xff]
  %v1169 = vld [vmem:[#allocation2 + $0x1b8] sm:$0xff]
  %v1170 = vld [vmem:[#allocation2 + $0x1c0] sm:$0xff]
  %v1171 = vld [vmem:[#allocation2 + $0x1c8] sm:$0xff]
  %v1172 = vld [vmem:[#allocation2 + $0x1d0] sm:$0xff]
  %v1173 = vld [vmem:[#allocation2 + $0x1d8] sm:$0xff]
  %v1174 = vld [vmem:[#allocation2 + $0x1e0] sm:$0xff]
  %v1175 = vld [vmem:[#allocation2 + $0x1e8] sm:$0xff]
  %v1176 = vld [vmem:[#allocation2 + $0x1f0] sm:$0xff]
  %v1177 = vld [vmem:[#allocation2 + $0x1f8] sm:$0xff]
  %v1178 = vld [vmem:[#allocation2 + $0x200] sm:$0xff]
  %v1179 = vld [vmem:[#allocation2 + $0x208] sm:$0xff]
  %v1180 = vld [vmem:[#allocation2 + $0x210] sm:$0xff]
  %v1181 = vld [vmem:[#allocation2 + $0x218] sm:$0xff]
  %v1182 = vld [vmem:[#allocation2 + $0x220] sm:$0xff]
  %v1183 = vld [vmem:[#allocation2 + $0x228] sm:$0xff]
  %v1184 = vld [vmem:[#allocation2 + $0x230] sm:$0xff]
  %v1185 = vld [vmem:[#allocation2 + $0x238] sm:$0xff]
  %v1186 = vld [vmem:[#allocation2 + $0x240] sm:$0xff]
  %v1187 = vld [vmem:[#allocation2 + $0x248] sm:$0xff]
  %v1188 = vld [vmem:[#allocation2 + $0x250] sm:$0xff]
  %v1189 = vld [vmem:[#allocation2 + $0x258] sm:$0xff]
  %v1190 = vld [vmem:[#allocation2 + $0x260] sm:$0xff]
  %v1191 = vld [vmem:[#allocation2 + $0x268] sm:$0xff]
  %v1192 = vld [vmem:[#allocation2 + $0x270] sm:$0xff]
  %v1193 = vld [vmem:[#allocation2 + $0x278] sm:$0xff]
  %v1194 = vld [vmem:[#allocation2 + $0x280] sm:$0xff]
  %v1195 = vld [vmem:[#allocation2 + $0x288] sm:$0xff]
  %v1196 = vld [vmem:[#allocation2 + $0x290] sm:$0xff]
  %v1197 = vld [vmem:[#allocation2 + $0x298] sm:$0xff]
  %v1198 = vld [vmem:[#allocation2 + $0x2a0] sm:$0xff]
  %v1199 = vld [vmem:[#allocation2 + $0x2a8] sm:$0xff]
  %v1200 = vld [vmem:[#allocation2 + $0x2b0] sm:$0xff]
  %v1201 = vld [vmem:[#allocation2 + $0x2b8] sm:$0xff]
  %v1202 = vld [vmem:[#allocation2 + $0x2c0] sm:$0xff]
  %v1203 = vld [vmem:[#allocation2 + $0x2c8] sm:$0xff]
  %v1204 = vld [vmem:[#allocation2 + $0x2d0] sm:$0xff]
  %v1205 = vld [vmem:[#allocation2 + $0x2d8] sm:$0xff]
  %v1206 = vld [vmem:[#allocation2 + $0x2e0] sm:$0xff]
  %v1207 = vld [vmem:[#allocation2 + $0x2e8] sm:$0xff]
  %v1208 = vld [vmem:[#allocation2 + $0x2f0] sm:$0xff]
  %v1209 = vld [vmem:[#allocation2 + $0x2f8] sm:$0xff]
  %v1210 = vld [vmem:[#allocation2 + $0x300] sm:$0xff]
  %v1211 = vld [vmem:[#allocation2 + $0x308] sm:$0xff]
  %v1212 = vld [vmem:[#allocation2 + $0x310] sm:$0xff]
  %v1213 = vld [vmem:[#allocation2 + $0x318] sm:$0xff]
  %v1214 = vld [vmem:[#allocation2 + $0x320] sm:$0xff]
  %v1215 = vld [vmem:[#allocation2 + $0x328] sm:$0xff]
  %v1216 = vld [vmem:[#allocation2 + $0x330] sm:$0xff]
  %v1217 = vld [vmem:[#allocation2 + $0x338] sm:$0xff]
  %v1218 = vld [vmem:[#allocation2 + $0x340] sm:$0xff]
  %v1219 = vld [vmem:[#allocation2 + $0x348] sm:$0xff]
  %v1220 = vld [vmem:[#allocation2 + $0x350] sm:$0xff]
  %v1221 = vld [vmem:[#allocation2 + $0x358] sm:$0xff]
  %v1222 = vld [vmem:[#allocation2 + $0x360] sm:$0xff]
  %v1223 = vld [vmem:[#allocation2 + $0x368] sm:$0xff]
  %v1224 = vld [vmem:[#allocation2 + $0x370] sm:$0xff]
  %v1225 = vld [vmem:[#allocation2 + $0x378] sm:$0xff]
  %v1226 = vld [vmem:[#allocation2 + $0x380] sm:$0xff]
  %v1227 = vld [vmem:[#allocation2 + $0x388] sm:$0xff]
  %v1228 = vld [vmem:[#allocation2 + $0x390] sm:$0xff]
  %v1229 = vld [vmem:[#allocation2 + $0x398] sm:$0xff]
  %v1230 = vld [vmem:[#allocation2 + $0x3a0] sm:$0xff]
  %v1231 = vld [vmem:[#allocation2 + $0x3a8] sm:$0xff]
  %v1232 = vld [vmem:[#allocation2 + $0x3b0] sm:$0xff]
  %v1233 = vld [vmem:[#allocation2 + $0x3b8] sm:$0xff]
  %v1234 = vld [vmem:[#allocation2 + $0x3c0] sm:$0xff]
  %v1235 = vld [vmem:[#allocation2 + $0x3c8] sm:$0xff]
  %v1236 = vld [vmem:[#allocation2 + $0x3d0] sm:$0xff]
  %v1237 = vld [vmem:[#allocation2 + $0x3d8] sm:$0xff]
  %v1238 = vld [vmem:[#allocation2 + $0x3e0] sm:$0xff]
  %v1239 = vld [vmem:[#allocation2 + $0x3e8] sm:$0xff]
  %v1240 = vld [vmem:[#allocation2 + $0x3f0] sm:$0xff]
  %v1241 = vld [vmem:[#allocation2 + $0x3f8] sm:$0xff]
  %v1242 = vld [vmem:[#allocation2 + $0x400] sm:$0xff]
  %v1243 = vld [vmem:[#allocation2 + $0x408] sm:$0xff]
  %v1244 = vld [vmem:[#allocation2 + $0x410] sm:$0xff]
  %v1245 = vld [vmem:[#allocation2 + $0x418] sm:$0xff]
  %v1246 = vld [vmem:[#allocation2 + $0x420] sm:$0xff]
  %v1247 = vld [vmem:[#allocation2 + $0x428] sm:$0xff]
  %v1248 = vld [vmem:[#allocation2 + $0x430] sm:$0xff]
  %v1249 = vld [vmem:[#allocation2 + $0x438] sm:$0xff]
  %v1250 = vld [vmem:[#allocation2 + $0x440] sm:$0xff]
  %v1251 = vld [vmem:[#allocation2 + $0x448] sm:$0xff]
  %v1252 = vld [vmem:[#allocation2 + $0x450] sm:$0xff]
  %v1253 = vld [vmem:[#allocation2 + $0x458] sm:$0xff]
  %v1254 = vld [vmem:[#allocation2 + $0x460] sm:$0xff]
  %v1255 = vld [vmem:[#allocation2 + $0x468] sm:$0xff]
  %v1256 = vld [vmem:[#allocation2 + $0x470] sm:$0xff]
  %v1257 = vld [vmem:[#allocation2 + $0x478] sm:$0xff]
  %v1258 = vld [vmem:[#allocation2 + $0x480] sm:$0xff]
  %v1259 = vld [vmem:[#allocation2 + $0x488] sm:$0xff]
  %v1260 = vld [vmem:[#allocation2 + $0x490] sm:$0xff]
  %v1261 = vld [vmem:[#allocation2 + $0x498] sm:$0xff]
  %v1262 = vld [vmem:[#allocation2 + $0x4a0] sm:$0xff]
  %v1263 = vld [vmem:[#allocation2 + $0x4a8] sm:$0xff]
  %v1264 = vld [vmem:[#allocation2 + $0x4b0] sm:$0xff]
  %v1265 = vld [vmem:[#allocation2 + $0x4b8] sm:$0xff]
  %v1266 = vld [vmem:[#allocation2 + $0x4c0] sm:$0xff]
  %v1267 = vld [vmem:[#allocation2 + $0x4c8] sm:$0xff]
  %v1268 = vld [vmem:[#allocation2 + $0x4d0] sm:$0xff]
  %v1269 = vld [vmem:[#allocation2 + $0x4d8] sm:$0xff]
  %v1270 = vld [vmem:[#allocation2 + $0x4e0] sm:$0xff]
  %v1271 = vld [vmem:[#allocation2 + $0x4e8] sm:$0xff]
  %v1272 = vld [vmem:[#allocation2 + $0x4f0] sm:$0xff]
  %v1273 = vld [vmem:[#allocation2 + $0x4f8] sm:$0xff]
  %v1274 = vld [vmem:[#allocation2 + $0x500] sm:$0xff]
  %v1275 = vld [vmem:[#allocation2 + $0x508] sm:$0xff]
  %v1276 = vld [vmem:[#allocation2 + $0x510] sm:$0xff]
  %v1277 = vld [vmem:[#allocation2 + $0x518] sm:$0xff]
  %v1278 = vld [vmem:[#allocation2 + $0x520] sm:$0xff]
  %v1279 = vld [vmem:[#allocation2 + $0x528] sm:$0xff]
  %v1280 = vld [vmem:[#allocation2 + $0x530] sm:$0xff]
  %v1281 = vld [vmem:[#allocation2 + $0x538] sm:$0xff]
  %v1282 = vld [vmem:[#allocation2 + $0x540] sm:$0xff]
  %v1283 = vld [vmem:[#allocation2 + $0x548] sm:$0xff]
  %v1284 = vld [vmem:[#allocation2 + $0x550] sm:$0xff]
  %v1285 = vld [vmem:[#allocation2 + $0x558] sm:$0xff]
  %v1286 = vld [vmem:[#allocation2 + $0x560] sm:$0xff]
  %v1287 = vld [vmem:[#allocation2 + $0x568] sm:$0xff]
  %v1288 = vld [vmem:[#allocation2 + $0x570] sm:$0xff]
  %v1289 = vld [vmem:[#allocation2 + $0x578] sm:$0xff]
  %v1290 = vld [vmem:[#allocation2 + $0x580] sm:$0xff]
  %v1291 = vld [vmem:[#allocation2 + $0x588] sm:$0xff]
  %v1292 = vld [vmem:[#allocation2 + $0x590] sm:$0xff]
  %v1293 = vld [vmem:[#allocation2 + $0x598] sm:$0xff]
  %v1294 = vld [vmem:[#allocation2 + $0x5a0] sm:$0xff]
  %v1295 = vld [vmem:[#allocation2 + $0x5a8] sm:$0xff]
  %v1296 = vld [vmem:[#allocation2 + $0x5b0] sm:$0xff]
  %v1297 = vld [vmem:[#allocation2 + $0x5b8] sm:$0xff]
  %v1298 = vld [vmem:[#allocation2 + $0x5c0] sm:$0xff]
  %v1299 = vld [vmem:[#allocation2 + $0x5c8] sm:$0xff]
  %v1300 = vld [vmem:[#allocation2 + $0x5d0] sm:$0xff]
  %v1301 = vld [vmem:[#allocation2 + $0x5d8] sm:$0xff]
  %v1302 = vld [vmem:[#allocation2 + $0x5e0] sm:$0xff]
  %v1303 = vld [vmem:[#allocation2 + $0x5e8] sm:$0xff]
  %v1304 = vld [vmem:[#allocation2 + $0x5f0] sm:$0xff]
  %v1305 = vld [vmem:[#allocation2 + $0x5f8] sm:$0xff]
  %v1306 = vld [vmem:[#allocation2 + $0x600] sm:$0xff]
  %v1307 = vld [vmem:[#allocation2 + $0x608] sm:$0xff]
  %v1308 = vld [vmem:[#allocation2 + $0x610] sm:$0xff]
  %v1309 = vld [vmem:[#allocation2 + $0x618] sm:$0xff]
  %v1310 = vld [vmem:[#allocation2 + $0x620] sm:$0xff]
  %v1311 = vld [vmem:[#allocation2 + $0x628] sm:$0xff]
  %v1312 = vld [vmem:[#allocation2 + $0x630] sm:$0xff]
  %v1313 = vld [vmem:[#allocation2 + $0x638] sm:$0xff]
  %v1314 = vld [vmem:[#allocation2 + $0x640] sm:$0xff]
  %v1315 = vld [vmem:[#allocation2 + $0x648] sm:$0xff]
  %v1316 = vld [vmem:[#allocation2 + $0x650] sm:$0xff]
  %v1317 = vld [vmem:[#allocation2 + $0x658] sm:$0xff]
  %v1318 = vld [vmem:[#allocation2 + $0x660] sm:$0xff]
  %v1319 = vld [vmem:[#allocation2 + $0x668] sm:$0xff]
  %v1320 = vld [vmem:[#allocation2 + $0x670] sm:$0xff]
  %v1321 = vld [vmem:[#allocation2 + $0x678] sm:$0xff]
  %v1322 = vld [vmem:[#allocation2 + $0x680] sm:$0xff]
  %v1323 = vld [vmem:[#allocation2 + $0x688] sm:$0xff]
  %v1324 = vld [vmem:[#allocation2 + $0x690] sm:$0xff]
  %v1325 = vld [vmem:[#allocation2 + $0x698] sm:$0xff]
  %v1326 = vld [vmem:[#allocation2 + $0x6a0] sm:$0xff]
  %v1327 = vld [vmem:[#allocation2 + $0x6a8] sm:$0xff]
  %v1328 = vld [vmem:[#allocation2 + $0x6b0] sm:$0xff]
  %v1329 = vld [vmem:[#allocation2 + $0x6b8] sm:$0xff]
  %vm1330 = vcmask 719872
  %v1332 = vsel %vm1330, %v1113, 0
  %1334 = vmatprep.subr.mxu0 %v1115
  %1335 = vmatpush1.msra.mxu0 %v1114
  %1336 = vmatprep.subr.mxu0 %v1123
  %1337 = vmatpush1.msra.mxu0 %v1122
  %1338 = vmatprep.subr.mxu0 %v1131
  %1339 = vmatpush1.msra.mxu0 %v1130
  %1340 = vmatprep.subr.mxu0 %v1139
  %1341 = vmatpush1.msra.mxu0 %v1138
  %1342 = vmatprep.subr.mxu0 %v1147
  %1343 = vmatpush1.msra.mxu0 %v1146
  %1344 = vmatprep.subr.mxu0 %v1155
  %1345 = vmatpush1.msra.mxu0 %v1154
  %1346 = vmatprep.subr.mxu0 %v1163
  %1347 = vmatpush1.msra.mxu0 %v1162
  %1348 = vmatprep.subr.mxu0 %v1171
  %1349 = vmatpush1.msra.mxu0 %v1170
  %1350 = vmatprep.subr.mxu0 %v1179
  %1351 = vmatpush1.msra.mxu0 %v1178
  %1352 = vmatprep.subr.mxu0 %v1187
  %1353 = vmatpush1.msra.mxu0 %v1186
  %1354 = vmatprep.subr.mxu0 %v1195
  %1355 = vmatpush1.msra.mxu0 %v1194
  %1356 = vmatprep.subr.mxu0 %v1203
  %1357 = vmatpush1.msra.mxu0 %v1202
  %1358 = vmatprep.subr.mxu0 %v1211
  %1359 = vmatpush1.msra.mxu0 %v1210
  %1360 = vmatprep.subr.mxu0 %v1219
  %1361 = vmatpush1.msra.mxu0 %v1218
  %1362 = vmatprep.subr.mxu0 %v1227
  %1363 = vmatpush1.msra.mxu0 %v1226
  %1364 = vmatprep.subr.mxu0 %v1235
  %1365 = vmatpush1.msra.mxu0 %v1234
  %1366 = vmatprep.subr.mxu0 %v1243
  %1367 = vmatpush1.msra.mxu0 %v1242
  %1368 = vmatprep.subr.mxu0 %v1251
  %1369 = vmatpush1.msra.mxu0 %v1250
  %1370 = vmatprep.subr.mxu0 %v1259
  %1371 = vmatpush1.msra.mxu0 %v1258
  %1372 = vmatprep.subr.mxu0 %v1267
  %1373 = vmatpush1.msra.mxu0 %v1266
  %1374 = vmatprep.subr.mxu0 %v1275
  %1375 = vmatpush1.msra.mxu0 %v1274
  %1376 = vmatprep.subr.mxu0 %v1283
  %1377 = vmatpush1.msra.mxu0 %v1282
  %1378 = vmatprep.subr.mxu0 %v1291
  %1379 = vmatpush1.msra.mxu0 %v1290
  %1380 = vmatprep.subr.mxu0 %v1299
  %1381 = vmatpush1.msra.mxu0 %v1298
  %1382 = vmatprep.subr.mxu0 %v1307
  %1383 = vmatpush1.msra.mxu0 %v1306
  %1384 = vmatprep.subr.mxu0 %v1315
  %1385 = vmatpush1.msra.mxu0 %v1314
  %1386 = vmatprep.subr.mxu0 %v1323
  %1387 = vmatpush1.msra.mxu0 %v1322
  %1388 = vmatprep.subr.mxu0 0.0
  %1389 = vmatpush1.msra.mxu0 0.0
  %1390 = vmatprep.subr.mxu0 0.0
  %1391 = vmatpush1.msra.mxu0 0.0
  %1392 = vmatprep.subr.mxu0 0.0
  %1393 = vmatpush1.msra.mxu0 0.0
  %1394 = vmatprep.subr.mxu0 0.0
  %1395 = vmatpush1.msra.mxu0 0.0
  %1396 = vmatprep.subr.mxu0 0.0
  %1397 = vmatpush1.msra.mxu0 0.0
  %1398 = vmatprep.mubr.f32.mxu0 %v1332
  %1399 = vmatmul.mubr.f32.gmra.mrb[0].mxu0 %v1112
  %v1400 = vpop.f32.mrb[0].mxu0
  %v1401 = vadd.f32 0.0, %v1400
  %v1402 = vpop.f32.mrb[0].mxu0
  %v1403 = vadd.f32 0.0, %v1402
  %1404 = vdwg.mxu0
  %1405 = vmatprep.subr.mxu0 %v1117
  %1406 = vmatpush1.msra.mxu0 %v1116
  %1407 = vmatprep.subr.mxu0 %v1125
  %1408 = vmatpush1.msra.mxu0 %v1124
  %1409 = vmatprep.subr.mxu0 %v1133
  %1410 = vmatpush1.msra.mxu0 %v1132
  %1411 = vmatprep.subr.mxu0 %v1141
  %1412 = vmatpush1.msra.mxu0 %v1140
  %1413 = vmatprep.subr.mxu0 %v1149
  %1414 = vmatpush1.msra.mxu0 %v1148
  %1415 = vmatprep.subr.mxu0 %v1157
  %1416 = vmatpush1.msra.mxu0 %v1156
  %1417 = vmatprep.subr.mxu0 %v1165
  %1418 = vmatpush1.msra.mxu0 %v1164
  %1419 = vmatprep.subr.mxu0 %v1173
  %1420 = vmatpush1.msra.mxu0 %v1172
  %1421 = vmatprep.subr.mxu0 %v1181
  %1422 = vmatpush1.msra.mxu0 %v1180
  %1423 = vmatprep.subr.mxu0 %v1189
  %1424 = vmatpush1.msra.mxu0 %v1188
  %1425 = vmatprep.subr.mxu0 %v1197
  %1426 = vmatpush1.msra.mxu0 %v1196
  %1427 = vmatprep.subr.mxu0 %v1205
  %1428 = vmatpush1.msra.mxu0 %v1204
  %1429 = vmatprep.subr.mxu0 %v1213
  %1430 = vmatpush1.msra.mxu0 %v1212
  %1431 = vmatprep.subr.mxu0 %v1221
  %1432 = vmatpush1.msra.mxu0 %v1220
  %1433 = vmatprep.subr.mxu0 %v1229
  %1434 = vmatpush1.msra.mxu0 %v1228
  %1435 = vmatprep.subr.mxu0 %v1237
  %1436 = vmatpush1.msra.mxu0 %v1236
  %1437 = vmatprep.subr.mxu0 %v1245
  %1438 = vmatpush1.msra.mxu0 %v1244
  %1439 = vmatprep.subr.mxu0 %v1253
  %1440 = vmatpush1.msra.mxu0 %v1252
  %1441 = vmatprep.subr.mxu0 %v1261
  %1442 = vmatpush1.msra.mxu0 %v1260
  %1443 = vmatprep.subr.mxu0 %v1269
  %1444 = vmatpush1.msra.mxu0 %v1268
  %1445 = vmatprep.subr.mxu0 %v1277
  %1446 = vmatpush1.msra.mxu0 %v1276
  %1447 = vmatprep.subr.mxu0 %v1285
  %1448 = vmatpush1.msra.mxu0 %v1284
  %1449 = vmatprep.subr.mxu0 %v1293
  %1450 = vmatpush1.msra.mxu0 %v1292
  %1451 = vmatprep.subr.mxu0 %v1301
  %1452 = vmatpush1.msra.mxu0 %v1300
  %1453 = vmatprep.subr.mxu0 %v1309
  %1454 = vmatpush1.msra.mxu0 %v1308
  %1455 = vmatprep.subr.mxu0 %v1317
  %1456 = vmatpush1.msra.mxu0 %v1316
  %1457 = vmatprep.subr.mxu0 %v1325
  %1458 = vmatpush1.msra.mxu0 %v1324
  %1459 = vmatprep.subr.mxu0 0.0
  %1460 = vmatpush1.msra.mxu0 0.0
  %1461 = vmatprep.subr.mxu0 0.0
  %1462 = vmatpush1.msra.mxu0 0.0
  %1463 = vmatprep.subr.mxu0 0.0
  %1464 = vmatpush1.msra.mxu0 0.0
  %1465 = vmatprep.subr.mxu0 0.0
  %1466 = vmatpush1.msra.mxu0 0.0
  %1467 = vmatprep.subr.mxu0 0.0
  %1468 = vmatpush1.msra.mxu0 0.0
  %1469 = vmatprep.mubr.f32.mxu0 %v1332
  %1470 = vmatmul.mubr.f32.gmra.mrb[0].mxu0 %v1112
  %v1471 = vpop.f32.mrb[0].mxu0
  %v1472 = vadd.f32 0.0, %v1471
  %v1473 = vpop.f32.mrb[0].mxu0
  %v1474 = vadd.f32 0.0, %v1473
  %1475 = vdwg.mxu0
  %1476 = vmatprep.subr.mxu0 %v1119
  %1477 = vmatpush1.msra.mxu0 %v1118
  %1478 = vmatprep.subr.mxu0 %v1127
  %1479 = vmatpush1.msra.mxu0 %v1126
  %1480 = vmatprep.subr.mxu0 %v1135
  %1481 = vmatpush1.msra.mxu0 %v1134
  %1482 = vmatprep.subr.mxu0 %v1143
  %1483 = vmatpush1.msra.mxu0 %v1142
  %1484 = vmatprep.subr.mxu0 %v1151
  %1485 = vmatpush1.msra.mxu0 %v1150
  %1486 = vmatprep.subr.mxu0 %v1159
  %1487 = vmatpush1.msra.mxu0 %v1158
  %1488 = vmatprep.subr.mxu0 %v1167
  %1489 = vmatpush1.msra.mxu0 %v1166
  %1490 = vmatprep.subr.mxu0 %v1175
  %1491 = vmatpush1.msra.mxu0 %v1174
  %1492 = vmatprep.subr.mxu0 %v1183
  %1493 = vmatpush1.msra.mxu0 %v1182
  %1494 = vmatprep.subr.mxu0 %v1191
  %1495 = vmatpush1.msra.mxu0 %v1190
  %1496 = vmatprep.subr.mxu0 %v1199
  %1497 = vmatpush1.msra.mxu0 %v1198
  %1498 = vmatprep.subr.mxu0 %v1207
  %1499 = vmatpush1.msra.mxu0 %v1206
  %1500 = vmatprep.subr.mxu0 %v1215
  %1501 = vmatpush1.msra.mxu0 %v1214
  %1502 = vmatprep.subr.mxu0 %v1223
  %1503 = vmatpush1.msra.mxu0 %v1222
  %1504 = vmatprep.subr.mxu0 %v1231
  %1505 = vmatpush1.msra.mxu0 %v1230
  %1506 = vmatprep.subr.mxu0 %v1239
  %1507 = vmatpush1.msra.mxu0 %v1238
  %1508 = vmatprep.subr.mxu0 %v1247
  %1509 = vmatpush1.msra.mxu0 %v1246
  %1510 = vmatprep.subr.mxu0 %v1255
  %1511 = vmatpush1.msra.mxu0 %v1254
  %1512 = vmatprep.subr.mxu0 %v1263
  %1513 = vmatpush1.msra.mxu0 %v1262
  %1514 = vmatprep.subr.mxu0 %v1271
  %1515 = vmatpush1.msra.mxu0 %v1270
  %1516 = vmatprep.subr.mxu0 %v1279
  %1517 = vmatpush1.msra.mxu0 %v1278
  %1518 = vmatprep.subr.mxu0 %v1287
  %1519 = vmatpush1.msra.mxu0 %v1286
  %1520 = vmatprep.subr.mxu0 %v1295
  %1521 = vmatpush1.msra.mxu0 %v1294
  %1522 = vmatprep.subr.mxu0 %v1303
  %1523 = vmatpush1.msra.mxu0 %v1302
  %1524 = vmatprep.subr.mxu0 %v1311
  %1525 = vmatpush1.msra.mxu0 %v1310
  %1526 = vmatprep.subr.mxu0 %v1319
  %1527 = vmatpush1.msra.mxu0 %v1318
  %1528 = vmatprep.subr.mxu0 %v1327
  %1529 = vmatpush1.msra.mxu0 %v1326
  %1530 = vmatprep.subr.mxu0 0.0
  %1531 = vmatpush1.msra.mxu0 0.0
  %1532 = vmatprep.subr.mxu0 0.0
  %1533 = vmatpush1.msra.mxu0 0.0
  %1534 = vmatprep.subr.mxu0 0.0
  %1535 = vmatpush1.msra.mxu0 0.0
  %1536 = vmatprep.subr.mxu0 0.0
  %1537 = vmatpush1.msra.mxu0 0.0
  %1538 = vmatprep.subr.mxu0 0.0
  %1539 = vmatpush1.msra.mxu0 0.0
  %1540 = vmatprep.mubr.f32.mxu0 %v1332
  %1541 = vmatmul.mubr.f32.gmra.mrb[0].mxu0 %v1112
  %v1542 = vpop.f32.mrb[0].mxu0
  %v1543 = vadd.f32 0.0, %v1542
  %v1544 = vpop.f32.mrb[0].mxu0
  %v1545 = vadd.f32 0.0, %v1544
  %1546 = vdwg.mxu0
  %1547 = vmatprep.subr.mxu0 %v1121
  %1548 = vmatpush1.msra.mxu0 %v1120
  %1549 = vmatprep.subr.mxu0 %v1129
  %1550 = vmatpush1.msra.mxu0 %v1128
  %1551 = vmatprep.subr.mxu0 %v1137
  %1552 = vmatpush1.msra.mxu0 %v1136
  %1553 = vmatprep.subr.mxu0 %v1145
  %1554 = vmatpush1.msra.mxu0 %v1144
  %1555 = vmatprep.subr.mxu0 %v1153
  %1556 = vmatpush1.msra.mxu0 %v1152
  %1557 = vmatprep.subr.mxu0 %v1161
  %1558 = vmatpush1.msra.mxu0 %v1160
  %1559 = vmatprep.subr.mxu0 %v1169
  %1560 = vmatpush1.msra.mxu0 %v1168
  %1561 = vmatprep.subr.mxu0 %v1177
  %1562 = vmatpush1.msra.mxu0 %v1176
  %1563 = vmatprep.subr.mxu0 %v1185
  %1564 = vmatpush1.msra.mxu0 %v1184
  %1565 = vmatprep.subr.mxu0 %v1193
  %1566 = vmatpush1.msra.mxu0 %v1192
  %1567 = vmatprep.subr.mxu0 %v1201
  %1568 = vmatpush1.msra.mxu0 %v1200
  %1569 = vmatprep.subr.mxu0 %v1209
  %1570 = vmatpush1.msra.mxu0 %v1208
  %1571 = vmatprep.subr.mxu0 %v1217
  %1572 = vmatpush1.msra.mxu0 %v1216
  %1573 = vmatprep.subr.mxu0 %v1225
  %1574 = vmatpush1.msra.mxu0 %v1224
  %1575 = vmatprep.subr.mxu0 %v1233
  %1576 = vmatpush1.msra.mxu0 %v1232
  %1577 = vmatprep.subr.mxu0 %v1241
  %1578 = vmatpush1.msra.mxu0 %v1240
  %1579 = vmatprep.subr.mxu0 %v1249
  %1580 = vmatpush1.msra.mxu0 %v1248
  %1581 = vmatprep.subr.mxu0 %v1257
  %1582 = vmatpush1.msra.mxu0 %v1256
  %1583 = vmatprep.subr.mxu0 %v1265
  %1584 = vmatpush1.msra.mxu0 %v1264
  %1585 = vmatprep.subr.mxu0 %v1273
  %1586 = vmatpush1.msra.mxu0 %v1272
  %1587 = vmatprep.subr.mxu0 %v1281
  %1588 = vmatpush1.msra.mxu0 %v1280
  %1589 = vmatprep.subr.mxu0 %v1289
  %1590 = vmatpush1.msra.mxu0 %v1288
  %1591 = vmatprep.subr.mxu0 %v1297
  %1592 = vmatpush1.msra.mxu0 %v1296
  %1593 = vmatprep.subr.mxu0 %v1305
  %1594 = vmatpush1.msra.mxu0 %v1304
  %1595 = vmatprep.subr.mxu0 %v1313
  %1596 = vmatpush1.msra.mxu0 %v1312
  %1597 = vmatprep.subr.mxu0 %v1321
  %1598 = vmatpush1.msra.mxu0 %v1320
  %1599 = vmatprep.subr.mxu0 %v1329
  %1600 = vmatpush1.msra.mxu0 %v1328
  %1601 = vmatprep.subr.mxu0 0.0
  %1602 = vmatpush1.msra.mxu0 0.0
  %1603 = vmatprep.subr.mxu0 0.0
  %1604 = vmatpush1.msra.mxu0 0.0
  %1605 = vmatprep.subr.mxu0 0.0
  %1606 = vmatpush1.msra.mxu0 0.0
  %1607 = vmatprep.subr.mxu0 0.0
  %1608 = vmatpush1.msra.mxu0 0.0
  %1609 = vmatprep.subr.mxu0 0.0
  %1610 = vmatpush1.msra.mxu0 0.0
  %1611 = vmatprep.mubr.f32.mxu0 %v1332
  %1612 = vmatmul.mubr.f32.gmra.mrb[0].mxu0 %v1112
  %v1613 = vpop.f32.mrb[0].mxu0
  %v1614 = vadd.f32 0.0, %v1613
  %v1615 = vpop.f32.mrb[0].mxu0
  %v1616 = vadd.f32 0.0, %v1615
  %1617 = vdwg.mxu0
  %v1618 = vadd.f32 %v1401, %v1403
  %v1619 = vadd.f32 %v1618, %v1472
  %v1620 = vadd.f32 %v1619, %v1474
  %v1621 = vadd.f32 %v1620, %v1543
  %v1622 = vadd.f32 %v1621, %v1545
  %v1623 = vadd.f32 %v1622, %v1614
  %v1624 = vadd.f32 %v1623, %v1616
  %1625 = vadd.xlane.f32.xlu0 %v1624
  %v1626 = vpop.xlane.xlu0 %1625
  %v1627 = vmul.f32 %v1626, 0.0009765625
  %v1628 = vsub.f32 %v1401, %v1627
  %v1629 = vsub.f32 %v1403, %v1627
  %v1630 = vsub.f32 %v1472, %v1627
  %v1631 = vsub.f32 %v1474, %v1627
  %v1632 = vsub.f32 %v1543, %v1627
  %v1633 = vsub.f32 %v1545, %v1627
  %v1634 = vsub.f32 %v1614, %v1627
  %v1635 = vsub.f32 %v1616, %v1627
  %v1636 = vmul.f32 %v1628, %v1628
  %v1637 = vmul.f32 %v1629, %v1629
  %v1638 = vmul.f32 %v1630, %v1630
  %v1639 = vmul.f32 %v1631, %v1631
  %v1640 = vmul.f32 %v1632, %v1632
  %v1641 = vmul.f32 %v1633, %v1633
  %v1642 = vmul.f32 %v1634, %v1634
  %v1643 = vmul.f32 %v1635, %v1635
  %v1644 = vadd.f32 %v1636, %v1637
  %v1645 = vadd.f32 %v1644, %v1638
  %v1646 = vadd.f32 %v1645, %v1639
  %v1647 = vadd.f32 %v1646, %v1640
  %v1648 = vadd.f32 %v1647, %v1641
  %v1649 = vadd.f32 %v1648, %v1642
  %v1650 = vadd.f32 %v1649, %v1643
  %1651 = vadd.xlane.f32.xlu0 %v1650
  %v1652 = vpop.xlane.xlu0 %1651
  %v1653 = vmul.f32 %v1652, 0.0009765625
  %v1654 = vld [vmem:[%s4] sm:$0xff]
  %v1655 = vadd.f32 %v1653, 1e-05
  %v1656 = vrsqrt.pop %v1655
  %v1657 = vmul.f32 %v1654, %v1656
  %1659 = vset.pattern.permute.xlu0 0
  %1660 = vperm.xlu0 %1659, %v1657
  %v1661 = vpop.permute.xlu0 %1660
  %v1663 = vmul.f32 %v1628, %v1661
  %v1664 = vmul.f32 %v1629, %v1661
  %v1665 = vmul.f32 %v1630, %v1661
  %v1666 = vmul.f32 %v1631, %v1661
  %v1667 = vmul.f32 %v1632, %v1661
  %v1668 = vmul.f32 %v1633, %v1661
  %v1669 = vmul.f32 %v1634, %v1661
  %v1670 = vmul.f32 %v1635, %v1661
  %v1671 = vld [vmem:[%s5] sm:$0xff]
  %1673 = vset.pattern.permute.xlu0 0
  %1674 = vperm.xlu0 %1673, %v1671
  %v1675 = vpop.permute.xlu0 %1674
  %v1677 = vadd.f32 %v1663, %v1675
  %v1678 = vadd.f32 %v1664, %v1675
  %v1679 = vadd.f32 %v1665, %v1675
  %v1680 = vadd.f32 %v1666, %v1675
  %v1681 = vadd.f32 %v1667, %v1675
  %v1682 = vadd.f32 %v1668, %v1675
  %v1683 = vadd.f32 %v1669, %v1675
  %v1684 = vadd.f32 %v1670, %v1675
  %v1685 = vmax.f32 %v1677, 0.0
  %v1686 = vmax.f32 %v1678, 0.0
  %v1687 = vmax.f32 %v1679, 0.0
  %v1688 = vmax.f32 %v1680, 0.0
  %v1689 = vmax.f32 %v1681, 0.0
  %v1690 = vmax.f32 %v1682, 0.0
  %v1691 = vmax.f32 %v1683, 0.0
  %v1692 = vmax.f32 %v1684, 0.0
  %1693 = vrot.lane.b32.xlu0 %v1685, 73
  %v1694 = vpop.permute.xlu0 %1693
  %1695 = vrot.lane.b32.xlu0 %v1686, 73
  %v1696 = vpop.permute.xlu0 %1695
  %1697 = vrot.lane.b32.xlu0 %v1687, 73
  %v1698 = vpop.permute.xlu0 %1697
  %1699 = vrot.lane.b32.xlu0 %v1688, 73
  %v1700 = vpop.permute.xlu0 %1699
  %1701 = vrot.lane.b32.xlu0 %v1689, 73
  %v1702 = vpop.permute.xlu0 %1701
  %1703 = vrot.lane.b32.xlu0 %v1690, 73
  %v1704 = vpop.permute.xlu0 %1703
  %1705 = vrot.lane.b32.xlu0 %v1691, 73
  %v1706 = vpop.permute.xlu0 %1705
  %1707 = vrot.lane.b32.xlu0 %v1692, 73
  %v1708 = vpop.permute.xlu0 %1707
  %v1709 = vsel %vm55, %v1706, %v1708
  %v1710 = vsel %vm55, %v1704, %v1706
  %v1711 = vsel %vm55, %v1702, %v1704
  %v1712 = vsel %vm55, %v1700, %v1702
  %v1713 = vsel %vm55, %v1698, %v1700
  %v1714 = vsel %vm55, %v1696, %v1698
  %v1715 = vsel %vm55, %v1694, %v1696
  %v1716 = vsel %vm55, %v1708, %v1694
  %v1717 = vld [vmem:[%s3] sm:$0xff]
  %v1718 = vld [vmem:[%s3 + $0x8] sm:$0xff]
  %v1719 = vld [vmem:[%s3 + $0x10] sm:$0xff]
  %v1720 = vld [vmem:[%s3 + $0x18] sm:$0xff]
  %v1721 = vld [vmem:[%s3 + $0x20] sm:$0xff]
  %v1722 = vld [vmem:[%s3 + $0x28] sm:$0xff]
  %v1723 = vld [vmem:[%s3 + $0x30] sm:$0xff]
  %v1724 = vld [vmem:[%s3 + $0x38] sm:$0xff]
  %v1725 = vmul.f32 %v1716, %v1717
  %v1726 = vmul.f32 %v1715, %v1718
  %v1727 = vmul.f32 %v1714, %v1719
  %v1728 = vmul.f32 %v1713, %v1720
  %v1729 = vmul.f32 %v1712, %v1721
  %v1730 = vmul.f32 %v1711, %v1722
  %v1731 = vmul.f32 %v1710, %v1723
  %v1732 = vmul.f32 %v1709, %v1724
  %1733 = vst [vmem:[#allocation2] sm:$0xff] %v1725
  %1734 = vst [vmem:[#allocation2 + $0x8] sm:$0xff] %v1726
  %1735 = vst [vmem:[#allocation2 + $0x10] sm:$0xff] %v1727
  %1736 = vst [vmem:[#allocation2 + $0x18] sm:$0xff] %v1728
  %1737 = vst [vmem:[#allocation2 + $0x20] sm:$0xff] %v1729
  %1738 = vst [vmem:[#allocation2 + $0x28] sm:$0xff] %v1730
  %1739 = vst [vmem:[#allocation2 + $0x30] sm:$0xff] %v1731
  %1740 = vst [vmem:[#allocation2 + $0x38] sm:$0xff] %v1732
  %1741 = vrot.lane.b32.xlu0 %v1685, 72
  %v1742 = vpop.permute.xlu0 %1741
  %1743 = vrot.lane.b32.xlu0 %v1686, 72
  %v1744 = vpop.permute.xlu0 %1743
  %1745 = vrot.lane.b32.xlu0 %v1687, 72
  %v1746 = vpop.permute.xlu0 %1745
  %1747 = vrot.lane.b32.xlu0 %v1688, 72
  %v1748 = vpop.permute.xlu0 %1747
  %1749 = vrot.lane.b32.xlu0 %v1689, 72
  %v1750 = vpop.permute.xlu0 %1749
  %1751 = vrot.lane.b32.xlu0 %v1690, 72
  %v1752 = vpop.permute.xlu0 %1751
  %1753 = vrot.lane.b32.xlu0 %v1691, 72
  %v1754 = vpop.permute.xlu0 %1753
  %1755 = vrot.lane.b32.xlu0 %v1692, 72
  %v1756 = vpop.permute.xlu0 %1755
  %v1757 = vsel %vm104, %v1754, %v1756
  %v1758 = vsel %vm104, %v1752, %v1754
  %v1759 = vsel %vm104, %v1750, %v1752
  %v1760 = vsel %vm104, %v1748, %v1750
  %v1761 = vsel %vm104, %v1746, %v1748
  %v1762 = vsel %vm104, %v1744, %v1746
  %v1763 = vsel %vm104, %v1742, %v1744
  %v1764 = vsel %vm104, %v1756, %v1742
  %v1765 = vld [vmem:[%s3 + $0x40] sm:$0xff]
  %v1766 = vld [vmem:[%s3 + $0x48] sm:$0xff]
  %v1767 = vld [vmem:[%s3 + $0x50] sm:$0xff]
  %v1768 = vld [vmem:[%s3 + $0x58] sm:$0xff]
  %v1769 = vld [vmem:[%s3 + $0x60] sm:$0xff]
  %v1770 = vld [vmem:[%s3 + $0x68] sm:$0xff]
  %v1771 = vld [vmem:[%s3 + $0x70] sm:$0xff]
  %v1772 = vld [vmem:[%s3 + $0x78] sm:$0xff]
  %v1773 = vmul.f32 %v1764, %v1765
  %v1774 = vmul.f32 %v1763, %v1766
  %v1775 = vmul.f32 %v1762, %v1767
  %v1776 = vmul.f32 %v1761, %v1768
  %v1777 = vmul.f32 %v1760, %v1769
  %v1778 = vmul.f32 %v1759, %v1770
  %v1779 = vmul.f32 %v1758, %v1771
  %v1780 = vmul.f32 %v1757, %v1772
  %1781 = vst [vmem:[#allocation2 + $0x40] sm:$0xff] %v1773
  %1782 = vst [vmem:[#allocation2 + $0x48] sm:$0xff] %v1774
  %1783 = vst [vmem:[#allocation2 + $0x50] sm:$0xff] %v1775
  %1784 = vst [vmem:[#allocation2 + $0x58] sm:$0xff] %v1776
  %1785 = vst [vmem:[#allocation2 + $0x60] sm:$0xff] %v1777
  %1786 = vst [vmem:[#allocation2 + $0x68] sm:$0xff] %v1778
  %1787 = vst [vmem:[#allocation2 + $0x70] sm:$0xff] %v1779
  %1788 = vst [vmem:[#allocation2 + $0x78] sm:$0xff] %v1780
  %1789 = vrot.lane.b32.xlu0 %v1685, 71
  %v1790 = vpop.permute.xlu0 %1789
  %1791 = vrot.lane.b32.xlu0 %v1686, 71
  %v1792 = vpop.permute.xlu0 %1791
  %1793 = vrot.lane.b32.xlu0 %v1687, 71
  %v1794 = vpop.permute.xlu0 %1793
  %1795 = vrot.lane.b32.xlu0 %v1688, 71
  %v1796 = vpop.permute.xlu0 %1795
  %1797 = vrot.lane.b32.xlu0 %v1689, 71
  %v1798 = vpop.permute.xlu0 %1797
  %1799 = vrot.lane.b32.xlu0 %v1690, 71
  %v1800 = vpop.permute.xlu0 %1799
  %1801 = vrot.lane.b32.xlu0 %v1691, 71
  %v1802 = vpop.permute.xlu0 %1801
  %1803 = vrot.lane.b32.xlu0 %v1692, 71
  %v1804 = vpop.permute.xlu0 %1803
  %v1805 = vsel %vm153, %v1802, %v1804
  %v1806 = vsel %vm153, %v1800, %v1802
  %v1807 = vsel %vm153, %v1798, %v1800
  %v1808 = vsel %vm153, %v1796, %v1798
  %v1809 = vsel %vm153, %v1794, %v1796
  %v1810 = vsel %vm153, %v1792, %v1794
  %v1811 = vsel %vm153, %v1790, %v1792
  %v1812 = vsel %vm153, %v1804, %v1790
  %v1813 = vld [vmem:[%s3 + $0x80] sm:$0xff]
  %v1814 = vld [vmem:[%s3 + $0x88] sm:$0xff]
  %v1815 = vld [vmem:[%s3 + $0x90] sm:$0xff]
  %v1816 = vld [vmem:[%s3 + $0x98] sm:$0xff]
  %v1817 = vld [vmem:[%s3 + $0xa0] sm:$0xff]
  %v1818 = vld [vmem:[%s3 + $0xa8] sm:$0xff]
  %v1819 = vld [vmem:[%s3 + $0xb0] sm:$0xff]
  %v1820 = vld [vmem:[%s3 + $0xb8] sm:$0xff]
  %v1821 = vmul.f32 %v1812, %v1813
  %v1822 = vmul.f32 %v1811, %v1814
  %v1823 = vmul.f32 %v1810, %v1815
  %v1824 = vmul.f32 %v1809, %v1816
  %v1825 = vmul.f32 %v1808, %v1817
  %v1826 = vmul.f32 %v1807, %v1818
  %v1827 = vmul.f32 %v1806, %v1819
  %v1828 = vmul.f32 %v1805, %v1820
  %1829 = vst [vmem:[#allocation2 + $0x80] sm:$0xff] %v1821
  %1830 = vst [vmem:[#allocation2 + $0x88] sm:$0xff] %v1822
  %1831 = vst [vmem:[#allocation2 + $0x90] sm:$0xff] %v1823
  %1832 = vst [vmem:[#allocation2 + $0x98] sm:$0xff] %v1824
  %1833 = vst [vmem:[#allocation2 + $0xa0] sm:$0xff] %v1825
  %1834 = vst [vmem:[#allocation2 + $0xa8] sm:$0xff] %v1826
  %1835 = vst [vmem:[#allocation2 + $0xb0] sm:$0xff] %v1827
  %1836 = vst [vmem:[#allocation2 + $0xb8] sm:$0xff] %v1828
  %1837 = vrot.lane.b32.xlu0 %v1685, 65
  %v1838 = vpop.permute.xlu0 %1837
  %1839 = vrot.lane.b32.xlu0 %v1686, 65
  %v1840 = vpop.permute.xlu0 %1839
  %1841 = vrot.lane.b32.xlu0 %v1687, 65
  %v1842 = vpop.permute.xlu0 %1841
  %1843 = vrot.lane.b32.xlu0 %v1688, 65
  %v1844 = vpop.permute.xlu0 %1843
  %1845 = vrot.lane.b32.xlu0 %v1689, 65
  %v1846 = vpop.permute.xlu0 %1845
  %1847 = vrot.lane.b32.xlu0 %v1690, 65
  %v1848 = vpop.permute.xlu0 %1847
  %1849 = vrot.lane.b32.xlu0 %v1691, 65
  %v1850 = vpop.permute.xlu0 %1849
  %1851 = vrot.lane.b32.xlu0 %v1692, 65
  %v1852 = vpop.permute.xlu0 %1851
  %v1853 = vsel %vm202, %v1850, %v1852
  %v1854 = vsel %vm202, %v1848, %v1850
  %v1855 = vsel %vm202, %v1846, %v1848
  %v1856 = vsel %vm202, %v1844, %v1846
  %v1857 = vsel %vm202, %v1842, %v1844
  %v1858 = vsel %vm202, %v1840, %v1842
  %v1859 = vsel %vm202, %v1838, %v1840
  %v1860 = vsel %vm202, %v1852, %v1838
  %v1861 = vld [vmem:[%s3 + $0xc0] sm:$0xff]
  %v1862 = vld [vmem:[%s3 + $0xc8] sm:$0xff]
  %v1863 = vld [vmem:[%s3 + $0xd0] sm:$0xff]
  %v1864 = vld [vmem:[%s3 + $0xd8] sm:$0xff]
  %v1865 = vld [vmem:[%s3 + $0xe0] sm:$0xff]
  %v1866 = vld [vmem:[%s3 + $0xe8] sm:$0xff]
  %v1867 = vld [vmem:[%s3 + $0xf0] sm:$0xff]
  %v1868 = vld [vmem:[%s3 + $0xf8] sm:$0xff]
  %v1869 = vmul.f32 %v1860, %v1861
  %v1870 = vmul.f32 %v1859, %v1862
  %v1871 = vmul.f32 %v1858, %v1863
  %v1872 = vmul.f32 %v1857, %v1864
  %v1873 = vmul.f32 %v1856, %v1865
  %v1874 = vmul.f32 %v1855, %v1866
  %v1875 = vmul.f32 %v1854, %v1867
  %v1876 = vmul.f32 %v1853, %v1868
  %1877 = vst [vmem:[#allocation2 + $0xc0] sm:$0xff] %v1869
  %1878 = vst [vmem:[#allocation2 + $0xc8] sm:$0xff] %v1870
  %1879 = vst [vmem:[#allocation2 + $0xd0] sm:$0xff] %v1871
  %1880 = vst [vmem:[#allocation2 + $0xd8] sm:$0xff] %v1872
  %1881 = vst [vmem:[#allocation2 + $0xe0] sm:$0xff] %v1873
  %1882 = vst [vmem:[#allocation2 + $0xe8] sm:$0xff] %v1874
  %1883 = vst [vmem:[#allocation2 + $0xf0] sm:$0xff] %v1875
  %1884 = vst [vmem:[#allocation2 + $0xf8] sm:$0xff] %v1876
  %1885 = vrot.lane.b32.xlu0 %v1685, 64
  %v1886 = vpop.permute.xlu0 %1885
  %1887 = vrot.lane.b32.xlu0 %v1686, 64
  %v1888 = vpop.permute.xlu0 %1887
  %1889 = vrot.lane.b32.xlu0 %v1687, 64
  %v1890 = vpop.permute.xlu0 %1889
  %1891 = vrot.lane.b32.xlu0 %v1688, 64
  %v1892 = vpop.permute.xlu0 %1891
  %1893 = vrot.lane.b32.xlu0 %v1689, 64
  %v1894 = vpop.permute.xlu0 %1893
  %1895 = vrot.lane.b32.xlu0 %v1690, 64
  %v1896 = vpop.permute.xlu0 %1895
  %1897 = vrot.lane.b32.xlu0 %v1691, 64
  %v1898 = vpop.permute.xlu0 %1897
  %1899 = vrot.lane.b32.xlu0 %v1692, 64
  %v1900 = vpop.permute.xlu0 %1899
  %v1901 = vsel %vm251, %v1898, %v1900
  %v1902 = vsel %vm251, %v1896, %v1898
  %v1903 = vsel %vm251, %v1894, %v1896
  %v1904 = vsel %vm251, %v1892, %v1894
  %v1905 = vsel %vm251, %v1890, %v1892
  %v1906 = vsel %vm251, %v1888, %v1890
  %v1907 = vsel %vm251, %v1886, %v1888
  %v1908 = vsel %vm251, %v1900, %v1886
  %v1909 = vld [vmem:[%s3 + $0x100] sm:$0xff]
  %v1910 = vld [vmem:[%s3 + $0x108] sm:$0xff]
  %v1911 = vld [vmem:[%s3 + $0x110] sm:$0xff]
  %v1912 = vld [vmem:[%s3 + $0x118] sm:$0xff]
  %v1913 = vld [vmem:[%s3 + $0x120] sm:$0xff]
  %v1914 = vld [vmem:[%s3 + $0x128] sm:$0xff]
  %v1915 = vld [vmem:[%s3 + $0x130] sm:$0xff]
  %v1916 = vld [vmem:[%s3 + $0x138] sm:$0xff]
  %v1917 = vmul.f32 %v1908, %v1909
  %v1918 = vmul.f32 %v1907, %v1910
  %v1919 = vmul.f32 %v1906, %v1911
  %v1920 = vmul.f32 %v1905, %v1912
  %v1921 = vmul.f32 %v1904, %v1913
  %v1922 = vmul.f32 %v1903, %v1914
  %v1923 = vmul.f32 %v1902, %v1915
  %v1924 = vmul.f32 %v1901, %v1916
  %1925 = vst [vmem:[#allocation2 + $0x100] sm:$0xff] %v1917
  %1926 = vst [vmem:[#allocation2 + $0x108] sm:$0xff] %v1918
  %1927 = vst [vmem:[#allocation2 + $0x110] sm:$0xff] %v1919
  %1928 = vst [vmem:[#allocation2 + $0x118] sm:$0xff] %v1920
  %1929 = vst [vmem:[#allocation2 + $0x120] sm:$0xff] %v1921
  %1930 = vst [vmem:[#allocation2 + $0x128] sm:$0xff] %v1922
  %1931 = vst [vmem:[#allocation2 + $0x130] sm:$0xff] %v1923
  %1932 = vst [vmem:[#allocation2 + $0x138] sm:$0xff] %v1924
  %1933 = vrot.lane.b32.xlu0 %v1685, 63
  %v1934 = vpop.permute.xlu0 %1933
  %1935 = vrot.lane.b32.xlu0 %v1686, 63
  %v1936 = vpop.permute.xlu0 %1935
  %1937 = vrot.lane.b32.xlu0 %v1687, 63
  %v1938 = vpop.permute.xlu0 %1937
  %1939 = vrot.lane.b32.xlu0 %v1688, 63
  %v1940 = vpop.permute.xlu0 %1939
  %1941 = vrot.lane.b32.xlu0 %v1689, 63
  %v1942 = vpop.permute.xlu0 %1941
  %1943 = vrot.lane.b32.xlu0 %v1690, 63
  %v1944 = vpop.permute.xlu0 %1943
  %1945 = vrot.lane.b32.xlu0 %v1691, 63
  %v1946 = vpop.permute.xlu0 %1945
  %1947 = vrot.lane.b32.xlu0 %v1692, 63
  %v1948 = vpop.permute.xlu0 %1947
  %v1949 = vsel %vm300, %v1946, %v1948
  %v1950 = vsel %vm300, %v1944, %v1946
  %v1951 = vsel %vm300, %v1942, %v1944
  %v1952 = vsel %vm300, %v1940, %v1942
  %v1953 = vsel %vm300, %v1938, %v1940
  %v1954 = vsel %vm300, %v1936, %v1938
  %v1955 = vsel %vm300, %v1934, %v1936
  %v1956 = vsel %vm300, %v1948, %v1934
  %v1957 = vld [vmem:[%s3 + $0x140] sm:$0xff]
  %v1958 = vld [vmem:[%s3 + $0x148] sm:$0xff]
  %v1959 = vld [vmem:[%s3 + $0x150] sm:$0xff]
  %v1960 = vld [vmem:[%s3 + $0x158] sm:$0xff]
  %v1961 = vld [vmem:[%s3 + $0x160] sm:$0xff]
  %v1962 = vld [vmem:[%s3 + $0x168] sm:$0xff]
  %v1963 = vld [vmem:[%s3 + $0x170] sm:$0xff]
  %v1964 = vld [vmem:[%s3 + $0x178] sm:$0xff]
  %v1965 = vmul.f32 %v1956, %v1957
  %v1966 = vmul.f32 %v1955, %v1958
  %v1967 = vmul.f32 %v1954, %v1959
  %v1968 = vmul.f32 %v1953, %v1960
  %v1969 = vmul.f32 %v1952, %v1961
  %v1970 = vmul.f32 %v1951, %v1962
  %v1971 = vmul.f32 %v1950, %v1963
  %v1972 = vmul.f32 %v1949, %v1964
  %1973 = vst [vmem:[#allocation2 + $0x140] sm:$0xff] %v1965
  %1974 = vst [vmem:[#allocation2 + $0x148] sm:$0xff] %v1966
  %1975 = vst [vmem:[#allocation2 + $0x150] sm:$0xff] %v1967
  %1976 = vst [vmem:[#allocation2 + $0x158] sm:$0xff] %v1968
  %1977 = vst [vmem:[#allocation2 + $0x160] sm:$0xff] %v1969
  %1978 = vst [vmem:[#allocation2 + $0x168] sm:$0xff] %v1970
  %1979 = vst [vmem:[#allocation2 + $0x170] sm:$0xff] %v1971
  %1980 = vst [vmem:[#allocation2 + $0x178] sm:$0xff] %v1972
  %1981 = vrot.lane.b32.xlu0 %v1685, 57
  %v1982 = vpop.permute.xlu0 %1981
  %1983 = vrot.lane.b32.xlu0 %v1686, 57
  %v1984 = vpop.permute.xlu0 %1983
  %1985 = vrot.lane.b32.xlu0 %v1687, 57
  %v1986 = vpop.permute.xlu0 %1985
  %1987 = vrot.lane.b32.xlu0 %v1688, 57
  %v1988 = vpop.permute.xlu0 %1987
  %1989 = vrot.lane.b32.xlu0 %v1689, 57
  %v1990 = vpop.permute.xlu0 %1989
  %1991 = vrot.lane.b32.xlu0 %v1690, 57
  %v1992 = vpop.permute.xlu0 %1991
  %1993 = vrot.lane.b32.xlu0 %v1691, 57
  %v1994 = vpop.permute.xlu0 %1993
  %1995 = vrot.lane.b32.xlu0 %v1692, 57
  %v1996 = vpop.permute.xlu0 %1995
  %v1997 = vsel %vm349, %v1994, %v1996
  %v1998 = vsel %vm349, %v1992, %v1994
  %v1999 = vsel %vm349, %v1990, %v1992
  %v2000 = vsel %vm349, %v1988, %v1990
  %v2001 = vsel %vm349, %v1986, %v1988
  %v2002 = vsel %vm349, %v1984, %v1986
  %v2003 = vsel %vm349, %v1982, %v1984
  %v2004 = vsel %vm349, %v1996, %v1982
  %v2005 = vld [vmem:[%s3 + $0x180] sm:$0xff]
  %v2006 = vld [vmem:[%s3 + $0x188] sm:$0xff]
  %v2007 = vld [vmem:[%s3 + $0x190] sm:$0xff]
  %v2008 = vld [vmem:[%s3 + $0x198] sm:$0xff]
  %v2009 = vld [vmem:[%s3 + $0x1a0] sm:$0xff]
  %v2010 = vld [vmem:[%s3 + $0x1a8] sm:$0xff]
  %v2011 = vld [vmem:[%s3 + $0x1b0] sm:$0xff]
  %v2012 = vld [vmem:[%s3 + $0x1b8] sm:$0xff]
  %v2013 = vmul.f32 %v2004, %v2005
  %v2014 = vmul.f32 %v2003, %v2006
  %v2015 = vmul.f32 %v2002, %v2007
  %v2016 = vmul.f32 %v2001, %v2008
  %v2017 = vmul.f32 %v2000, %v2009
  %v2018 = vmul.f32 %v1999, %v2010
  %v2019 = vmul.f32 %v1998, %v2011
  %v2020 = vmul.f32 %v1997, %v2012
  %2021 = vst [vmem:[#allocation2 + $0x180] sm:$0xff] %v2013
  %2022 = vst [vmem:[#allocation2 + $0x188] sm:$0xff] %v2014
  %2023 = vst [vmem:[#allocation2 + $0x190] sm:$0xff] %v2015
  %2024 = vst [vmem:[#allocation2 + $0x198] sm:$0xff] %v2016
  %2025 = vst [vmem:[#allocation2 + $0x1a0] sm:$0xff] %v2017
  %2026 = vst [vmem:[#allocation2 + $0x1a8] sm:$0xff] %v2018
  %2027 = vst [vmem:[#allocation2 + $0x1b0] sm:$0xff] %v2019
  %2028 = vst [vmem:[#allocation2 + $0x1b8] sm:$0xff] %v2020
  %2029 = vrot.lane.b32.xlu0 %v1685, 56
  %v2030 = vpop.permute.xlu0 %2029
  %2031 = vrot.lane.b32.xlu0 %v1686, 56
  %v2032 = vpop.permute.xlu0 %2031
  %2033 = vrot.lane.b32.xlu0 %v1687, 56
  %v2034 = vpop.permute.xlu0 %2033
  %2035 = vrot.lane.b32.xlu0 %v1688, 56
  %v2036 = vpop.permute.xlu0 %2035
  %2037 = vrot.lane.b32.xlu0 %v1689, 56
  %v2038 = vpop.permute.xlu0 %2037
  %2039 = vrot.lane.b32.xlu0 %v1690, 56
  %v2040 = vpop.permute.xlu0 %2039
  %2041 = vrot.lane.b32.xlu0 %v1691, 56
  %v2042 = vpop.permute.xlu0 %2041
  %2043 = vrot.lane.b32.xlu0 %v1692, 56
  %v2044 = vpop.permute.xlu0 %2043
  %v2045 = vsel %vm398, %v2042, %v2044
  %v2046 = vsel %vm398, %v2040, %v2042
  %v2047 = vsel %vm398, %v2038, %v2040
  %v2048 = vsel %vm398, %v2036, %v2038
  %v2049 = vsel %vm398, %v2034, %v2036
  %v2050 = vsel %vm398, %v2032, %v2034
  %v2051 = vsel %vm398, %v2030, %v2032
  %v2052 = vsel %vm398, %v2044, %v2030
  %v2053 = vld [vmem:[%s3 + $0x1c0] sm:$0xff]
  %v2054 = vld [vmem:[%s3 + $0x1c8] sm:$0xff]
  %v2055 = vld [vmem:[%s3 + $0x1d0] sm:$0xff]
  %v2056 = vld [vmem:[%s3 + $0x1d8] sm:$0xff]
  %v2057 = vld [vmem:[%s3 + $0x1e0] sm:$0xff]
  %v2058 = vld [vmem:[%s3 + $0x1e8] sm:$0xff]
  %v2059 = vld [vmem:[%s3 + $0x1f0] sm:$0xff]
  %v2060 = vld [vmem:[%s3 + $0x1f8] sm:$0xff]
  %v2061 = vmul.f32 %v2052, %v2053
  %v2062 = vmul.f32 %v2051, %v2054
  %v2063 = vmul.f32 %v2050, %v2055
  %v2064 = vmul.f32 %v2049, %v2056
  %v2065 = vmul.f32 %v2048, %v2057
  %v2066 = vmul.f32 %v2047, %v2058
  %v2067 = vmul.f32 %v2046, %v2059
  %v2068 = vmul.f32 %v2045, %v2060
  %2069 = vst [vmem:[#allocation2 + $0x1c0] sm:$0xff] %v2061
  %2070 = vst [vmem:[#allocation2 + $0x1c8] sm:$0xff] %v2062
  %2071 = vst [vmem:[#allocation2 + $0x1d0] sm:$0xff] %v2063
  %2072 = vst [vmem:[#allocation2 + $0x1d8] sm:$0xff] %v2064
  %2073 = vst [vmem:[#allocation2 + $0x1e0] sm:$0xff] %v2065
  %2074 = vst [vmem:[#allocation2 + $0x1e8] sm:$0xff] %v2066
  %2075 = vst [vmem:[#allocation2 + $0x1f0] sm:$0xff] %v2067
  %2076 = vst [vmem:[#allocation2 + $0x1f8] sm:$0xff] %v2068
  %2077 = vrot.lane.b32.xlu0 %v1685, 55
  %v2078 = vpop.permute.xlu0 %2077
  %2079 = vrot.lane.b32.xlu0 %v1686, 55
  %v2080 = vpop.permute.xlu0 %2079
  %2081 = vrot.lane.b32.xlu0 %v1687, 55
  %v2082 = vpop.permute.xlu0 %2081
  %2083 = vrot.lane.b32.xlu0 %v1688, 55
  %v2084 = vpop.permute.xlu0 %2083
  %2085 = vrot.lane.b32.xlu0 %v1689, 55
  %v2086 = vpop.permute.xlu0 %2085
  %2087 = vrot.lane.b32.xlu0 %v1690, 55
  %v2088 = vpop.permute.xlu0 %2087
  %2089 = vrot.lane.b32.xlu0 %v1691, 55
  %v2090 = vpop.permute.xlu0 %2089
  %2091 = vrot.lane.b32.xlu0 %v1692, 55
  %v2092 = vpop.permute.xlu0 %2091
  %v2093 = vsel %vm447, %v2090, %v2092
  %v2094 = vsel %vm447, %v2088, %v2090
  %v2095 = vsel %vm447, %v2086, %v2088
  %v2096 = vsel %vm447, %v2084, %v2086
  %v2097 = vsel %vm447, %v2082, %v2084
  %v2098 = vsel %vm447, %v2080, %v2082
  %v2099 = vsel %vm447, %v2078, %v2080
  %v2100 = vsel %vm447, %v2092, %v2078
  %v2101 = vld [vmem:[%s3 + $0x200] sm:$0xff]
  %v2102 = vld [vmem:[%s3 + $0x208] sm:$0xff]
  %v2103 = vld [vmem:[%s3 + $0x210] sm:$0xff]
  %v2104 = vld [vmem:[%s3 + $0x218] sm:$0xff]
  %v2105 = vld [vmem:[%s3 + $0x220] sm:$0xff]
  %v2106 = vld [vmem:[%s3 + $0x228] sm:$0xff]
  %v2107 = vld [vmem:[%s3 + $0x230] sm:$0xff]
  %v2108 = vld [vmem:[%s3 + $0x238] sm:$0xff]
  %v2109 = vmul.f32 %v2100, %v2101
  %v2110 = vmul.f32 %v2099, %v2102
  %v2111 = vmul.f32 %v2098, %v2103
  %v2112 = vmul.f32 %v2097, %v2104
  %v2113 = vmul.f32 %v2096, %v2105
  %v2114 = vmul.f32 %v2095, %v2106
  %v2115 = vmul.f32 %v2094, %v2107
  %v2116 = vmul.f32 %v2093, %v2108
  %2117 = vst [vmem:[#allocation2 + $0x200] sm:$0xff] %v2109
  %2118 = vst [vmem:[#allocation2 + $0x208] sm:$0xff] %v2110
  %2119 = vst [vmem:[#allocation2 + $0x210] sm:$0xff] %v2111
  %2120 = vst [vmem:[#allocation2 + $0x218] sm:$0xff] %v2112
  %2121 = vst [vmem:[#allocation2 + $0x220] sm:$0xff] %v2113
  %2122 = vst [vmem:[#allocation2 + $0x228] sm:$0xff] %v2114
  %2123 = vst [vmem:[#allocation2 + $0x230] sm:$0xff] %v2115
  %2124 = vst [vmem:[#allocation2 + $0x238] sm:$0xff] %v2116
  %2125 = vrot.lane.b32.xlu0 %v1685, 9
  %v2126 = vpop.permute.xlu0 %2125
  %2127 = vrot.lane.b32.xlu0 %v1686, 9
  %v2128 = vpop.permute.xlu0 %2127
  %2129 = vrot.lane.b32.xlu0 %v1687, 9
  %v2130 = vpop.permute.xlu0 %2129
  %2131 = vrot.lane.b32.xlu0 %v1688, 9
  %v2132 = vpop.permute.xlu0 %2131
  %2133 = vrot.lane.b32.xlu0 %v1689, 9
  %v2134 = vpop.permute.xlu0 %2133
  %2135 = vrot.lane.b32.xlu0 %v1690, 9
  %v2136 = vpop.permute.xlu0 %2135
  %2137 = vrot.lane.b32.xlu0 %v1691, 9
  %v2138 = vpop.permute.xlu0 %2137
  %2139 = vrot.lane.b32.xlu0 %v1692, 9
  %v2140 = vpop.permute.xlu0 %2139
  %v2141 = vsel %vm496, %v2138, %v2140
  %v2142 = vsel %vm496, %v2136, %v2138
  %v2143 = vsel %vm496, %v2134, %v2136
  %v2144 = vsel %vm496, %v2132, %v2134
  %v2145 = vsel %vm496, %v2130, %v2132
  %v2146 = vsel %vm496, %v2128, %v2130
  %v2147 = vsel %vm496, %v2126, %v2128
  %v2148 = vsel %vm496, %v2140, %v2126
  %v2149 = vld [vmem:[%s3 + $0x240] sm:$0xff]
  %v2150 = vld [vmem:[%s3 + $0x248] sm:$0xff]
  %v2151 = vld [vmem:[%s3 + $0x250] sm:$0xff]
  %v2152 = vld [vmem:[%s3 + $0x258] sm:$0xff]
  %v2153 = vld [vmem:[%s3 + $0x260] sm:$0xff]
  %v2154 = vld [vmem:[%s3 + $0x268] sm:$0xff]
  %v2155 = vld [vmem:[%s3 + $0x270] sm:$0xff]
  %v2156 = vld [vmem:[%s3 + $0x278] sm:$0xff]
  %v2157 = vmul.f32 %v2148, %v2149
  %v2158 = vmul.f32 %v2147, %v2150
  %v2159 = vmul.f32 %v2146, %v2151
  %v2160 = vmul.f32 %v2145, %v2152
  %v2161 = vmul.f32 %v2144, %v2153
  %v2162 = vmul.f32 %v2143, %v2154
  %v2163 = vmul.f32 %v2142, %v2155
  %v2164 = vmul.f32 %v2141, %v2156
  %2165 = vst [vmem:[#allocation2 + $0x240] sm:$0xff] %v2157
  %2166 = vst [vmem:[#allocation2 + $0x248] sm:$0xff] %v2158
  %2167 = vst [vmem:[#allocation2 + $0x250] sm:$0xff] %v2159
  %2168 = vst [vmem:[#allocation2 + $0x258] sm:$0xff] %v2160
  %2169 = vst [vmem:[#allocation2 + $0x260] sm:$0xff] %v2161
  %2170 = vst [vmem:[#allocation2 + $0x268] sm:$0xff] %v2162
  %2171 = vst [vmem:[#allocation2 + $0x270] sm:$0xff] %v2163
  %2172 = vst [vmem:[#allocation2 + $0x278] sm:$0xff] %v2164
  %2173 = vrot.lane.b32.xlu0 %v1685, 8
  %v2174 = vpop.permute.xlu0 %2173
  %2175 = vrot.lane.b32.xlu0 %v1686, 8
  %v2176 = vpop.permute.xlu0 %2175
  %2177 = vrot.lane.b32.xlu0 %v1687, 8
  %v2178 = vpop.permute.xlu0 %2177
  %2179 = vrot.lane.b32.xlu0 %v1688, 8
  %v2180 = vpop.permute.xlu0 %2179
  %2181 = vrot.lane.b32.xlu0 %v1689, 8
  %v2182 = vpop.permute.xlu0 %2181
  %2183 = vrot.lane.b32.xlu0 %v1690, 8
  %v2184 = vpop.permute.xlu0 %2183
  %2185 = vrot.lane.b32.xlu0 %v1691, 8
  %v2186 = vpop.permute.xlu0 %2185
  %2187 = vrot.lane.b32.xlu0 %v1692, 8
  %v2188 = vpop.permute.xlu0 %2187
  %v2189 = vsel %vm545, %v2186, %v2188
  %v2190 = vsel %vm545, %v2184, %v2186
  %v2191 = vsel %vm545, %v2182, %v2184
  %v2192 = vsel %vm545, %v2180, %v2182
  %v2193 = vsel %vm545, %v2178, %v2180
  %v2194 = vsel %vm545, %v2176, %v2178
  %v2195 = vsel %vm545, %v2174, %v2176
  %v2196 = vsel %vm545, %v2188, %v2174
  %v2197 = vld [vmem:[%s3 + $0x280] sm:$0xff]
  %v2198 = vld [vmem:[%s3 + $0x288] sm:$0xff]
  %v2199 = vld [vmem:[%s3 + $0x290] sm:$0xff]
  %v2200 = vld [vmem:[%s3 + $0x298] sm:$0xff]
  %v2201 = vld [vmem:[%s3 + $0x2a0] sm:$0xff]
  %v2202 = vld [vmem:[%s3 + $0x2a8] sm:$0xff]
  %v2203 = vld [vmem:[%s3 + $0x2b0] sm:$0xff]
  %v2204 = vld [vmem:[%s3 + $0x2b8] sm:$0xff]
  %v2205 = vmul.f32 %v2196, %v2197
  %v2206 = vmul.f32 %v2195, %v2198
  %v2207 = vmul.f32 %v2194, %v2199
  %v2208 = vmul.f32 %v2193, %v2200
  %v2209 = vmul.f32 %v2192, %v2201
  %v2210 = vmul.f32 %v2191, %v2202
  %v2211 = vmul.f32 %v2190, %v2203
  %v2212 = vmul.f32 %v2189, %v2204
  %2213 = vst [vmem:[#allocation2 + $0x280] sm:$0xff] %v2205
  %2214 = vst [vmem:[#allocation2 + $0x288] sm:$0xff] %v2206
  %2215 = vst [vmem:[#allocation2 + $0x290] sm:$0xff] %v2207
  %2216 = vst [vmem:[#allocation2 + $0x298] sm:$0xff] %v2208
  %2217 = vst [vmem:[#allocation2 + $0x2a0] sm:$0xff] %v2209
  %2218 = vst [vmem:[#allocation2 + $0x2a8] sm:$0xff] %v2210
  %2219 = vst [vmem:[#allocation2 + $0x2b0] sm:$0xff] %v2211
  %2220 = vst [vmem:[#allocation2 + $0x2b8] sm:$0xff] %v2212
  %2221 = vrot.lane.b32.xlu0 %v1685, 7
  %v2222 = vpop.permute.xlu0 %2221
  %2223 = vrot.lane.b32.xlu0 %v1686, 7
  %v2224 = vpop.permute.xlu0 %2223
  %2225 = vrot.lane.b32.xlu0 %v1687, 7
  %v2226 = vpop.permute.xlu0 %2225
  %2227 = vrot.lane.b32.xlu0 %v1688, 7
  %v2228 = vpop.permute.xlu0 %2227
  %2229 = vrot.lane.b32.xlu0 %v1689, 7
  %v2230 = vpop.permute.xlu0 %2229
  %2231 = vrot.lane.b32.xlu0 %v1690, 7
  %v2232 = vpop.permute.xlu0 %2231
  %2233 = vrot.lane.b32.xlu0 %v1691, 7
  %v2234 = vpop.permute.xlu0 %2233
  %2235 = vrot.lane.b32.xlu0 %v1692, 7
  %v2236 = vpop.permute.xlu0 %2235
  %v2237 = vsel %vm594, %v2234, %v2236
  %v2238 = vsel %vm594, %v2232, %v2234
  %v2239 = vsel %vm594, %v2230, %v2232
  %v2240 = vsel %vm594, %v2228, %v2230
  %v2241 = vsel %vm594, %v2226, %v2228
  %v2242 = vsel %vm594, %v2224, %v2226
  %v2243 = vsel %vm594, %v2222, %v2224
  %v2244 = vsel %vm594, %v2236, %v2222
  %v2245 = vld [vmem:[%s3 + $0x2c0] sm:$0xff]
  %v2246 = vld [vmem:[%s3 + $0x2c8] sm:$0xff]
  %v2247 = vld [vmem:[%s3 + $0x2d0] sm:$0xff]
  %v2248 = vld [vmem:[%s3 + $0x2d8] sm:$0xff]
  %v2249 = vld [vmem:[%s3 + $0x2e0] sm:$0xff]
  %v2250 = vld [vmem:[%s3 + $0x2e8] sm:$0xff]
  %v2251 = vld [vmem:[%s3 + $0x2f0] sm:$0xff]
  %v2252 = vld [vmem:[%s3 + $0x2f8] sm:$0xff]
  %v2253 = vmul.f32 %v2244, %v2245
  %v2254 = vmul.f32 %v2243, %v2246
  %v2255 = vmul.f32 %v2242, %v2247
  %v2256 = vmul.f32 %v2241, %v2248
  %v2257 = vmul.f32 %v2240, %v2249
  %v2258 = vmul.f32 %v2239, %v2250
  %v2259 = vmul.f32 %v2238, %v2251
  %v2260 = vmul.f32 %v2237, %v2252
  %2261 = vst [vmem:[#allocation2 + $0x2c0] sm:$0xff] %v2253
  %2262 = vst [vmem:[#allocation2 + $0x2c8] sm:$0xff] %v2254
  %2263 = vst [vmem:[#allocation2 + $0x2d0] sm:$0xff] %v2255
  %2264 = vst [vmem:[#allocation2 + $0x2d8] sm:$0xff] %v2256
  %2265 = vst [vmem:[#allocation2 + $0x2e0] sm:$0xff] %v2257
  %2266 = vst [vmem:[#allocation2 + $0x2e8] sm:$0xff] %v2258
  %2267 = vst [vmem:[#allocation2 + $0x2f0] sm:$0xff] %v2259
  %2268 = vst [vmem:[#allocation2 + $0x2f8] sm:$0xff] %v2260
  %2269 = vrot.lane.b32.xlu0 %v1685, 1
  %v2270 = vpop.permute.xlu0 %2269
  %2271 = vrot.lane.b32.xlu0 %v1686, 1
  %v2272 = vpop.permute.xlu0 %2271
  %2273 = vrot.lane.b32.xlu0 %v1687, 1
  %v2274 = vpop.permute.xlu0 %2273
  %2275 = vrot.lane.b32.xlu0 %v1688, 1
  %v2276 = vpop.permute.xlu0 %2275
  %2277 = vrot.lane.b32.xlu0 %v1689, 1
  %v2278 = vpop.permute.xlu0 %2277
  %2279 = vrot.lane.b32.xlu0 %v1690, 1
  %v2280 = vpop.permute.xlu0 %2279
  %2281 = vrot.lane.b32.xlu0 %v1691, 1
  %v2282 = vpop.permute.xlu0 %2281
  %2283 = vrot.lane.b32.xlu0 %v1692, 1
  %v2284 = vpop.permute.xlu0 %2283
  %v2285 = vsel %vm643, %v2282, %v2284
  %v2286 = vsel %vm643, %v2280, %v2282
  %v2287 = vsel %vm643, %v2278, %v2280
  %v2288 = vsel %vm643, %v2276, %v2278
  %v2289 = vsel %vm643, %v2274, %v2276
  %v2290 = vsel %vm643, %v2272, %v2274
  %v2291 = vsel %vm643, %v2270, %v2272
  %v2292 = vsel %vm643, %v2284, %v2270
  %v2293 = vld [vmem:[%s3 + $0x300] sm:$0xff]
  %v2294 = vld [vmem:[%s3 + $0x308] sm:$0xff]
  %v2295 = vld [vmem:[%s3 + $0x310] sm:$0xff]
  %v2296 = vld [vmem:[%s3 + $0x318] sm:$0xff]
  %v2297 = vld [vmem:[%s3 + $0x320] sm:$0xff]
  %v2298 = vld [vmem:[%s3 + $0x328] sm:$0xff]
  %v2299 = vld [vmem:[%s3 + $0x330] sm:$0xff]
  %v2300 = vld [vmem:[%s3 + $0x338] sm:$0xff]
  %v2301 = vmul.f32 %v2292, %v2293
  %v2302 = vmul.f32 %v2291, %v2294
  %v2303 = vmul.f32 %v2290, %v2295
  %v2304 = vmul.f32 %v2289, %v2296
  %v2305 = vmul.f32 %v2288, %v2297
  %v2306 = vmul.f32 %v2287, %v2298
  %v2307 = vmul.f32 %v2286, %v2299
  %v2308 = vmul.f32 %v2285, %v2300
  %2309 = vst [vmem:[#allocation2 + $0x300] sm:$0xff] %v2301
  %2310 = vst [vmem:[#allocation2 + $0x308] sm:$0xff] %v2302
  %2311 = vst [vmem:[#allocation2 + $0x310] sm:$0xff] %v2303
  %2312 = vst [vmem:[#allocation2 + $0x318] sm:$0xff] %v2304
  %2313 = vst [vmem:[#allocation2 + $0x320] sm:$0xff] %v2305
  %2314 = vst [vmem:[#allocation2 + $0x328] sm:$0xff] %v2306
  %2315 = vst [vmem:[#allocation2 + $0x330] sm:$0xff] %v2307
  %2316 = vst [vmem:[#allocation2 + $0x338] sm:$0xff] %v2308
  %v2317 = vld [vmem:[%s3 + $0x340] sm:$0xff]
  %v2318 = vld [vmem:[%s3 + $0x348] sm:$0xff]
  %v2319 = vld [vmem:[%s3 + $0x350] sm:$0xff]
  %v2320 = vld [vmem:[%s3 + $0x358] sm:$0xff]
  %v2321 = vld [vmem:[%s3 + $0x360] sm:$0xff]
  %v2322 = vld [vmem:[%s3 + $0x368] sm:$0xff]
  %v2323 = vld [vmem:[%s3 + $0x370] sm:$0xff]
  %v2324 = vld [vmem:[%s3 + $0x378] sm:$0xff]
  %v2325 = vmul.f32 %v1685, %v2317
  %v2326 = vmul.f32 %v1686, %v2318
  %v2327 = vmul.f32 %v1687, %v2319
  %v2328 = vmul.f32 %v1688, %v2320
  %v2329 = vmul.f32 %v1689, %v2321
  %v2330 = vmul.f32 %v1690, %v2322
  %v2331 = vmul.f32 %v1691, %v2323
  %v2332 = vmul.f32 %v1692, %v2324
  %2333 = vst [vmem:[#allocation2 + $0x340] sm:$0xff] %v2325
  %2334 = vst [vmem:[#allocation2 + $0x348] sm:$0xff] %v2326
  %2335 = vst [vmem:[#allocation2 + $0x350] sm:$0xff] %v2327
  %2336 = vst [vmem:[#allocation2 + $0x358] sm:$0xff] %v2328
  %2337 = vst [vmem:[#allocation2 + $0x360] sm:$0xff] %v2329
  %2338 = vst [vmem:[#allocation2 + $0x368] sm:$0xff] %v2330
  %2339 = vst [vmem:[#allocation2 + $0x370] sm:$0xff] %v2331
  %2340 = vst [vmem:[#allocation2 + $0x378] sm:$0xff] %v2332
  %2341 = vrot.lane.b32.xlu0 %v1685, 127
  %v2342 = vpop.permute.xlu0 %2341
  %2343 = vrot.lane.b32.xlu0 %v1686, 127
  %v2344 = vpop.permute.xlu0 %2343
  %2345 = vrot.lane.b32.xlu0 %v1687, 127
  %v2346 = vpop.permute.xlu0 %2345
  %2347 = vrot.lane.b32.xlu0 %v1688, 127
  %v2348 = vpop.permute.xlu0 %2347
  %2349 = vrot.lane.b32.xlu0 %v1689, 127
  %v2350 = vpop.permute.xlu0 %2349
  %2351 = vrot.lane.b32.xlu0 %v1690, 127
  %v2352 = vpop.permute.xlu0 %2351
  %2353 = vrot.lane.b32.xlu0 %v1691, 127
  %v2354 = vpop.permute.xlu0 %2353
  %2355 = vrot.lane.b32.xlu0 %v1692, 127
  %v2356 = vpop.permute.xlu0 %2355
  %v2357 = vsel %vm716, %v2354, %v2356
  %v2358 = vsel %vm716, %v2352, %v2354
  %v2359 = vsel %vm716, %v2350, %v2352
  %v2360 = vsel %vm716, %v2348, %v2350
  %v2361 = vsel %vm716, %v2346, %v2348
  %v2362 = vsel %vm716, %v2344, %v2346
  %v2363 = vsel %vm716, %v2342, %v2344
  %v2364 = vsel %vm716, %v2356, %v2342
  %v2365 = vld [vmem:[%s3 + $0x380] sm:$0xff]
  %v2366 = vld [vmem:[%s3 + $0x388] sm:$0xff]
  %v2367 = vld [vmem:[%s3 + $0x390] sm:$0xff]
  %v2368 = vld [vmem:[%s3 + $0x398] sm:$0xff]
  %v2369 = vld [vmem:[%s3 + $0x3a0] sm:$0xff]
  %v2370 = vld [vmem:[%s3 + $0x3a8] sm:$0xff]
  %v2371 = vld [vmem:[%s3 + $0x3b0] sm:$0xff]
  %v2372 = vld [vmem:[%s3 + $0x3b8] sm:$0xff]
  %v2373 = vmul.f32 %v2363, %v2365
  %v2374 = vmul.f32 %v2362, %v2366
  %v2375 = vmul.f32 %v2361, %v2367
  %v2376 = vmul.f32 %v2360, %v2368
  %v2377 = vmul.f32 %v2359, %v2369
  %v2378 = vmul.f32 %v2358, %v2370
  %v2379 = vmul.f32 %v2357, %v2371
  %v2380 = vmul.f32 %v2364, %v2372
  %2381 = vst [vmem:[#allocation2 + $0x380] sm:$0xff] %v2373
  %2382 = vst [vmem:[#allocation2 + $0x388] sm:$0xff] %v2374
  %2383 = vst [vmem:[#allocation2 + $0x390] sm:$0xff] %v2375
  %2384 = vst [vmem:[#allocation2 + $0x398] sm:$0xff] %v2376
  %2385 = vst [vmem:[#allocation2 + $0x3a0] sm:$0xff] %v2377
  %2386 = vst [vmem:[#allocation2 + $0x3a8] sm:$0xff] %v2378
  %2387 = vst [vmem:[#allocation2 + $0x3b0] sm:$0xff] %v2379
  %2388 = vst [vmem:[#allocation2 + $0x3b8] sm:$0xff] %v2380
  %2389 = vrot.lane.b32.xlu0 %v1685, 121
  %v2390 = vpop.permute.xlu0 %2389
  %2391 = vrot.lane.b32.xlu0 %v1686, 121
  %v2392 = vpop.permute.xlu0 %2391
  %2393 = vrot.lane.b32.xlu0 %v1687, 121
  %v2394 = vpop.permute.xlu0 %2393
  %2395 = vrot.lane.b32.xlu0 %v1688, 121
  %v2396 = vpop.permute.xlu0 %2395
  %2397 = vrot.lane.b32.xlu0 %v1689, 121
  %v2398 = vpop.permute.xlu0 %2397
  %2399 = vrot.lane.b32.xlu0 %v1690, 121
  %v2400 = vpop.permute.xlu0 %2399
  %2401 = vrot.lane.b32.xlu0 %v1691, 121
  %v2402 = vpop.permute.xlu0 %2401
  %2403 = vrot.lane.b32.xlu0 %v1692, 121
  %v2404 = vpop.permute.xlu0 %2403
  %v2405 = vsel %vm765, %v2402, %v2404
  %v2406 = vsel %vm765, %v2400, %v2402
  %v2407 = vsel %vm765, %v2398, %v2400
  %v2408 = vsel %vm765, %v2396, %v2398
  %v2409 = vsel %vm765, %v2394, %v2396
  %v2410 = vsel %vm765, %v2392, %v2394
  %v2411 = vsel %vm765, %v2390, %v2392
  %v2412 = vsel %vm765, %v2404, %v2390
  %v2413 = vld [vmem:[%s3 + $0x3c0] sm:$0xff]
  %v2414 = vld [vmem:[%s3 + $0x3c8] sm:$0xff]
  %v2415 = vld [vmem:[%s3 + $0x3d0] sm:$0xff]
  %v2416 = vld [vmem:[%s3 + $0x3d8] sm:$0xff]
  %v2417 = vld [vmem:[%s3 + $0x3e0] sm:$0xff]
  %v2418 = vld [vmem:[%s3 + $0x3e8] sm:$0xff]
  %v2419 = vld [vmem:[%s3 + $0x3f0] sm:$0xff]
  %v2420 = vld [vmem:[%s3 + $0x3f8] sm:$0xff]
  %v2421 = vmul.f32 %v2411, %v2413
  %v2422 = vmul.f32 %v2410, %v2414
  %v2423 = vmul.f32 %v2409, %v2415
  %v2424 = vmul.f32 %v2408, %v2416
  %v2425 = vmul.f32 %v2407, %v2417
  %v2426 = vmul.f32 %v2406, %v2418
  %v2427 = vmul.f32 %v2405, %v2419
  %v2428 = vmul.f32 %v2412, %v2420
  %2429 = vst [vmem:[#allocation2 + $0x3c0] sm:$0xff] %v2421
  %2430 = vst [vmem:[#allocation2 + $0x3c8] sm:$0xff] %v2422
  %2431 = vst [vmem:[#allocation2 + $0x3d0] sm:$0xff] %v2423
  %2432 = vst [vmem:[#allocation2 + $0x3d8] sm:$0xff] %v2424
  %2433 = vst [vmem:[#allocation2 + $0x3e0] sm:$0xff] %v2425
  %2434 = vst [vmem:[#allocation2 + $0x3e8] sm:$0xff] %v2426
  %2435 = vst [vmem:[#allocation2 + $0x3f0] sm:$0xff] %v2427
  %2436 = vst [vmem:[#allocation2 + $0x3f8] sm:$0xff] %v2428
  %2437 = vrot.lane.b32.xlu0 %v1685, 120
  %v2438 = vpop.permute.xlu0 %2437
  %2439 = vrot.lane.b32.xlu0 %v1686, 120
  %v2440 = vpop.permute.xlu0 %2439
  %2441 = vrot.lane.b32.xlu0 %v1687, 120
  %v2442 = vpop.permute.xlu0 %2441
  %2443 = vrot.lane.b32.xlu0 %v1688, 120
  %v2444 = vpop.permute.xlu0 %2443
  %2445 = vrot.lane.b32.xlu0 %v1689, 120
  %v2446 = vpop.permute.xlu0 %2445
  %2447 = vrot.lane.b32.xlu0 %v1690, 120
  %v2448 = vpop.permute.xlu0 %2447
  %2449 = vrot.lane.b32.xlu0 %v1691, 120
  %v2450 = vpop.permute.xlu0 %2449
  %2451 = vrot.lane.b32.xlu0 %v1692, 120
  %v2452 = vpop.permute.xlu0 %2451
  %v2453 = vsel %vm814, %v2450, %v2452
  %v2454 = vsel %vm814, %v2448, %v2450
  %v2455 = vsel %vm814, %v2446, %v2448
  %v2456 = vsel %vm814, %v2444, %v2446
  %v2457 = vsel %vm814, %v2442, %v2444
  %v2458 = vsel %vm814, %v2440, %v2442
  %v2459 = vsel %vm814, %v2438, %v2440
  %v2460 = vsel %vm814, %v2452, %v2438
  %v2461 = vld [vmem:[%s3 + $0x400] sm:$0xff]
  %v2462 = vld [vmem:[%s3 + $0x408] sm:$0xff]
  %v2463 = vld [vmem:[%s3 + $0x410] sm:$0xff]
  %v2464 = vld [vmem:[%s3 + $0x418] sm:$0xff]
  %v2465 = vld [vmem:[%s3 + $0x420] sm:$0xff]
  %v2466 = vld [vmem:[%s3 + $0x428] sm:$0xff]
  %v2467 = vld [vmem:[%s3 + $0x430] sm:$0xff]
  %v2468 = vld [vmem:[%s3 + $0x438] sm:$0xff]
  %v2469 = vmul.f32 %v2459, %v2461
  %v2470 = vmul.f32 %v2458, %v2462
  %v2471 = vmul.f32 %v2457, %v2463
  %v2472 = vmul.f32 %v2456, %v2464
  %v2473 = vmul.f32 %v2455, %v2465
  %v2474 = vmul.f32 %v2454, %v2466
  %v2475 = vmul.f32 %v2453, %v2467
  %v2476 = vmul.f32 %v2460, %v2468
  %2477 = vst [vmem:[#allocation2 + $0x400] sm:$0xff] %v2469
  %2478 = vst [vmem:[#allocation2 + $0x408] sm:$0xff] %v2470
  %2479 = vst [vmem:[#allocation2 + $0x410] sm:$0xff] %v2471
  %2480 = vst [vmem:[#allocation2 + $0x418] sm:$0xff] %v2472
  %2481 = vst [vmem:[#allocation2 + $0x420] sm:$0xff] %v2473
  %2482 = vst [vmem:[#allocation2 + $0x428] sm:$0xff] %v2474
  %2483 = vst [vmem:[#allocation2 + $0x430] sm:$0xff] %v2475
  %2484 = vst [vmem:[#allocation2 + $0x438] sm:$0xff] %v2476
  %2485 = vrot.lane.b32.xlu0 %v1685, 119
  %v2486 = vpop.permute.xlu0 %2485
  %2487 = vrot.lane.b32.xlu0 %v1686, 119
  %v2488 = vpop.permute.xlu0 %2487
  %2489 = vrot.lane.b32.xlu0 %v1687, 119
  %v2490 = vpop.permute.xlu0 %2489
  %2491 = vrot.lane.b32.xlu0 %v1688, 119
  %v2492 = vpop.permute.xlu0 %2491
  %2493 = vrot.lane.b32.xlu0 %v1689, 119
  %v2494 = vpop.permute.xlu0 %2493
  %2495 = vrot.lane.b32.xlu0 %v1690, 119
  %v2496 = vpop.permute.xlu0 %2495
  %2497 = vrot.lane.b32.xlu0 %v1691, 119
  %v2498 = vpop.permute.xlu0 %2497
  %2499 = vrot.lane.b32.xlu0 %v1692, 119
  %v2500 = vpop.permute.xlu0 %2499
  %v2501 = vsel %vm863, %v2498, %v2500
  %v2502 = vsel %vm863, %v2496, %v2498
  %v2503 = vsel %vm863, %v2494, %v2496
  %v2504 = vsel %vm863, %v2492, %v2494
  %v2505 = vsel %vm863, %v2490, %v2492
  %v2506 = vsel %vm863, %v2488, %v2490
  %v2507 = vsel %vm863, %v2486, %v2488
  %v2508 = vsel %vm863, %v2500, %v2486
  %v2509 = vld [vmem:[%s3 + $0x440] sm:$0xff]
  %v2510 = vld [vmem:[%s3 + $0x448] sm:$0xff]
  %v2511 = vld [vmem:[%s3 + $0x450] sm:$0xff]
  %v2512 = vld [vmem:[%s3 + $0x458] sm:$0xff]
  %v2513 = vld [vmem:[%s3 + $0x460] sm:$0xff]
  %v2514 = vld [vmem:[%s3 + $0x468] sm:$0xff]
  %v2515 = vld [vmem:[%s3 + $0x470] sm:$0xff]
  %v2516 = vld [vmem:[%s3 + $0x478] sm:$0xff]
  %v2517 = vmul.f32 %v2507, %v2509
  %v2518 = vmul.f32 %v2506, %v2510
  %v2519 = vmul.f32 %v2505, %v2511
  %v2520 = vmul.f32 %v2504, %v2512
  %v2521 = vmul.f32 %v2503, %v2513
  %v2522 = vmul.f32 %v2502, %v2514
  %v2523 = vmul.f32 %v2501, %v2515
  %v2524 = vmul.f32 %v2508, %v2516
  %2525 = vst [vmem:[#allocation2 + $0x440] sm:$0xff] %v2517
  %2526 = vst [vmem:[#allocation2 + $0x448] sm:$0xff] %v2518
  %2527 = vst [vmem:[#allocation2 + $0x450] sm:$0xff] %v2519
  %2528 = vst [vmem:[#allocation2 + $0x458] sm:$0xff] %v2520
  %2529 = vst [vmem:[#allocation2 + $0x460] sm:$0xff] %v2521
  %2530 = vst [vmem:[#allocation2 + $0x468] sm:$0xff] %v2522
  %2531 = vst [vmem:[#allocation2 + $0x470] sm:$0xff] %v2523
  %2532 = vst [vmem:[#allocation2 + $0x478] sm:$0xff] %v2524
  %v2533 = vld [vmem:[%s3 + $0x480] sm:$0xff]
  %v2534 = vld [vmem:[%s3 + $0x488] sm:$0xff]
  %v2535 = vld [vmem:[%s3 + $0x490] sm:$0xff]
  %v2536 = vld [vmem:[%s3 + $0x498] sm:$0xff]
  %v2537 = vld [vmem:[%s3 + $0x4a0] sm:$0xff]
  %v2538 = vld [vmem:[%s3 + $0x4a8] sm:$0xff]
  %v2539 = vld [vmem:[%s3 + $0x4b0] sm:$0xff]
  %v2540 = vld [vmem:[%s3 + $0x4b8] sm:$0xff]
  %v2541 = vmul.f32 %v1715, %v2533
  %v2542 = vmul.f32 %v1714, %v2534
  %v2543 = vmul.f32 %v1713, %v2535
  %v2544 = vmul.f32 %v1712, %v2536
  %v2545 = vmul.f32 %v1711, %v2537
  %v2546 = vmul.f32 %v1710, %v2538
  %v2547 = vmul.f32 %v1709, %v2539
  %v2548 = vmul.f32 %v1716, %v2540
  %2549 = vst [vmem:[#allocation2 + $0x480] sm:$0xff] %v2541
  %2550 = vst [vmem:[#allocation2 + $0x488] sm:$0xff] %v2542
  %2551 = vst [vmem:[#allocation2 + $0x490] sm:$0xff] %v2543
  %2552 = vst [vmem:[#allocation2 + $0x498] sm:$0xff] %v2544
  %2553 = vst [vmem:[#allocation2 + $0x4a0] sm:$0xff] %v2545
  %2554 = vst [vmem:[#allocation2 + $0x4a8] sm:$0xff] %v2546
  %2555 = vst [vmem:[#allocation2 + $0x4b0] sm:$0xff] %v2547
  %2556 = vst [vmem:[#allocation2 + $0x4b8] sm:$0xff] %v2548
  %v2557 = vld [vmem:[%s3 + $0x4c0] sm:$0xff]
  %v2558 = vld [vmem:[%s3 + $0x4c8] sm:$0xff]
  %v2559 = vld [vmem:[%s3 + $0x4d0] sm:$0xff]
  %v2560 = vld [vmem:[%s3 + $0x4d8] sm:$0xff]
  %v2561 = vld [vmem:[%s3 + $0x4e0] sm:$0xff]
  %v2562 = vld [vmem:[%s3 + $0x4e8] sm:$0xff]
  %v2563 = vld [vmem:[%s3 + $0x4f0] sm:$0xff]
  %v2564 = vld [vmem:[%s3 + $0x4f8] sm:$0xff]
  %v2565 = vmul.f32 %v1763, %v2557
  %v2566 = vmul.f32 %v1762, %v2558
  %v2567 = vmul.f32 %v1761, %v2559
  %v2568 = vmul.f32 %v1760, %v2560
  %v2569 = vmul.f32 %v1759, %v2561
  %v2570 = vmul.f32 %v1758, %v2562
  %v2571 = vmul.f32 %v1757, %v2563
  %v2572 = vmul.f32 %v1764, %v2564
  %2573 = vst [vmem:[#allocation2 + $0x4c0] sm:$0xff] %v2565
  %2574 = vst [vmem:[#allocation2 + $0x4c8] sm:$0xff] %v2566
  %2575 = vst [vmem:[#allocation2 + $0x4d0] sm:$0xff] %v2567
  %2576 = vst [vmem:[#allocation2 + $0x4d8] sm:$0xff] %v2568
  %2577 = vst [vmem:[#allocation2 + $0x4e0] sm:$0xff] %v2569
  %2578 = vst [vmem:[#allocation2 + $0x4e8] sm:$0xff] %v2570
  %2579 = vst [vmem:[#allocation2 + $0x4f0] sm:$0xff] %v2571
  %2580 = vst [vmem:[#allocation2 + $0x4f8] sm:$0xff] %v2572
  %v2581 = vld [vmem:[%s3 + $0x500] sm:$0xff]
  %v2582 = vld [vmem:[%s3 + $0x508] sm:$0xff]
  %v2583 = vld [vmem:[%s3 + $0x510] sm:$0xff]
  %v2584 = vld [vmem:[%s3 + $0x518] sm:$0xff]
  %v2585 = vld [vmem:[%s3 + $0x520] sm:$0xff]
  %v2586 = vld [vmem:[%s3 + $0x528] sm:$0xff]
  %v2587 = vld [vmem:[%s3 + $0x530] sm:$0xff]
  %v2588 = vld [vmem:[%s3 + $0x538] sm:$0xff]
  %v2589 = vmul.f32 %v1811, %v2581
  %v2590 = vmul.f32 %v1810, %v2582
  %v2591 = vmul.f32 %v1809, %v2583
  %v2592 = vmul.f32 %v1808, %v2584
  %v2593 = vmul.f32 %v1807, %v2585
  %v2594 = vmul.f32 %v1806, %v2586
  %v2595 = vmul.f32 %v1805, %v2587
  %v2596 = vmul.f32 %v1812, %v2588
  %2597 = vst [vmem:[#allocation2 + $0x500] sm:$0xff] %v2589
  %2598 = vst [vmem:[#allocation2 + $0x508] sm:$0xff] %v2590
  %2599 = vst [vmem:[#allocation2 + $0x510] sm:$0xff] %v2591
  %2600 = vst [vmem:[#allocation2 + $0x518] sm:$0xff] %v2592
  %2601 = vst [vmem:[#allocation2 + $0x520] sm:$0xff] %v2593
  %2602 = vst [vmem:[#allocation2 + $0x528] sm:$0xff] %v2594
  %2603 = vst [vmem:[#allocation2 + $0x530] sm:$0xff] %v2595
  %2604 = vst [vmem:[#allocation2 + $0x538] sm:$0xff] %v2596
  %v2605 = vld [vmem:[%s3 + $0x540] sm:$0xff]
  %v2606 = vld [vmem:[%s3 + $0x548] sm:$0xff]
  %v2607 = vld [vmem:[%s3 + $0x550] sm:$0xff]
  %v2608 = vld [vmem:[%s3 + $0x558] sm:$0xff]
  %v2609 = vld [vmem:[%s3 + $0x560] sm:$0xff]
  %v2610 = vld [vmem:[%s3 + $0x568] sm:$0xff]
  %v2611 = vld [vmem:[%s3 + $0x570] sm:$0xff]
  %v2612 = vld [vmem:[%s3 + $0x578] sm:$0xff]
  %v2613 = vmul.f32 %v1859, %v2605
  %v2614 = vmul.f32 %v1858, %v2606
  %v2615 = vmul.f32 %v1857, %v2607
  %v2616 = vmul.f32 %v1856, %v2608
  %v2617 = vmul.f32 %v1855, %v2609
  %v2618 = vmul.f32 %v1854, %v2610
  %v2619 = vmul.f32 %v1853, %v2611
  %v2620 = vmul.f32 %v1860, %v2612
  %2621 = vst [vmem:[#allocation2 + $0x540] sm:$0xff] %v2613
  %2622 = vst [vmem:[#allocation2 + $0x548] sm:$0xff] %v2614
  %2623 = vst [vmem:[#allocation2 + $0x550] sm:$0xff] %v2615
  %2624 = vst [vmem:[#allocation2 + $0x558] sm:$0xff] %v2616
  %2625 = vst [vmem:[#allocation2 + $0x560] sm:$0xff] %v2617
  %2626 = vst [vmem:[#allocation2 + $0x568] sm:$0xff] %v2618
  %2627 = vst [vmem:[#allocation2 + $0x570] sm:$0xff] %v2619
  %2628 = vst [vmem:[#allocation2 + $0x578] sm:$0xff] %v2620
  %v2629 = vld [vmem:[%s3 + $0x580] sm:$0xff]
  %v2630 = vld [vmem:[%s3 + $0x588] sm:$0xff]
  %v2631 = vld [vmem:[%s3 + $0x590] sm:$0xff]
  %v2632 = vld [vmem:[%s3 + $0x598] sm:$0xff]
  %v2633 = vld [vmem:[%s3 + $0x5a0] sm:$0xff]
  %v2634 = vld [vmem:[%s3 + $0x5a8] sm:$0xff]
  %v2635 = vld [vmem:[%s3 + $0x5b0] sm:$0xff]
  %v2636 = vld [vmem:[%s3 + $0x5b8] sm:$0xff]
  %v2637 = vmul.f32 %v1907, %v2629
  %v2638 = vmul.f32 %v1906, %v2630
  %v2639 = vmul.f32 %v1905, %v2631
  %v2640 = vmul.f32 %v1904, %v2632
  %v2641 = vmul.f32 %v1903, %v2633
  %v2642 = vmul.f32 %v1902, %v2634
  %v2643 = vmul.f32 %v1901, %v2635
  %v2644 = vmul.f32 %v1908, %v2636
  %2645 = vst [vmem:[#allocation2 + $0x580] sm:$0xff] %v2637
  %2646 = vst [vmem:[#allocation2 + $0x588] sm:$0xff] %v2638
  %2647 = vst [vmem:[#allocation2 + $0x590] sm:$0xff] %v2639
  %2648 = vst [vmem:[#allocation2 + $0x598] sm:$0xff] %v2640
  %2649 = vst [vmem:[#allocation2 + $0x5a0] sm:$0xff] %v2641
  %2650 = vst [vmem:[#allocation2 + $0x5a8] sm:$0xff] %v2642
  %2651 = vst [vmem:[#allocation2 + $0x5b0] sm:$0xff] %v2643
  %2652 = vst [vmem:[#allocation2 + $0x5b8] sm:$0xff] %v2644
  %v2653 = vld [vmem:[%s3 + $0x5c0] sm:$0xff]
  %v2654 = vld [vmem:[%s3 + $0x5c8] sm:$0xff]
  %v2655 = vld [vmem:[%s3 + $0x5d0] sm:$0xff]
  %v2656 = vld [vmem:[%s3 + $0x5d8] sm:$0xff]
  %v2657 = vld [vmem:[%s3 + $0x5e0] sm:$0xff]
  %v2658 = vld [vmem:[%s3 + $0x5e8] sm:$0xff]
  %v2659 = vld [vmem:[%s3 + $0x5f0] sm:$0xff]
  %v2660 = vld [vmem:[%s3 + $0x5f8] sm:$0xff]
  %v2661 = vmul.f32 %v1955, %v2653
  %v2662 = vmul.f32 %v1954, %v2654
  %v2663 = vmul.f32 %v1953, %v2655
  %v2664 = vmul.f32 %v1952, %v2656
  %v2665 = vmul.f32 %v1951, %v2657
  %v2666 = vmul.f32 %v1950, %v2658
  %v2667 = vmul.f32 %v1949, %v2659
  %v2668 = vmul.f32 %v1956, %v2660
  %2669 = vst [vmem:[#allocation2 + $0x5c0] sm:$0xff] %v2661
  %2670 = vst [vmem:[#allocation2 + $0x5c8] sm:$0xff] %v2662
  %2671 = vst [vmem:[#allocation2 + $0x5d0] sm:$0xff] %v2663
  %2672 = vst [vmem:[#allocation2 + $0x5d8] sm:$0xff] %v2664
  %2673 = vst [vmem:[#allocation2 + $0x5e0] sm:$0xff] %v2665
  %2674 = vst [vmem:[#allocation2 + $0x5e8] sm:$0xff] %v2666
  %2675 = vst [vmem:[#allocation2 + $0x5f0] sm:$0xff] %v2667
  %2676 = vst [vmem:[#allocation2 + $0x5f8] sm:$0xff] %v2668
  %v2677 = vld [vmem:[%s3 + $0x600] sm:$0xff]
  %v2678 = vld [vmem:[%s3 + $0x608] sm:$0xff]
  %v2679 = vld [vmem:[%s3 + $0x610] sm:$0xff]
  %v2680 = vld [vmem:[%s3 + $0x618] sm:$0xff]
  %v2681 = vld [vmem:[%s3 + $0x620] sm:$0xff]
  %v2682 = vld [vmem:[%s3 + $0x628] sm:$0xff]
  %v2683 = vld [vmem:[%s3 + $0x630] sm:$0xff]
  %v2684 = vld [vmem:[%s3 + $0x638] sm:$0xff]
  %v2685 = vmul.f32 %v2003, %v2677
  %v2686 = vmul.f32 %v2002, %v2678
  %v2687 = vmul.f32 %v2001, %v2679
  %v2688 = vmul.f32 %v2000, %v2680
  %v2689 = vmul.f32 %v1999, %v2681
  %v2690 = vmul.f32 %v1998, %v2682
  %v2691 = vmul.f32 %v1997, %v2683
  %v2692 = vmul.f32 %v2004, %v2684
  %2693 = vst [vmem:[#allocation2 + $0x600] sm:$0xff] %v2685
  %2694 = vst [vmem:[#allocation2 + $0x608] sm:$0xff] %v2686
  %2695 = vst [vmem:[#allocation2 + $0x610] sm:$0xff] %v2687
  %2696 = vst [vmem:[#allocation2 + $0x618] sm:$0xff] %v2688
  %2697 = vst [vmem:[#allocation2 + $0x620] sm:$0xff] %v2689
  %2698 = vst [vmem:[#allocation2 + $0x628] sm:$0xff] %v2690
  %2699 = vst [vmem:[#allocation2 + $0x630] sm:$0xff] %v2691
  %2700 = vst [vmem:[#allocation2 + $0x638] sm:$0xff] %v2692
  %v2701 = vld [vmem:[%s3 + $0x640] sm:$0xff]
  %v2702 = vld [vmem:[%s3 + $0x648] sm:$0xff]
  %v2703 = vld [vmem:[%s3 + $0x650] sm:$0xff]
  %v2704 = vld [vmem:[%s3 + $0x658] sm:$0xff]
  %v2705 = vld [vmem:[%s3 + $0x660] sm:$0xff]
  %v2706 = vld [vmem:[%s3 + $0x668] sm:$0xff]
  %v2707 = vld [vmem:[%s3 + $0x670] sm:$0xff]
  %v2708 = vld [vmem:[%s3 + $0x678] sm:$0xff]
  %v2709 = vmul.f32 %v2051, %v2701
  %v2710 = vmul.f32 %v2050, %v2702
  %v2711 = vmul.f32 %v2049, %v2703
  %v2712 = vmul.f32 %v2048, %v2704
  %v2713 = vmul.f32 %v2047, %v2705
  %v2714 = vmul.f32 %v2046, %v2706
  %v2715 = vmul.f32 %v2045, %v2707
  %v2716 = vmul.f32 %v2052, %v2708
  %2717 = vst [vmem:[#allocation2 + $0x640] sm:$0xff] %v2709
  %2718 = vst [vmem:[#allocation2 + $0x648] sm:$0xff] %v2710
  %2719 = vst [vmem:[#allocation2 + $0x650] sm:$0xff] %v2711
  %2720 = vst [vmem:[#allocation2 + $0x658] sm:$0xff] %v2712
  %2721 = vst [vmem:[#allocation2 + $0x660] sm:$0xff] %v2713
  %2722 = vst [vmem:[#allocation2 + $0x668] sm:$0xff] %v2714
  %2723 = vst [vmem:[#allocation2 + $0x670] sm:$0xff] %v2715
  %2724 = vst [vmem:[#allocation2 + $0x678] sm:$0xff] %v2716
  %v2725 = vld [vmem:[%s3 + $0x680] sm:$0xff]
  %v2726 = vld [vmem:[%s3 + $0x688] sm:$0xff]
  %v2727 = vld [vmem:[%s3 + $0x690] sm:$0xff]
  %v2728 = vld [vmem:[%s3 + $0x698] sm:$0xff]
  %v2729 = vld [vmem:[%s3 + $0x6a0] sm:$0xff]
  %v2730 = vld [vmem:[%s3 + $0x6a8] sm:$0xff]
  %v2731 = vld [vmem:[%s3 + $0x6b0] sm:$0xff]
  %v2732 = vld [vmem:[%s3 + $0x6b8] sm:$0xff]
  %v2733 = vmul.f32 %v2099, %v2725
  %v2734 = vmul.f32 %v2098, %v2726
  %v2735 = vmul.f32 %v2097, %v2727
  %v2736 = vmul.f32 %v2096, %v2728
  %v2737 = vmul.f32 %v2095, %v2729
  %v2738 = vmul.f32 %v2094, %v2730
  %v2739 = vmul.f32 %v2093, %v2731
  %v2740 = vmul.f32 %v2100, %v2732
  %2741 = vst [vmem:[#allocation2 + $0x680] sm:$0xff] %v2733
  %2742 = vst [vmem:[#allocation2 + $0x688] sm:$0xff] %v2734
  %2743 = vst [vmem:[#allocation2 + $0x690] sm:$0xff] %v2735
  %2744 = vst [vmem:[#allocation2 + $0x698] sm:$0xff] %v2736
  %2745 = vst [vmem:[#allocation2 + $0x6a0] sm:$0xff] %v2737
  %2746 = vst [vmem:[#allocation2 + $0x6a8] sm:$0xff] %v2738
  %2747 = vst [vmem:[#allocation2 + $0x6b0] sm:$0xff] %v2739
  %2748 = vst [vmem:[#allocation2 + $0x6b8] sm:$0xff] %v2740
  %v2749 = vld [vmem:[%s2] sm:$0xff]
  %v2750 = vld [vmem:[%s2 + $0x8] sm:$0xff]
  %v2751 = vld [vmem:[#allocation2] sm:$0xff]
  %v2752 = vld [vmem:[#allocation2 + $0x8] sm:$0xff]
  %v2753 = vld [vmem:[#allocation2 + $0x10] sm:$0xff]
  %v2754 = vld [vmem:[#allocation2 + $0x18] sm:$0xff]
  %v2755 = vld [vmem:[#allocation2 + $0x20] sm:$0xff]
  %v2756 = vld [vmem:[#allocation2 + $0x28] sm:$0xff]
  %v2757 = vld [vmem:[#allocation2 + $0x30] sm:$0xff]
  %v2758 = vld [vmem:[#allocation2 + $0x38] sm:$0xff]
  %v2759 = vld [vmem:[#allocation2 + $0x40] sm:$0xff]
  %v2760 = vld [vmem:[#allocation2 + $0x48] sm:$0xff]
  %v2761 = vld [vmem:[#allocation2 + $0x50] sm:$0xff]
  %v2762 = vld [vmem:[#allocation2 + $0x58] sm:$0xff]
  %v2763 = vld [vmem:[#allocation2 + $0x60] sm:$0xff]
  %v2764 = vld [vmem:[#allocation2 + $0x68] sm:$0xff]
  %v2765 = vld [vmem:[#allocation2 + $0x70] sm:$0xff]
  %v2766 = vld [vmem:[#allocation2 + $0x78] sm:$0xff]
  %v2767 = vld [vmem:[#allocation2 + $0x80] sm:$0xff]
  %v2768 = vld [vmem:[#allocation2 + $0x88] sm:$0xff]
  %v2769 = vld [vmem:[#allocation2 + $0x90] sm:$0xff]
  %v2770 = vld [vmem:[#allocation2 + $0x98] sm:$0xff]
  %v2771 = vld [vmem:[#allocation2 + $0xa0] sm:$0xff]
  %v2772 = vld [vmem:[#allocation2 + $0xa8] sm:$0xff]
  %v2773 = vld [vmem:[#allocation2 + $0xb0] sm:$0xff]
  %v2774 = vld [vmem:[#allocation2 + $0xb8] sm:$0xff]
  %v2775 = vld [vmem:[#allocation2 + $0xc0] sm:$0xff]
  %v2776 = vld [vmem:[#allocation2 + $0xc8] sm:$0xff]
  %v2777 = vld [vmem:[#allocation2 + $0xd0] sm:$0xff]
  %v2778 = vld [vmem:[#allocation2 + $0xd8] sm:$0xff]
  %v2779 = vld [vmem:[#allocation2 + $0xe0] sm:$0xff]
  %v2780 = vld [vmem:[#allocation2 + $0xe8] sm:$0xff]
  %v2781 = vld [vmem:[#allocation2 + $0xf0] sm:$0xff]
  %v2782 = vld [vmem:[#allocation2 + $0xf8] sm:$0xff]
  %v2783 = vld [vmem:[#allocation2 + $0x100] sm:$0xff]
  %v2784 = vld [vmem:[#allocation2 + $0x108] sm:$0xff]
  %v2785 = vld [vmem:[#allocation2 + $0x110] sm:$0xff]
  %v2786 = vld [vmem:[#allocation2 + $0x118] sm:$0xff]
  %v2787 = vld [vmem:[#allocation2 + $0x120] sm:$0xff]
  %v2788 = vld [vmem:[#allocation2 + $0x128] sm:$0xff]
  %v2789 = vld [vmem:[#allocation2 + $0x130] sm:$0xff]
  %v2790 = vld [vmem:[#allocation2 + $0x138] sm:$0xff]
  %v2791 = vld [vmem:[#allocation2 + $0x140] sm:$0xff]
  %v2792 = vld [vmem:[#allocation2 + $0x148] sm:$0xff]
  %v2793 = vld [vmem:[#allocation2 + $0x150] sm:$0xff]
  %v2794 = vld [vmem:[#allocation2 + $0x158] sm:$0xff]
  %v2795 = vld [vmem:[#allocation2 + $0x160] sm:$0xff]
  %v2796 = vld [vmem:[#allocation2 + $0x168] sm:$0xff]
  %v2797 = vld [vmem:[#allocation2 + $0x170] sm:$0xff]
  %v2798 = vld [vmem:[#allocation2 + $0x178] sm:$0xff]
  %v2799 = vld [vmem:[#allocation2 + $0x180] sm:$0xff]
  %v2800 = vld [vmem:[#allocation2 + $0x188] sm:$0xff]
  %v2801 = vld [vmem:[#allocation2 + $0x190] sm:$0xff]
  %v2802 = vld [vmem:[#allocation2 + $0x198] sm:$0xff]
  %v2803 = vld [vmem:[#allocation2 + $0x1a0] sm:$0xff]
  %v2804 = vld [vmem:[#allocation2 + $0x1a8] sm:$0xff]
  %v2805 = vld [vmem:[#allocation2 + $0x1b0] sm:$0xff]
  %v2806 = vld [vmem:[#allocation2 + $0x1b8] sm:$0xff]
  %v2807 = vld [vmem:[#allocation2 + $0x1c0] sm:$0xff]
  %v2808 = vld [vmem:[#allocation2 + $0x1c8] sm:$0xff]
  %v2809 = vld [vmem:[#allocation2 + $0x1d0] sm:$0xff]
  %v2810 = vld [vmem:[#allocation2 + $0x1d8] sm:$0xff]
  %v2811 = vld [vmem:[#allocation2 + $0x1e0] sm:$0xff]
  %v2812 = vld [vmem:[#allocation2 + $0x1e8] sm:$0xff]
  %v2813 = vld [vmem:[#allocation2 + $0x1f0] sm:$0xff]
  %v2814 = vld [vmem:[#allocation2 + $0x1f8] sm:$0xff]
  %v2815 = vld [vmem:[#allocation2 + $0x200] sm:$0xff]
  %v2816 = vld [vmem:[#allocation2 + $0x208] sm:$0xff]
  %v2817 = vld [vmem:[#allocation2 + $0x210] sm:$0xff]
  %v2818 = vld [vmem:[#allocation2 + $0x218] sm:$0xff]
  %v2819 = vld [vmem:[#allocation2 + $0x220] sm:$0xff]
  %v2820 = vld [vmem:[#allocation2 + $0x228] sm:$0xff]
  %v2821 = vld [vmem:[#allocation2 + $0x230] sm:$0xff]
  %v2822 = vld [vmem:[#allocation2 + $0x238] sm:$0xff]
  %v2823 = vld [vmem:[#allocation2 + $0x240] sm:$0xff]
  %v2824 = vld [vmem:[#allocation2 + $0x248] sm:$0xff]
  %v2825 = vld [vmem:[#allocation2 + $0x250] sm:$0xff]
  %v2826 = vld [vmem:[#allocation2 + $0x258] sm:$0xff]
  %v2827 = vld [vmem:[#allocation2 + $0x260] sm:$0xff]
  %v2828 = vld [vmem:[#allocation2 + $0x268] sm:$0xff]
  %v2829 = vld [vmem:[#allocation2 + $0x270] sm:$0xff]
  %v2830 = vld [vmem:[#allocation2 + $0x278] sm:$0xff]
  %v2831 = vld [vmem:[#allocation2 + $0x280] sm:$0xff]
  %v2832 = vld [vmem:[#allocation2 + $0x288] sm:$0xff]
  %v2833 = vld [vmem:[#allocation2 + $0x290] sm:$0xff]
  %v2834 = vld [vmem:[#allocation2 + $0x298] sm:$0xff]
  %v2835 = vld [vmem:[#allocation2 + $0x2a0] sm:$0xff]
  %v2836 = vld [vmem:[#allocation2 + $0x2a8] sm:$0xff]
  %v2837 = vld [vmem:[#allocation2 + $0x2b0] sm:$0xff]
  %v2838 = vld [vmem:[#allocation2 + $0x2b8] sm:$0xff]
  %v2839 = vld [vmem:[#allocation2 + $0x2c0] sm:$0xff]
  %v2840 = vld [vmem:[#allocation2 + $0x2c8] sm:$0xff]
  %v2841 = vld [vmem:[#allocation2 + $0x2d0] sm:$0xff]
  %v2842 = vld [vmem:[#allocation2 + $0x2d8] sm:$0xff]
  %v2843 = vld [vmem:[#allocation2 + $0x2e0] sm:$0xff]
  %v2844 = vld [vmem:[#allocation2 + $0x2e8] sm:$0xff]
  %v2845 = vld [vmem:[#allocation2 + $0x2f0] sm:$0xff]
  %v2846 = vld [vmem:[#allocation2 + $0x2f8] sm:$0xff]
  %v2847 = vld [vmem:[#allocation2 + $0x300] sm:$0xff]
  %v2848 = vld [vmem:[#allocation2 + $0x308] sm:$0xff]
  %v2849 = vld [vmem:[#allocation2 + $0x310] sm:$0xff]
  %v2850 = vld [vmem:[#allocation2 + $0x318] sm:$0xff]
  %v2851 = vld [vmem:[#allocation2 + $0x320] sm:$0xff]
  %v2852 = vld [vmem:[#allocation2 + $0x328] sm:$0xff]
  %v2853 = vld [vmem:[#allocation2 + $0x330] sm:$0xff]
  %v2854 = vld [vmem:[#allocation2 + $0x338] sm:$0xff]
  %v2855 = vld [vmem:[#allocation2 + $0x340] sm:$0xff]
  %v2856 = vld [vmem:[#allocation2 + $0x348] sm:$0xff]
  %v2857 = vld [vmem:[#allocation2 + $0x350] sm:$0xff]
  %v2858 = vld [vmem:[#allocation2 + $0x358] sm:$0xff]
  %v2859 = vld [vmem:[#allocation2 + $0x360] sm:$0xff]
  %v2860 = vld [vmem:[#allocation2 + $0x368] sm:$0xff]
  %v2861 = vld [vmem:[#allocation2 + $0x370] sm:$0xff]
  %v2862 = vld [vmem:[#allocation2 + $0x378] sm:$0xff]
  %v2863 = vld [vmem:[#allocation2 + $0x380] sm:$0xff]
  %v2864 = vld [vmem:[#allocation2 + $0x388] sm:$0xff]
  %v2865 = vld [vmem:[#allocation2 + $0x390] sm:$0xff]
  %v2866 = vld [vmem:[#allocation2 + $0x398] sm:$0xff]
  %v2867 = vld [vmem:[#allocation2 + $0x3a0] sm:$0xff]
  %v2868 = vld [vmem:[#allocation2 + $0x3a8] sm:$0xff]
  %v2869 = vld [vmem:[#allocation2 + $0x3b0] sm:$0xff]
  %v2870 = vld [vmem:[#allocation2 + $0x3b8] sm:$0xff]
  %v2871 = vld [vmem:[#allocation2 + $0x3c0] sm:$0xff]
  %v2872 = vld [vmem:[#allocation2 + $0x3c8] sm:$0xff]
  %v2873 = vld [vmem:[#allocation2 + $0x3d0] sm:$0xff]
  %v2874 = vld [vmem:[#allocation2 + $0x3d8] sm:$0xff]
  %v2875 = vld [vmem:[#allocation2 + $0x3e0] sm:$0xff]
  %v2876 = vld [vmem:[#allocation2 + $0x3e8] sm:$0xff]
  %v2877 = vld [vmem:[#allocation2 + $0x3f0] sm:$0xff]
  %v2878 = vld [vmem:[#allocation2 + $0x3f8] sm:$0xff]
  %v2879 = vld [vmem:[#allocation2 + $0x400] sm:$0xff]
  %v2880 = vld [vmem:[#allocation2 + $0x408] sm:$0xff]
  %v2881 = vld [vmem:[#allocation2 + $0x410] sm:$0xff]
  %v2882 = vld [vmem:[#allocation2 + $0x418] sm:$0xff]
  %v2883 = vld [vmem:[#allocation2 + $0x420] sm:$0xff]
  %v2884 = vld [vmem:[#allocation2 + $0x428] sm:$0xff]
  %v2885 = vld [vmem:[#allocation2 + $0x430] sm:$0xff]
  %v2886 = vld [vmem:[#allocation2 + $0x438] sm:$0xff]
  %v2887 = vld [vmem:[#allocation2 + $0x440] sm:$0xff]
  %v2888 = vld [vmem:[#allocation2 + $0x448] sm:$0xff]
  %v2889 = vld [vmem:[#allocation2 + $0x450] sm:$0xff]
  %v2890 = vld [vmem:[#allocation2 + $0x458] sm:$0xff]
  %v2891 = vld [vmem:[#allocation2 + $0x460] sm:$0xff]
  %v2892 = vld [vmem:[#allocation2 + $0x468] sm:$0xff]
  %v2893 = vld [vmem:[#allocation2 + $0x470] sm:$0xff]
  %v2894 = vld [vmem:[#allocation2 + $0x478] sm:$0xff]
  %v2895 = vld [vmem:[#allocation2 + $0x480] sm:$0xff]
  %v2896 = vld [vmem:[#allocation2 + $0x488] sm:$0xff]
  %v2897 = vld [vmem:[#allocation2 + $0x490] sm:$0xff]
  %v2898 = vld [vmem:[#allocation2 + $0x498] sm:$0xff]
  %v2899 = vld [vmem:[#allocation2 + $0x4a0] sm:$0xff]
  %v2900 = vld [vmem:[#allocation2 + $0x4a8] sm:$0xff]
  %v2901 = vld [vmem:[#allocation2 + $0x4b0] sm:$0xff]
  %v2902 = vld [vmem:[#allocation2 + $0x4b8] sm:$0xff]
  %v2903 = vld [vmem:[#allocation2 + $0x4c0] sm:$0xff]
  %v2904 = vld [vmem:[#allocation2 + $0x4c8] sm:$0xff]
  %v2905 = vld [vmem:[#allocation2 + $0x4d0] sm:$0xff]
  %v2906 = vld [vmem:[#allocation2 + $0x4d8] sm:$0xff]
  %v2907 = vld [vmem:[#allocation2 + $0x4e0] sm:$0xff]
  %v2908 = vld [vmem:[#allocation2 + $0x4e8] sm:$0xff]
  %v2909 = vld [vmem:[#allocation2 + $0x4f0] sm:$0xff]
  %v2910 = vld [vmem:[#allocation2 + $0x4f8] sm:$0xff]
  %v2911 = vld [vmem:[#allocation2 + $0x500] sm:$0xff]
  %v2912 = vld [vmem:[#allocation2 + $0x508] sm:$0xff]
  %v2913 = vld [vmem:[#allocation2 + $0x510] sm:$0xff]
  %v2914 = vld [vmem:[#allocation2 + $0x518] sm:$0xff]
  %v2915 = vld [vmem:[#allocation2 + $0x520] sm:$0xff]
  %v2916 = vld [vmem:[#allocation2 + $0x528] sm:$0xff]
  %v2917 = vld [vmem:[#allocation2 + $0x530] sm:$0xff]
  %v2918 = vld [vmem:[#allocation2 + $0x538] sm:$0xff]
  %v2919 = vld [vmem:[#allocation2 + $0x540] sm:$0xff]
  %v2920 = vld [vmem:[#allocation2 + $0x548] sm:$0xff]
  %v2921 = vld [vmem:[#allocation2 + $0x550] sm:$0xff]
  %v2922 = vld [vmem:[#allocation2 + $0x558] sm:$0xff]
  %v2923 = vld [vmem:[#allocation2 + $0x560] sm:$0xff]
  %v2924 = vld [vmem:[#allocation2 + $0x568] sm:$0xff]
  %v2925 = vld [vmem:[#allocation2 + $0x570] sm:$0xff]
  %v2926 = vld [vmem:[#allocation2 + $0x578] sm:$0xff]
  %v2927 = vld [vmem:[#allocation2 + $0x580] sm:$0xff]
  %v2928 = vld [vmem:[#allocation2 + $0x588] sm:$0xff]
  %v2929 = vld [vmem:[#allocation2 + $0x590] sm:$0xff]
  %v2930 = vld [vmem:[#allocation2 + $0x598] sm:$0xff]
  %v2931 = vld [vmem:[#allocation2 + $0x5a0] sm:$0xff]
  %v2932 = vld [vmem:[#allocation2 + $0x5a8] sm:$0xff]
  %v2933 = vld [vmem:[#allocation2 + $0x5b0] sm:$0xff]
  %v2934 = vld [vmem:[#allocation2 + $0x5b8] sm:$0xff]
  %v2935 = vld [vmem:[#allocation2 + $0x5c0] sm:$0xff]
  %v2936 = vld [vmem:[#allocation2 + $0x5c8] sm:$0xff]
  %v2937 = vld [vmem:[#allocation2 + $0x5d0] sm:$0xff]
  %v2938 = vld [vmem:[#allocation2 + $0x5d8] sm:$0xff]
  %v2939 = vld [vmem:[#allocation2 + $0x5e0] sm:$0xff]
  %v2940 = vld [vmem:[#allocation2 + $0x5e8] sm:$0xff]
  %v2941 = vld [vmem:[#allocation2 + $0x5f0] sm:$0xff]
  %v2942 = vld [vmem:[#allocation2 + $0x5f8] sm:$0xff]
  %v2943 = vld [vmem:[#allocation2 + $0x600] sm:$0xff]
  %v2944 = vld [vmem:[#allocation2 + $0x608] sm:$0xff]
  %v2945 = vld [vmem:[#allocation2 + $0x610] sm:$0xff]
  %v2946 = vld [vmem:[#allocation2 + $0x618] sm:$0xff]
  %v2947 = vld [vmem:[#allocation2 + $0x620] sm:$0xff]
  %v2948 = vld [vmem:[#allocation2 + $0x628] sm:$0xff]
  %v2949 = vld [vmem:[#allocation2 + $0x630] sm:$0xff]
  %v2950 = vld [vmem:[#allocation2 + $0x638] sm:$0xff]
  %v2951 = vld [vmem:[#allocation2 + $0x640] sm:$0xff]
  %v2952 = vld [vmem:[#allocation2 + $0x648] sm:$0xff]
  %v2953 = vld [vmem:[#allocation2 + $0x650] sm:$0xff]
  %v2954 = vld [vmem:[#allocation2 + $0x658] sm:$0xff]
  %v2955 = vld [vmem:[#allocation2 + $0x660] sm:$0xff]
  %v2956 = vld [vmem:[#allocation2 + $0x668] sm:$0xff]
  %v2957 = vld [vmem:[#allocation2 + $0x670] sm:$0xff]
  %v2958 = vld [vmem:[#allocation2 + $0x678] sm:$0xff]
  %v2959 = vld [vmem:[#allocation2 + $0x680] sm:$0xff]
  %v2960 = vld [vmem:[#allocation2 + $0x688] sm:$0xff]
  %v2961 = vld [vmem:[#allocation2 + $0x690] sm:$0xff]
  %v2962 = vld [vmem:[#allocation2 + $0x698] sm:$0xff]
  %v2963 = vld [vmem:[#allocation2 + $0x6a0] sm:$0xff]
  %v2964 = vld [vmem:[#allocation2 + $0x6a8] sm:$0xff]
  %v2965 = vld [vmem:[#allocation2 + $0x6b0] sm:$0xff]
  %v2966 = vld [vmem:[#allocation2 + $0x6b8] sm:$0xff]
  %v2968 = vsel %vm1330, %v2750, 0
  %2970 = vmatprep.subr.mxu0 %v2752
  %2971 = vmatpush1.msra.mxu0 %v2751
  %2972 = vmatprep.subr.mxu0 %v2760
  %2973 = vmatpush1.msra.mxu0 %v2759
  %2974 = vmatprep.subr.mxu0 %v2768
  %2975 = vmatpush1.msra.mxu0 %v2767
  %2976 = vmatprep.subr.mxu0 %v2776
  %2977 = vmatpush1.msra.mxu0 %v2775
  %2978 = vmatprep.subr.mxu0 %v2784
  %2979 = vmatpush1.msra.mxu0 %v2783
  %2980 = vmatprep.subr.mxu0 %v2792
  %2981 = vmatpush1.msra.mxu0 %v2791
  %2982 = vmatprep.subr.mxu0 %v2800
  %2983 = vmatpush1.msra.mxu0 %v2799
  %2984 = vmatprep.subr.mxu0 %v2808
  %2985 = vmatpush1.msra.mxu0 %v2807
  %2986 = vmatprep.subr.mxu0 %v2816
  %2987 = vmatpush1.msra.mxu0 %v2815
  %2988 = vmatprep.subr.mxu0 %v2824
  %2989 = vmatpush1.msra.mxu0 %v2823
  %2990 = vmatprep.subr.mxu0 %v2832
  %2991 = vmatpush1.msra.mxu0 %v2831
  %2992 = vmatprep.subr.mxu0 %v2840
  %2993 = vmatpush1.msra.mxu0 %v2839
  %2994 = vmatprep.subr.mxu0 %v2848
  %2995 = vmatpush1.msra.mxu0 %v2847
  %2996 = vmatprep.subr.mxu0 %v2856
  %2997 = vmatpush1.msra.mxu0 %v2855
  %2998 = vmatprep.subr.mxu0 %v2864
  %2999 = vmatpush1.msra.mxu0 %v2863
  %3000 = vmatprep.subr.mxu0 %v2872
  %3001 = vmatpush1.msra.mxu0 %v2871
  %3002 = vmatprep.subr.mxu0 %v2880
  %3003 = vmatpush1.msra.mxu0 %v2879
  %3004 = vmatprep.subr.mxu0 %v2888
  %3005 = vmatpush1.msra.mxu0 %v2887
  %3006 = vmatprep.subr.mxu0 %v2896
  %3007 = vmatpush1.msra.mxu0 %v2895
  %3008 = vmatprep.subr.mxu0 %v2904
  %3009 = vmatpush1.msra.mxu0 %v2903
  %3010 = vmatprep.subr.mxu0 %v2912
  %3011 = vmatpush1.msra.mxu0 %v2911
  %3012 = vmatprep.subr.mxu0 %v2920
  %3013 = vmatpush1.msra.mxu0 %v2919
  %3014 = vmatprep.subr.mxu0 %v2928
  %3015 = vmatpush1.msra.mxu0 %v2927
  %3016 = vmatprep.subr.mxu0 %v2936
  %3017 = vmatpush1.msra.mxu0 %v2935
  %3018 = vmatprep.subr.mxu0 %v2944
  %3019 = vmatpush1.msra.mxu0 %v2943
  %3020 = vmatprep.subr.mxu0 %v2952
  %3021 = vmatpush1.msra.mxu0 %v2951
  %3022 = vmatprep.subr.mxu0 %v2960
  %3023 = vmatpush1.msra.mxu0 %v2959
  %3024 = vmatprep.subr.mxu0 0.0
  %3025 = vmatpush1.msra.mxu0 0.0
  %3026 = vmatprep.subr.mxu0 0.0
  %3027 = vmatpush1.msra.mxu0 0.0
  %3028 = vmatprep.subr.mxu0 0.0
  %3029 = vmatpush1.msra.mxu0 0.0
  %3030 = vmatprep.subr.mxu0 0.0
  %3031 = vmatpush1.msra.mxu0 0.0
  %3032 = vmatprep.subr.mxu0 0.0
  %3033 = vmatpush1.msra.mxu0 0.0
  %3034 = vmatprep.mubr.f32.mxu0 %v2968
  %3035 = vmatmul.mubr.f32.gmra.mrb[0].mxu0 %v2749
  %v3036 = vpop.f32.mrb[0].mxu0
  %v3037 = vadd.f32 0.0, %v3036
  %v3038 = vpop.f32.mrb[0].mxu0
  %v3039 = vadd.f32 0.0, %v3038
  %3040 = vdwg.mxu0
  %3041 = vmatprep.subr.mxu0 %v2754
  %3042 = vmatpush1.msra.mxu0 %v2753
  %3043 = vmatprep.subr.mxu0 %v2762
  %3044 = vmatpush1.msra.mxu0 %v2761
  %3045 = vmatprep.subr.mxu0 %v2770
  %3046 = vmatpush1.msra.mxu0 %v2769
  %3047 = vmatprep.subr.mxu0 %v2778
  %3048 = vmatpush1.msra.mxu0 %v2777
  %3049 = vmatprep.subr.mxu0 %v2786
  %3050 = vmatpush1.msra.mxu0 %v2785
  %3051 = vmatprep.subr.mxu0 %v2794
  %3052 = vmatpush1.msra.mxu0 %v2793
  %3053 = vmatprep.subr.mxu0 %v2802
  %3054 = vmatpush1.msra.mxu0 %v2801
  %3055 = vmatprep.subr.mxu0 %v2810
  %3056 = vmatpush1.msra.mxu0 %v2809
  %3057 = vmatprep.subr.mxu0 %v2818
  %3058 = vmatpush1.msra.mxu0 %v2817
  %3059 = vmatprep.subr.mxu0 %v2826
  %3060 = vmatpush1.msra.mxu0 %v2825
  %3061 = vmatprep.subr.mxu0 %v2834
  %3062 = vmatpush1.msra.mxu0 %v2833
  %3063 = vmatprep.subr.mxu0 %v2842
  %3064 = vmatpush1.msra.mxu0 %v2841
  %3065 = vmatprep.subr.mxu0 %v2850
  %3066 = vmatpush1.msra.mxu0 %v2849
  %3067 = vmatprep.subr.mxu0 %v2858
  %3068 = vmatpush1.msra.mxu0 %v2857
  %3069 = vmatprep.subr.mxu0 %v2866
  %3070 = vmatpush1.msra.mxu0 %v2865
  %3071 = vmatprep.subr.mxu0 %v2874
  %3072 = vmatpush1.msra.mxu0 %v2873
  %3073 = vmatprep.subr.mxu0 %v2882
  %3074 = vmatpush1.msra.mxu0 %v2881
  %3075 = vmatprep.subr.mxu0 %v2890
  %3076 = vmatpush1.msra.mxu0 %v2889
  %3077 = vmatprep.subr.mxu0 %v2898
  %3078 = vmatpush1.msra.mxu0 %v2897
  %3079 = vmatprep.subr.mxu0 %v2906
  %3080 = vmatpush1.msra.mxu0 %v2905
  %3081 = vmatprep.subr.mxu0 %v2914
  %3082 = vmatpush1.msra.mxu0 %v2913
  %3083 = vmatprep.subr.mxu0 %v2922
  %3084 = vmatpush1.msra.mxu0 %v2921
  %3085 = vmatprep.subr.mxu0 %v2930
  %3086 = vmatpush1.msra.mxu0 %v2929
  %3087 = vmatprep.subr.mxu0 %v2938
  %3088 = vmatpush1.msra.mxu0 %v2937
  %3089 = vmatprep.subr.mxu0 %v2946
  %3090 = vmatpush1.msra.mxu0 %v2945
  %3091 = vmatprep.subr.mxu0 %v2954
  %3092 = vmatpush1.msra.mxu0 %v2953
  %3093 = vmatprep.subr.mxu0 %v2962
  %3094 = vmatpush1.msra.mxu0 %v2961
  %3095 = vmatprep.subr.mxu0 0.0
  %3096 = vmatpush1.msra.mxu0 0.0
  %3097 = vmatprep.subr.mxu0 0.0
  %3098 = vmatpush1.msra.mxu0 0.0
  %3099 = vmatprep.subr.mxu0 0.0
  %3100 = vmatpush1.msra.mxu0 0.0
  %3101 = vmatprep.subr.mxu0 0.0
  %3102 = vmatpush1.msra.mxu0 0.0
  %3103 = vmatprep.subr.mxu0 0.0
  %3104 = vmatpush1.msra.mxu0 0.0
  %3105 = vmatprep.mubr.f32.mxu0 %v2968
  %3106 = vmatmul.mubr.f32.gmra.mrb[0].mxu0 %v2749
  %v3107 = vpop.f32.mrb[0].mxu0
  %v3108 = vadd.f32 0.0, %v3107
  %v3109 = vpop.f32.mrb[0].mxu0
  %v3110 = vadd.f32 0.0, %v3109
  %3111 = vdwg.mxu0
  %3112 = vmatprep.subr.mxu0 %v2756
  %3113 = vmatpush1.msra.mxu0 %v2755
  %3114 = vmatprep.subr.mxu0 %v2764
  %3115 = vmatpush1.msra.mxu0 %v2763
  %3116 = vmatprep.subr.mxu0 %v2772
  %3117 = vmatpush1.msra.mxu0 %v2771
  %3118 = vmatprep.subr.mxu0 %v2780
  %3119 = vmatpush1.msra.mxu0 %v2779
  %3120 = vmatprep.subr.mxu0 %v2788
  %3121 = vmatpush1.msra.mxu0 %v2787
  %3122 = vmatprep.subr.mxu0 %v2796
  %3123 = vmatpush1.msra.mxu0 %v2795
  %3124 = vmatprep.subr.mxu0 %v2804
  %3125 = vmatpush1.msra.mxu0 %v2803
  %3126 = vmatprep.subr.mxu0 %v2812
  %3127 = vmatpush1.msra.mxu0 %v2811
  %3128 = vmatprep.subr.mxu0 %v2820
  %3129 = vmatpush1.msra.mxu0 %v2819
  %3130 = vmatprep.subr.mxu0 %v2828
  %3131 = vmatpush1.msra.mxu0 %v2827
  %3132 = vmatprep.subr.mxu0 %v2836
  %3133 = vmatpush1.msra.mxu0 %v2835
  %3134 = vmatprep.subr.mxu0 %v2844
  %3135 = vmatpush1.msra.mxu0 %v2843
  %3136 = vmatprep.subr.mxu0 %v2852
  %3137 = vmatpush1.msra.mxu0 %v2851
  %3138 = vmatprep.subr.mxu0 %v2860
  %3139 = vmatpush1.msra.mxu0 %v2859
  %3140 = vmatprep.subr.mxu0 %v2868
  %3141 = vmatpush1.msra.mxu0 %v2867
  %3142 = vmatprep.subr.mxu0 %v2876
  %3143 = vmatpush1.msra.mxu0 %v2875
  %3144 = vmatprep.subr.mxu0 %v2884
  %3145 = vmatpush1.msra.mxu0 %v2883
  %3146 = vmatprep.subr.mxu0 %v2892
  %3147 = vmatpush1.msra.mxu0 %v2891
  %3148 = vmatprep.subr.mxu0 %v2900
  %3149 = vmatpush1.msra.mxu0 %v2899
  %3150 = vmatprep.subr.mxu0 %v2908
  %3151 = vmatpush1.msra.mxu0 %v2907
  %3152 = vmatprep.subr.mxu0 %v2916
  %3153 = vmatpush1.msra.mxu0 %v2915
  %3154 = vmatprep.subr.mxu0 %v2924
  %3155 = vmatpush1.msra.mxu0 %v2923
  %3156 = vmatprep.subr.mxu0 %v2932
  %3157 = vmatpush1.msra.mxu0 %v2931
  %3158 = vmatprep.subr.mxu0 %v2940
  %3159 = vmatpush1.msra.mxu0 %v2939
  %3160 = vmatprep.subr.mxu0 %v2948
  %3161 = vmatpush1.msra.mxu0 %v2947
  %3162 = vmatprep.subr.mxu0 %v2956
  %3163 = vmatpush1.msra.mxu0 %v2955
  %3164 = vmatprep.subr.mxu0 %v2964
  %3165 = vmatpush1.msra.mxu0 %v2963
  %3166 = vmatprep.subr.mxu0 0.0
  %3167 = vmatpush1.msra.mxu0 0.0
  %3168 = vmatprep.subr.mxu0 0.0
  %3169 = vmatpush1.msra.mxu0 0.0
  %3170 = vmatprep.subr.mxu0 0.0
  %3171 = vmatpush1.msra.mxu0 0.0
  %3172 = vmatprep.subr.mxu0 0.0
  %3173 = vmatpush1.msra.mxu0 0.0
  %3174 = vmatprep.subr.mxu0 0.0
  %3175 = vmatpush1.msra.mxu0 0.0
  %3176 = vmatprep.mubr.f32.mxu0 %v2968
  %3177 = vmatmul.mubr.f32.gmra.mrb[0].mxu0 %v2749
  %v3178 = vpop.f32.mrb[0].mxu0
  %v3179 = vadd.f32 0.0, %v3178
  %v3180 = vpop.f32.mrb[0].mxu0
  %v3181 = vadd.f32 0.0, %v3180
  %3182 = vdwg.mxu0
  %3183 = vmatprep.subr.mxu0 %v2758
  %3184 = vmatpush1.msra.mxu0 %v2757
  %3185 = vmatprep.subr.mxu0 %v2766
  %3186 = vmatpush1.msra.mxu0 %v2765
  %3187 = vmatprep.subr.mxu0 %v2774
  %3188 = vmatpush1.msra.mxu0 %v2773
  %3189 = vmatprep.subr.mxu0 %v2782
  %3190 = vmatpush1.msra.mxu0 %v2781
  %3191 = vmatprep.subr.mxu0 %v2790
  %3192 = vmatpush1.msra.mxu0 %v2789
  %3193 = vmatprep.subr.mxu0 %v2798
  %3194 = vmatpush1.msra.mxu0 %v2797
  %3195 = vmatprep.subr.mxu0 %v2806
  %3196 = vmatpush1.msra.mxu0 %v2805
  %3197 = vmatprep.subr.mxu0 %v2814
  %3198 = vmatpush1.msra.mxu0 %v2813
  %3199 = vmatprep.subr.mxu0 %v2822
  %3200 = vmatpush1.msra.mxu0 %v2821
  %3201 = vmatprep.subr.mxu0 %v2830
  %3202 = vmatpush1.msra.mxu0 %v2829
  %3203 = vmatprep.subr.mxu0 %v2838
  %3204 = vmatpush1.msra.mxu0 %v2837
  %3205 = vmatprep.subr.mxu0 %v2846
  %3206 = vmatpush1.msra.mxu0 %v2845
  %3207 = vmatprep.subr.mxu0 %v2854
  %3208 = vmatpush1.msra.mxu0 %v2853
  %3209 = vmatprep.subr.mxu0 %v2862
  %3210 = vmatpush1.msra.mxu0 %v2861
  %3211 = vmatprep.subr.mxu0 %v2870
  %3212 = vmatpush1.msra.mxu0 %v2869
  %3213 = vmatprep.subr.mxu0 %v2878
  %3214 = vmatpush1.msra.mxu0 %v2877
  %3215 = vmatprep.subr.mxu0 %v2886
  %3216 = vmatpush1.msra.mxu0 %v2885
  %3217 = vmatprep.subr.mxu0 %v2894
  %3218 = vmatpush1.msra.mxu0 %v2893
  %3219 = vmatprep.subr.mxu0 %v2902
  %3220 = vmatpush1.msra.mxu0 %v2901
  %3221 = vmatprep.subr.mxu0 %v2910
  %3222 = vmatpush1.msra.mxu0 %v2909
  %3223 = vmatprep.subr.mxu0 %v2918
  %3224 = vmatpush1.msra.mxu0 %v2917
  %3225 = vmatprep.subr.mxu0 %v2926
  %3226 = vmatpush1.msra.mxu0 %v2925
  %3227 = vmatprep.subr.mxu0 %v2934
  %3228 = vmatpush1.msra.mxu0 %v2933
  %3229 = vmatprep.subr.mxu0 %v2942
  %3230 = vmatpush1.msra.mxu0 %v2941
  %3231 = vmatprep.subr.mxu0 %v2950
  %3232 = vmatpush1.msra.mxu0 %v2949
  %3233 = vmatprep.subr.mxu0 %v2958
  %3234 = vmatpush1.msra.mxu0 %v2957
  %3235 = vmatprep.subr.mxu0 %v2966
  %3236 = vmatpush1.msra.mxu0 %v2965
  %3237 = vmatprep.subr.mxu0 0.0
  %3238 = vmatpush1.msra.mxu0 0.0
  %3239 = vmatprep.subr.mxu0 0.0
  %3240 = vmatpush1.msra.mxu0 0.0
  %3241 = vmatprep.subr.mxu0 0.0
  %3242 = vmatpush1.msra.mxu0 0.0
  %3243 = vmatprep.subr.mxu0 0.0
  %3244 = vmatpush1.msra.mxu0 0.0
  %3245 = vmatprep.subr.mxu0 0.0
  %3246 = vmatpush1.msra.mxu0 0.0
  %3247 = vmatprep.mubr.f32.mxu0 %v2968
  %3248 = vmatmul.mubr.f32.gmra.mrb[0].mxu0 %v2749
  %v3249 = vpop.f32.mrb[0].mxu0
  %v3250 = vadd.f32 0.0, %v3249
  %v3251 = vpop.f32.mrb[0].mxu0
  %v3252 = vadd.f32 0.0, %v3251
  %3253 = vdwg.mxu0
  %v3254 = vadd.f32 %v3037, %v3039
  %v3255 = vadd.f32 %v3254, %v3108
  %v3256 = vadd.f32 %v3255, %v3110
  %v3257 = vadd.f32 %v3256, %v3179
  %v3258 = vadd.f32 %v3257, %v3181
  %v3259 = vadd.f32 %v3258, %v3250
  %v3260 = vadd.f32 %v3259, %v3252
  %3261 = vadd.xlane.f32.xlu0 %v3260
  %v3262 = vpop.xlane.xlu0 %3261
  %v3263 = vmul.f32 %v3262, 0.0009765625
  %v3264 = vsub.f32 %v3037, %v3263
  %v3265 = vsub.f32 %v3039, %v3263
  %v3266 = vsub.f32 %v3108, %v3263
  %v3267 = vsub.f32 %v3110, %v3263
  %v3268 = vsub.f32 %v3179, %v3263
  %v3269 = vsub.f32 %v3181, %v3263
  %v3270 = vsub.f32 %v3250, %v3263
  %v3271 = vsub.f32 %v3252, %v3263
  %v3272 = vmul.f32 %v3264, %v3264
  %v3273 = vmul.f32 %v3265, %v3265
  %v3274 = vmul.f32 %v3266, %v3266
  %v3275 = vmul.f32 %v3267, %v3267
  %v3276 = vmul.f32 %v3268, %v3268
  %v3277 = vmul.f32 %v3269, %v3269
  %v3278 = vmul.f32 %v3270, %v3270
  %v3279 = vmul.f32 %v3271, %v3271
  %v3280 = vadd.f32 %v3272, %v3273
  %v3281 = vadd.f32 %v3280, %v3274
  %v3282 = vadd.f32 %v3281, %v3275
  %v3283 = vadd.f32 %v3282, %v3276
  %v3284 = vadd.f32 %v3283, %v3277
  %v3285 = vadd.f32 %v3284, %v3278
  %v3286 = vadd.f32 %v3285, %v3279
  %3287 = vadd.xlane.f32.xlu0 %v3286
  %v3288 = vpop.xlane.xlu0 %3287
  %v3289 = vmul.f32 %v3288, 0.0009765625
  %v3290 = vld [vmem:[%s6] sm:$0xff]
  %v3291 = vadd.f32 %v3289, 1e-05
  %v3292 = vrsqrt.pop %v3291
  %v3293 = vmul.f32 %v3290, %v3292
  %3295 = vset.pattern.permute.xlu0 0
  %3296 = vperm.xlu0 %3295, %v3293
  %v3297 = vpop.permute.xlu0 %3296
  %v3299 = vmul.f32 %v3264, %v3297
  %v3300 = vmul.f32 %v3265, %v3297
  %v3301 = vmul.f32 %v3266, %v3297
  %v3302 = vmul.f32 %v3267, %v3297
  %v3303 = vmul.f32 %v3268, %v3297
  %v3304 = vmul.f32 %v3269, %v3297
  %v3305 = vmul.f32 %v3270, %v3297
  %v3306 = vmul.f32 %v3271, %v3297
  %v3307 = vld [vmem:[%s7] sm:$0xff]
  %3309 = vset.pattern.permute.xlu0 0
  %3310 = vperm.xlu0 %3309, %v3307
  %v3311 = vpop.permute.xlu0 %3310
  %v3313 = vadd.f32 %v3299, %v3311
  %v3314 = vadd.f32 %v3300, %v3311
  %v3315 = vadd.f32 %v3301, %v3311
  %v3316 = vadd.f32 %v3302, %v3311
  %v3317 = vadd.f32 %v3303, %v3311
  %v3318 = vadd.f32 %v3304, %v3311
  %v3319 = vadd.f32 %v3305, %v3311
  %v3320 = vadd.f32 %v3306, %v3311
  %v3321 = vmax.f32 %v3313, 0.0
  %v3322 = vmax.f32 %v3314, 0.0
  %v3323 = vmax.f32 %v3315, 0.0
  %v3324 = vmax.f32 %v3316, 0.0
  %v3325 = vmax.f32 %v3317, 0.0
  %v3326 = vmax.f32 %v3318, 0.0
  %v3327 = vmax.f32 %v3319, 0.0
  %v3328 = vmax.f32 %v3320, 0.0
  %3329 = vst [vmem:[%s8] sm:$0xff] %v3321
  %3330 = vst [vmem:[%s8 + $0x8] sm:$0xff] %v3322
  %3331 = vst [vmem:[%s8 + $0x10] sm:$0xff] %v3323
  %3332 = vst [vmem:[%s8 + $0x18] sm:$0xff] %v3324
  %3333 = vst [vmem:[%s8 + $0x20] sm:$0xff] %v3325
  %3334 = vst [vmem:[%s8 + $0x28] sm:$0xff] %v3326
  %3335 = vst [vmem:[%s8 + $0x30] sm:$0xff] %v3327
  %3336 = vst [vmem:[%s8 + $0x38] sm:$0xff] %v3328
  // Predicated region
  $region34: #{double_conv3d.1} parent=0 // pred_check
    _
  $region35: #{double_conv3d.1} parent=0 // pred_check_branch
    %3338 = sbr.rel (0) target = $region37
  $region36: #{double_conv3d.1} parent=0 // pred_region
    _
  $region37: #{double_conv3d.1} parent=0 // pred_fallthru
    _
  // Predicated region
  $region38: #{double_conv3d.1} parent=0 // pred_check
    _
  $region39: #{double_conv3d.1} parent=0 // pred_check_branch
    %3340 = sbr.rel (0) target = $region41
  $region40: #{double_conv3d.1} parent=0 // pred_region
    _
  $region41: #{double_conv3d.1} parent=0 // pred_fallthru
    _

</llo_original>
